<compile_context>
chip_gen: v6e
topology: v6e:2x2x1
jax: 0.10.0
libtpu: 0.0.40
codegen_flags: <defaults>
</compile_context>

<pallas_src>
from functools import partial

import jax
import jax.numpy as jnp
from jax.experimental import pallas as pl
from jax.experimental.pallas import tpu as pltpu


def _leaky(x, slope=0.01):
    return jnp.where(x >= 0, x, slope * x)


# ---------------------------------------------------------------------------
# Fused kernel: conv (scalar-weight VPU FMAs) + leaky + fc1 + leaky + fc2
#               + leaky + fc3, all resident in VMEM/vregs.
# ---------------------------------------------------------------------------
def _fused_kernel(pat_ref, wc_ref, bc_ref, w1_ref, b1_ref, w2_ref, b2_ref,
                  w3_ref, b3_ref, o_ref, x1_ref):
    # pat_ref: (8, B, P) f32 VMEM   -- im2col planes, k = c*4 + kh*2 + kw
    # wc_ref : (8, 24)   f32 SMEM   -- conv weights, wc[k, o]
    # bc_ref : (24,)     f32 SMEM   -- conv bias
    # x1_ref : (B, 24*P) f32 VMEM scratch -- conv activation, o-major flatten
    P = pat_ref.shape[2]

    # conv1 + leaky, written channel-block by channel-block (o-major flatten
    # matches PyTorch's NCHW view(B, 24*Ho*Wo), so w1 needs no permutation).
    for o in range(24):
        acc = pat_ref[0] * wc_ref[0, o] + bc_ref[o]
        for k in range(1, 8):
            acc = acc + pat_ref[k] * wc_ref[k, o]
        x1_ref[:, o * P:(o + 1) * P] = _leaky(acc)

    # fc1: bf16 inputs, f32 accumulation on the MXU.
    h = jnp.dot(x1_ref[...].astype(jnp.bfloat16), w1_ref[...],
                preferred_element_type=jnp.float32)
    h = _leaky(h + b1_ref[...])

    # fc2 (zero-padded to 128 lanes)
    h = jnp.dot(h.astype(jnp.bfloat16), w2_ref[...],
                preferred_element_type=jnp.float32)
    h = _leaky(h + b2_ref[...])

    # fc3 (zero-padded to 128 lanes -> lane-dense output store)
    o_ref[...] = jnp.dot(h.astype(jnp.bfloat16), w3_ref[...],
                         preferred_element_type=jnp.float32) + b3_ref[...]


def _vmem():
    return pl.BlockSpec(memory_space=pltpu.MemorySpace.VMEM)


def _smem():
    return pl.BlockSpec(memory_space=pltpu.MemorySpace.SMEM)


def _pad128(n):
    return max(128, ((n + 127) // 128) * 128)


# ---------------------------------------------------------------------------
# One-time parameter preparation (bf16 cast + 128-lane zero padding)
# ---------------------------------------------------------------------------
def prepare_params(params):
    conv_w, conv_b, w1, b1, w2, b2, w3, b3 = params
    n1 = w1.shape[1]          # 256
    n2 = w2.shape[1]          # 64
    A = w3.shape[1]           # num_actions
    N2, NA = _pad128(n2), _pad128(A)

    # conv weight as (k, o) with k = c*4 + kh*2 + kw (PyTorch OIHW flatten).
    wc = conv_w.reshape(24, 8).T.astype(jnp.float32)            # (8, 24)
    bc = conv_b.astype(jnp.float32)                             # (24,)

    w1b = w1.astype(jnp.bfloat16)                               # (24*P, 256)
    b1r = b1.reshape(1, -1).astype(jnp.float32)

    w2p = jnp.zeros((n1, N2), jnp.bfloat16).at[:, :n2].set(w2.astype(jnp.bfloat16))
    b2p = jnp.zeros((1, N2), jnp.float32).at[:, :n2].set(b2.astype(jnp.float32))

    w3p = jnp.zeros((N2, NA), jnp.bfloat16).at[:n2, :A].set(w3.astype(jnp.bfloat16))
    b3p = jnp.zeros((1, NA), jnp.float32).at[:, :A].set(b3.astype(jnp.float32))

    return (wc, bc, w1b, b1r, w2p, b2p, w3p, b3p)


# ---------------------------------------------------------------------------
# Forward pass
# ---------------------------------------------------------------------------
@partial(jax.jit, static_argnames=("num_actions",))
def network_forward(x, prep, num_actions):
    """x: (B, 2, H, W) f32 NCHW; prep = prepare_params(params)."""
    wc, bc, w1b, b1, w2p, b2p, w3p, b3p = prep
    B, C, H, W = x.shape
    assert C == 2
    Ho, Wo = H + 1, W + 1                      # k=2, s=1, p=1
    P = Ho * Wo
    F = 24 * P
    assert w1b.shape[0] == F
    NA = w3p.shape[1]

    # Tiny fused XLA prologue: pad + im2col -> (8, B, P)  (~16 KB).
    xp = jnp.pad(x.astype(jnp.float32), ((0, 0), (0, 0), (1, 1), (1, 1)))
    parts = [xp[:, c, kh:kh + Ho, kw:kw + Wo]
             for c in range(2) for kh in range(2) for kw in range(2)]
    pat = jnp.stack(parts, axis=0).reshape(8, B, P)

    out_pad = pl.pallas_call(
        _fused_kernel,
        out_shape=jax.ShapeDtypeStruct((B, NA), jnp.float32),
        in_specs=[_vmem(), _smem(), _smem(), _vmem(), _vmem(), _vmem(),
                  _vmem(), _vmem(), _vmem()],
        out_specs=_vmem(),
        scratch_shapes=[pltpu.VMEM((B, F), jnp.float32)],
    )(pat, wc, bc, w1b, b1, w2p, b2p, w3p, b3p)

    return out_pad[:, :num_actions]


# ---------------------------------------------------------------------------
# Pure-JAX references
# ---------------------------------------------------------------------------
def network_forward_ref(x, params):
    """Full-f32 reference mirroring the PyTorch forward exactly."""
    conv_w, conv_b, w1, b1, w2, b2, w3, b3 = params
    hp = jax.lax.Precision.HIGHEST
    B = x.shape[0]
    y = jax.lax.conv_general_dilated(
        x, conv_w, window_strides=(1, 1), padding=((1, 1), (1, 1)),
        dimension_numbers=("NCHW", "OIHW", "NCHW"), precision=hp)
    y = _leaky(y + conv_b.reshape(1, 24, 1, 1))
    y = y.reshape(B, -1)
    y = _leaky(jnp.dot(y, w1, precision=hp) + b1)
    y = _leaky(jnp.dot(y, w2, precision=hp) + b2)
    return jnp.dot(y, w3, precision=hp) + b3


def network_forward_mimic(x, params):
    """Reference that mimics the kernel's bf16-input / f32-accum matmuls."""
    conv_w, conv_b, w1, b1, w2, b2, w3, b3 = params
    hp = jax.lax.Precision.HIGHEST
    B = x.shape[0]
    rb = lambda a: a.astype(jnp.bfloat16).astype(jnp.float32)
    y = jax.lax.conv_general_dilated(
        x, conv_w, window_strides=(1, 1), padding=((1, 1), (1, 1)),
        dimension_numbers=("NCHW", "OIHW", "NCHW"), precision=hp)
    y = _leaky(y + conv_b.reshape(1, 24, 1, 1))
    y = y.reshape(B, -1)
    y = _leaky(jnp.dot(rb(y), rb(w1), precision=hp) + b1)
    y = _leaky(jnp.dot(rb(y), rb(w2), precision=hp) + b2)
    return jnp.dot(rb(y), rb(w3), precision=hp) + b3


def init_params(key, H, W, num_actions):
    Ho, Wo = H + 1, W + 1
    flat = 24 * Ho * Wo
    ks = jax.random.split(key, 8)

    def u(k, shape, fan_in):
        bound = 1.0 / jnp.sqrt(fan_in)
        return jax.random.uniform(k, shape, jnp.float32, -bound, bound)

    conv_w = u(ks[0], (24, 2, 2, 2), 2 * 2 * 2)
    conv_b = u(ks[1], (24,), 2 * 2 * 2)
    w1 = u(ks[2], (flat, 256), flat)
    b1 = u(ks[3], (256,), flat)
    w2 = u(ks[4], (256, 64), 256)
    b2 = u(ks[5], (64,), 256)
    w3 = u(ks[6], (64, num_actions), 64)
    b3 = u(ks[7], (num_actions,), 64)
    return (conv_w, conv_b, w1, b1, w2, b2, w3, b3)


if __name__ == "__main__":
    # Small maze: num_rows = num_cols = 7 -> conv output 8x8 -> flat = 1536.
    B, H, W, num_actions = 8, 7, 7, 4
    key = jax.random.PRNGKey(0)
    k_x, k_p = jax.random.split(key)
    x = jax.random.normal(k_x, (B, 2, H, W), jnp.float32)
    params = init_params(k_p, H, W, num_actions)

    prep = prepare_params(params)            # one-time cast / padding
    out = jax.block_until_ready(network_forward(x, prep, num_actions))

    ref_mimic = jax.block_until_ready(network_forward_mimic(x, params))
    ref_f32 = jax.block_until_ready(network_forward_ref(x, params))

    assert out.shape == (B, num_actions)
    err_t = float(jnp.max(jnp.abs(out - ref_mimic)))
    assert jnp.allclose(out, ref_mimic, atol=5e-3, rtol=5e-3), (
        f"max abs err vs bf16-mimic ref: {err_t}")
    err_l = float(jnp.max(jnp.abs(out - ref_f32)))
    assert jnp.allclose(out, ref_f32, atol=5e-2, rtol=5e-2), (
        f"max abs err vs full-f32 ref: {err_l}")
    print("KERNEL_OK")
</pallas_src>

<mosaic_0001>
module attributes {stable_mosaic.version = 11 : i64} {
  func.func @_fused_kernel(%arg0: memref<8x8x64xf32, #tpu.memory_space<vmem>>, %arg1: memref<8x24xf32, #tpu.memory_space<smem>>, %arg2: memref<24xf32, #tpu.memory_space<smem>>, %arg3: memref<1536x256xbf16, #tpu.memory_space<vmem>>, %arg4: memref<1x256xf32, #tpu.memory_space<vmem>>, %arg5: memref<256x128xbf16, #tpu.memory_space<vmem>>, %arg6: memref<1x128xf32, #tpu.memory_space<vmem>>, %arg7: memref<128x128xbf16, #tpu.memory_space<vmem>>, %arg8: memref<1x128xf32, #tpu.memory_space<vmem>>, %arg9: memref<8x128xf32, #tpu.memory_space<vmem>>, %arg10: memref<8x1536xf32, #tpu.memory_space<vmem>>) attributes {dimension_semantics = [], scalar_prefetch = 0 : i64, scratch_operands = 1 : i64, tpu.core_type = #tpu.core_type<tc>} {
    %c0 = arith.constant 0 : index
    %c0_0 = arith.constant 0 : index
    %c0_1 = arith.constant 0 : index
    %0 = vector.load %arg0[%c0, %c0_0, %c0_1] : memref<8x8x64xf32, #tpu.memory_space<vmem>>, vector<1x8x64xf32>
    %1 = vector.shape_cast %0 : vector<1x8x64xf32> to vector<8x64xf32>
    %c0_2 = arith.constant 0 : index
    %c0_3 = arith.constant 0 : index
    %2 = memref.load %arg1[%c0_2, %c0_3] : memref<8x24xf32, #tpu.memory_space<smem>>
    %3 = vector.broadcast %2 : f32 to vector<8x64xf32>
    %4 = arith.mulf %1, %3 : vector<8x64xf32>
    %c0_4 = arith.constant 0 : index
    %5 = memref.load %arg2[%c0_4] : memref<24xf32, #tpu.memory_space<smem>>
    %6 = vector.broadcast %5 : f32 to vector<8x64xf32>
    %7 = arith.addf %4, %6 : vector<8x64xf32>
    %c1 = arith.constant 1 : index
    %c0_5 = arith.constant 0 : index
    %c0_6 = arith.constant 0 : index
    %8 = vector.load %arg0[%c1, %c0_5, %c0_6] : memref<8x8x64xf32, #tpu.memory_space<vmem>>, vector<1x8x64xf32>
    %9 = vector.shape_cast %8 : vector<1x8x64xf32> to vector<8x64xf32>
    %c1_7 = arith.constant 1 : index
    %c0_8 = arith.constant 0 : index
    %10 = memref.load %arg1[%c1_7, %c0_8] : memref<8x24xf32, #tpu.memory_space<smem>>
    %11 = vector.broadcast %10 : f32 to vector<8x64xf32>
    %12 = arith.mulf %9, %11 : vector<8x64xf32>
    %13 = arith.addf %7, %12 : vector<8x64xf32>
    %c2 = arith.constant 2 : index
    %c0_9 = arith.constant 0 : index
    %c0_10 = arith.constant 0 : index
    %14 = vector.load %arg0[%c2, %c0_9, %c0_10] : memref<8x8x64xf32, #tpu.memory_space<vmem>>, vector<1x8x64xf32>
    %15 = vector.shape_cast %14 : vector<1x8x64xf32> to vector<8x64xf32>
    %c2_11 = arith.constant 2 : index
    %c0_12 = arith.constant 0 : index
    %16 = memref.load %arg1[%c2_11, %c0_12] : memref<8x24xf32, #tpu.memory_space<smem>>
    %17 = vector.broadcast %16 : f32 to vector<8x64xf32>
    %18 = arith.mulf %15, %17 : vector<8x64xf32>
    %19 = arith.addf %13, %18 : vector<8x64xf32>
    %c3 = arith.constant 3 : index
    %c0_13 = arith.constant 0 : index
    %c0_14 = arith.constant 0 : index
    %20 = vector.load %arg0[%c3, %c0_13, %c0_14] : memref<8x8x64xf32, #tpu.memory_space<vmem>>, vector<1x8x64xf32>
    %21 = vector.shape_cast %20 : vector<1x8x64xf32> to vector<8x64xf32>
    %c3_15 = arith.constant 3 : index
    %c0_16 = arith.constant 0 : index
    %22 = memref.load %arg1[%c3_15, %c0_16] : memref<8x24xf32, #tpu.memory_space<smem>>
    %23 = vector.broadcast %22 : f32 to vector<8x64xf32>
    %24 = arith.mulf %21, %23 : vector<8x64xf32>
    %25 = arith.addf %19, %24 : vector<8x64xf32>
    %c4 = arith.constant 4 : index
    %c0_17 = arith.constant 0 : index
    %c0_18 = arith.constant 0 : index
    %26 = vector.load %arg0[%c4, %c0_17, %c0_18] : memref<8x8x64xf32, #tpu.memory_space<vmem>>, vector<1x8x64xf32>
    %27 = vector.shape_cast %26 : vector<1x8x64xf32> to vector<8x64xf32>
    %c4_19 = arith.constant 4 : index
    %c0_20 = arith.constant 0 : index
    %28 = memref.load %arg1[%c4_19, %c0_20] : memref<8x24xf32, #tpu.memory_space<smem>>
    %29 = vector.broadcast %28 : f32 to vector<8x64xf32>
    %30 = arith.mulf %27, %29 : vector<8x64xf32>
    %31 = arith.addf %25, %30 : vector<8x64xf32>
    %c5 = arith.constant 5 : index
    %c0_21 = arith.constant 0 : index
    %c0_22 = arith.constant 0 : index
    %32 = vector.load %arg0[%c5, %c0_21, %c0_22] : memref<8x8x64xf32, #tpu.memory_space<vmem>>, vector<1x8x64xf32>
    %33 = vector.shape_cast %32 : vector<1x8x64xf32> to vector<8x64xf32>
    %c5_23 = arith.constant 5 : index
    %c0_24 = arith.constant 0 : index
    %34 = memref.load %arg1[%c5_23, %c0_24] : memref<8x24xf32, #tpu.memory_space<smem>>
    %35 = vector.broadcast %34 : f32 to vector<8x64xf32>
    %36 = arith.mulf %33, %35 : vector<8x64xf32>
    %37 = arith.addf %31, %36 : vector<8x64xf32>
    %c6 = arith.constant 6 : index
    %c0_25 = arith.constant 0 : index
    %c0_26 = arith.constant 0 : index
    %38 = vector.load %arg0[%c6, %c0_25, %c0_26] : memref<8x8x64xf32, #tpu.memory_space<vmem>>, vector<1x8x64xf32>
    %39 = vector.shape_cast %38 : vector<1x8x64xf32> to vector<8x64xf32>
    %c6_27 = arith.constant 6 : index
    %c0_28 = arith.constant 0 : index
    %40 = memref.load %arg1[%c6_27, %c0_28] : memref<8x24xf32, #tpu.memory_space<smem>>
    %41 = vector.broadcast %40 : f32 to vector<8x64xf32>
    %42 = arith.mulf %39, %41 : vector<8x64xf32>
    %43 = arith.addf %37, %42 : vector<8x64xf32>
    %c7 = arith.constant 7 : index
    %c0_29 = arith.constant 0 : index
    %c0_30 = arith.constant 0 : index
    %44 = vector.load %arg0[%c7, %c0_29, %c0_30] : memref<8x8x64xf32, #tpu.memory_space<vmem>>, vector<1x8x64xf32>
    %45 = vector.shape_cast %44 : vector<1x8x64xf32> to vector<8x64xf32>
    %c7_31 = arith.constant 7 : index
    %c0_32 = arith.constant 0 : index
    %46 = memref.load %arg1[%c7_31, %c0_32] : memref<8x24xf32, #tpu.memory_space<smem>>
    %47 = vector.broadcast %46 : f32 to vector<8x64xf32>
    %48 = arith.mulf %45, %47 : vector<8x64xf32>
    %49 = arith.addf %43, %48 : vector<8x64xf32>
    %cst = arith.constant 0.000000e+00 : f32
    %50 = vector.broadcast %cst : f32 to vector<8x64xf32>
    %51 = arith.cmpf oge, %49, %50 : vector<8x64xf32>
    %cst_33 = arith.constant 0.00999999977 : f32
    %52 = vector.broadcast %cst_33 : f32 to vector<8x64xf32>
    %53 = arith.mulf %52, %49 : vector<8x64xf32>
    %54 = arith.select %51, %49, %53 : vector<8x64xi1>, vector<8x64xf32>
    %c0_34 = arith.constant 0 : index
    %c0_35 = arith.constant 0 : index
    %55 = vector.load %arg10[%c0_34, %c0_35] : memref<8x1536xf32, #tpu.memory_space<vmem>>, vector<8x64xf32>
    tpu.vector_store %arg10[%c0_34, %c0_35], %54 {strides = array<i32>} : memref<8x1536xf32, #tpu.memory_space<vmem>>, vector<8x64xf32>,
    %c0_36 = arith.constant 0 : index
    %c0_37 = arith.constant 0 : index
    %c0_38 = arith.constant 0 : index
    %56 = vector.load %arg0[%c0_36, %c0_37, %c0_38] : memref<8x8x64xf32, #tpu.memory_space<vmem>>, vector<1x8x64xf32>
    %57 = vector.shape_cast %56 : vector<1x8x64xf32> to vector<8x64xf32>
    %c0_39 = arith.constant 0 : index
    %c1_40 = arith.constant 1 : index
    %58 = memref.load %arg1[%c0_39, %c1_40] : memref<8x24xf32, #tpu.memory_space<smem>>
    %59 = vector.broadcast %58 : f32 to vector<8x64xf32>
    %60 = arith.mulf %57, %59 : vector<8x64xf32>
    %c1_41 = arith.constant 1 : index
    %61 = memref.load %arg2[%c1_41] : memref<24xf32, #tpu.memory_space<smem>>
    %62 = vector.broadcast %61 : f32 to vector<8x64xf32>
    %63 = arith.addf %60, %62 : vector<8x64xf32>
    %c1_42 = arith.constant 1 : index
    %c0_43 = arith.constant 0 : index
    %c0_44 = arith.constant 0 : index
    %64 = vector.load %arg0[%c1_42, %c0_43, %c0_44] : memref<8x8x64xf32, #tpu.memory_space<vmem>>, vector<1x8x64xf32>
    %65 = vector.shape_cast %64 : vector<1x8x64xf32> to vector<8x64xf32>
    %c1_45 = arith.constant 1 : index
    %c1_46 = arith.constant 1 : index
    %66 = memref.load %arg1[%c1_45, %c1_46] : memref<8x24xf32, #tpu.memory_space<smem>>
    %67 = vector.broadcast %66 : f32 to vector<8x64xf32>
    %68 = arith.mulf %65, %67 : vector<8x64xf32>
    %69 = arith.addf %63, %68 : vector<8x64xf32>
    %c2_47 = arith.constant 2 : index
    %c0_48 = arith.constant 0 : index
    %c0_49 = arith.constant 0 : index
    %70 = vector.load %arg0[%c2_47, %c0_48, %c0_49] : memref<8x8x64xf32, #tpu.memory_space<vmem>>, vector<1x8x64xf32>
    %71 = vector.shape_cast %70 : vector<1x8x64xf32> to vector<8x64xf32>
    %c2_50 = arith.constant 2 : index
    %c1_51 = arith.constant 1 : index
    %72 = memref.load %arg1[%c2_50, %c1_51] : memref<8x24xf32, #tpu.memory_space<smem>>
    %73 = vector.broadcast %72 : f32 to vector<8x64xf32>
    %74 = arith.mulf %71, %73 : vector<8x64xf32>
    %75 = arith.addf %69, %74 : vector<8x64xf32>
    %c3_52 = arith.constant 3 : index
    %c0_53 = arith.constant 0 : index
    %c0_54 = arith.constant 0 : index
    %76 = vector.load %arg0[%c3_52, %c0_53, %c0_54] : memref<8x8x64xf32, #tpu.memory_space<vmem>>, vector<1x8x64xf32>
    %77 = vector.shape_cast %76 : vector<1x8x64xf32> to vector<8x64xf32>
    %c3_55 = arith.constant 3 : index
    %c1_56 = arith.constant 1 : index
    %78 = memref.load %arg1[%c3_55, %c1_56] : memref<8x24xf32, #tpu.memory_space<smem>>
    %79 = vector.broadcast %78 : f32 to vector<8x64xf32>
    %80 = arith.mulf %77, %79 : vector<8x64xf32>
    %81 = arith.addf %75, %80 : vector<8x64xf32>
    %c4_57 = arith.constant 4 : index
    %c0_58 = arith.constant 0 : index
    %c0_59 = arith.constant 0 : index
    %82 = vector.load %arg0[%c4_57, %c0_58, %c0_59] : memref<8x8x64xf32, #tpu.memory_space<vmem>>, vector<1x8x64xf32>
    %83 = vector.shape_cast %82 : vector<1x8x64xf32> to vector<8x64xf32>
    %c4_60 = arith.constant 4 : index
    %c1_61 = arith.constant 1 : index
    %84 = memref.load %arg1[%c4_60, %c1_61] : memref<8x24xf32, #tpu.memory_space<smem>>
    %85 = vector.broadcast %84 : f32 to vector<8x64xf32>
    %86 = arith.mulf %83, %85 : vector<8x64xf32>
    %87 = arith.addf %81, %86 : vector<8x64xf32>
    %c5_62 = arith.constant 5 : index
    %c0_63 = arith.constant 0 : index
    %c0_64 = arith.constant 0 : index
    %88 = vector.load %arg0[%c5_62, %c0_63, %c0_64] : memref<8x8x64xf32, #tpu.memory_space<vmem>>, vector<1x8x64xf32>
    %89 = vector.shape_cast %88 : vector<1x8x64xf32> to vector<8x64xf32>
    %c5_65 = arith.constant 5 : index
    %c1_66 = arith.constant 1 : index
    %90 = memref.load %arg1[%c5_65, %c1_66] : memref<8x24xf32, #tpu.memory_space<smem>>
    %91 = vector.broadcast %90 : f32 to vector<8x64xf32>
    %92 = arith.mulf %89, %91 : vector<8x64xf32>
    %93 = arith.addf %87, %92 : vector<8x64xf32>
    %c6_67 = arith.constant 6 : index
    %c0_68 = arith.constant 0 : index
    %c0_69 = arith.constant 0 : index
    %94 = vector.load %arg0[%c6_67, %c0_68, %c0_69] : memref<8x8x64xf32, #tpu.memory_space<vmem>>, vector<1x8x64xf32>
    %95 = vector.shape_cast %94 : vector<1x8x64xf32> to vector<8x64xf32>
    %c6_70 = arith.constant 6 : index
    %c1_71 = arith.constant 1 : index
    %96 = memref.load %arg1[%c6_70, %c1_71] : memref<8x24xf32, #tpu.memory_space<smem>>
    %97 = vector.broadcast %96 : f32 to vector<8x64xf32>
    %98 = arith.mulf %95, %97 : vector<8x64xf32>
    %99 = arith.addf %93, %98 : vector<8x64xf32>
    %c7_72 = arith.constant 7 : index
    %c0_73 = arith.constant 0 : index
    %c0_74 = arith.constant 0 : index
    %100 = vector.load %arg0[%c7_72, %c0_73, %c0_74] : memref<8x8x64xf32, #tpu.memory_space<vmem>>, vector<1x8x64xf32>
    %101 = vector.shape_cast %100 : vector<1x8x64xf32> to vector<8x64xf32>
    %c7_75 = arith.constant 7 : index
    %c1_76 = arith.constant 1 : index
    %102 = memref.load %arg1[%c7_75, %c1_76] : memref<8x24xf32, #tpu.memory_space<smem>>
    %103 = vector.broadcast %102 : f32 to vector<8x64xf32>
    %104 = arith.mulf %101, %103 : vector<8x64xf32>
    %105 = arith.addf %99, %104 : vector<8x64xf32>
    %cst_77 = arith.constant 0.000000e+00 : f32
    %106 = vector.broadcast %cst_77 : f32 to vector<8x64xf32>
    %107 = arith.cmpf oge, %105, %106 : vector<8x64xf32>
    %cst_78 = arith.constant 0.00999999977 : f32
    %108 = vector.broadcast %cst_78 : f32 to vector<8x64xf32>
    %109 = arith.mulf %108, %105 : vector<8x64xf32>
    %110 = arith.select %107, %105, %109 : vector<8x64xi1>, vector<8x64xf32>
    %c0_79 = arith.constant 0 : index
    %c64 = arith.constant 64 : index
    %111 = vector.load %arg10[%c0_79, %c64] : memref<8x1536xf32, #tpu.memory_space<vmem>>, vector<8x64xf32>
    tpu.vector_store %arg10[%c0_79, %c64], %110 {strides = array<i32>} : memref<8x1536xf32, #tpu.memory_space<vmem>>, vector<8x64xf32>,
    %c0_80 = arith.constant 0 : index
    %c0_81 = arith.constant 0 : index
    %c0_82 = arith.constant 0 : index
    %112 = vector.load %arg0[%c0_80, %c0_81, %c0_82] : memref<8x8x64xf32, #tpu.memory_space<vmem>>, vector<1x8x64xf32>
    %113 = vector.shape_cast %112 : vector<1x8x64xf32> to vector<8x64xf32>
    %c0_83 = arith.constant 0 : index
    %c2_84 = arith.constant 2 : index
    %114 = memref.load %arg1[%c0_83, %c2_84] : memref<8x24xf32, #tpu.memory_space<smem>>
    %115 = vector.broadcast %114 : f32 to vector<8x64xf32>
    %116 = arith.mulf %113, %115 : vector<8x64xf32>
    %c2_85 = arith.constant 2 : index
    %117 = memref.load %arg2[%c2_85] : memref<24xf32, #tpu.memory_space<smem>>
    %118 = vector.broadcast %117 : f32 to vector<8x64xf32>
    %119 = arith.addf %116, %118 : vector<8x64xf32>
    %c1_86 = arith.constant 1 : index
    %c0_87 = arith.constant 0 : index
    %c0_88 = arith.constant 0 : index
    %120 = vector.load %arg0[%c1_86, %c0_87, %c0_88] : memref<8x8x64xf32, #tpu.memory_space<vmem>>, vector<1x8x64xf32>
    %121 = vector.shape_cast %120 : vector<1x8x64xf32> to vector<8x64xf32>
    %c1_89 = arith.constant 1 : index
    %c2_90 = arith.constant 2 : index
    %122 = memref.load %arg1[%c1_89, %c2_90] : memref<8x24xf32, #tpu.memory_space<smem>>
    %123 = vector.broadcast %122 : f32 to vector<8x64xf32>
    %124 = arith.mulf %121, %123 : vector<8x64xf32>
    %125 = arith.addf %119, %124 : vector<8x64xf32>
    %c2_91 = arith.constant 2 : index
    %c0_92 = arith.constant 0 : index
    %c0_93 = arith.constant 0 : index
    %126 = vector.load %arg0[%c2_91, %c0_92, %c0_93] : memref<8x8x64xf32, #tpu.memory_space<vmem>>, vector<1x8x64xf32>
    %127 = vector.shape_cast %126 : vector<1x8x64xf32> to vector<8x64xf32>
    %c2_94 = arith.constant 2 : index
    %c2_95 = arith.constant 2 : index
    %128 = memref.load %arg1[%c2_94, %c2_95] : memref<8x24xf32, #tpu.memory_space<smem>>
    %129 = vector.broadcast %128 : f32 to vector<8x64xf32>
    %130 = arith.mulf %127, %129 : vector<8x64xf32>
    %131 = arith.addf %125, %130 : vector<8x64xf32>
    %c3_96 = arith.constant 3 : index
    %c0_97 = arith.constant 0 : index
    %c0_98 = arith.constant 0 : index
    %132 = vector.load %arg0[%c3_96, %c0_97, %c0_98] : memref<8x8x64xf32, #tpu.memory_space<vmem>>, vector<1x8x64xf32>
    %133 = vector.shape_cast %132 : vector<1x8x64xf32> to vector<8x64xf32>
    %c3_99 = arith.constant 3 : index
    %c2_100 = arith.constant 2 : index
    %134 = memref.load %arg1[%c3_99, %c2_100] : memref<8x24xf32, #tpu.memory_space<smem>>
    %135 = vector.broadcast %134 : f32 to vector<8x64xf32>
    %136 = arith.mulf %133, %135 : vector<8x64xf32>
    %137 = arith.addf %131, %136 : vector<8x64xf32>
    %c4_101 = arith.constant 4 : index
    %c0_102 = arith.constant 0 : index
    %c0_103 = arith.constant 0 : index
    %138 = vector.load %arg0[%c4_101, %c0_102, %c0_103] : memref<8x8x64xf32, #tpu.memory_space<vmem>>, vector<1x8x64xf32>
    %139 = vector.shape_cast %138 : vector<1x8x64xf32> to vector<8x64xf32>
    %c4_104 = arith.constant 4 : index
    %c2_105 = arith.constant 2 : index
    %140 = memref.load %arg1[%c4_104, %c2_105] : memref<8x24xf32, #tpu.memory_space<smem>>
    %141 = vector.broadcast %140 : f32 to vector<8x64xf32>
    %142 = arith.mulf %139, %141 : vector<8x64xf32>
    %143 = arith.addf %137, %142 : vector<8x64xf32>
    %c5_106 = arith.constant 5 : index
    %c0_107 = arith.constant 0 : index
    %c0_108 = arith.constant 0 : index
    %144 = vector.load %arg0[%c5_106, %c0_107, %c0_108] : memref<8x8x64xf32, #tpu.memory_space<vmem>>, vector<1x8x64xf32>
    %145 = vector.shape_cast %144 : vector<1x8x64xf32> to vector<8x64xf32>
    %c5_109 = arith.constant 5 : index
    %c2_110 = arith.constant 2 : index
    %146 = memref.load %arg1[%c5_109, %c2_110] : memref<8x24xf32, #tpu.memory_space<smem>>
    %147 = vector.broadcast %146 : f32 to vector<8x64xf32>
    %148 = arith.mulf %145, %147 : vector<8x64xf32>
    %149 = arith.addf %143, %148 : vector<8x64xf32>
    %c6_111 = arith.constant 6 : index
    %c0_112 = arith.constant 0 : index
    %c0_113 = arith.constant 0 : index
    %150 = vector.load %arg0[%c6_111, %c0_112, %c0_113] : memref<8x8x64xf32, #tpu.memory_space<vmem>>, vector<1x8x64xf32>
    %151 = vector.shape_cast %150 : vector<1x8x64xf32> to vector<8x64xf32>
    %c6_114 = arith.constant 6 : index
    %c2_115 = arith.constant 2 : index
    %152 = memref.load %arg1[%c6_114, %c2_115] : memref<8x24xf32, #tpu.memory_space<smem>>
    %153 = vector.broadcast %152 : f32 to vector<8x64xf32>
    %154 = arith.mulf %151, %153 : vector<8x64xf32>
    %155 = arith.addf %149, %154 : vector<8x64xf32>
    %c7_116 = arith.constant 7 : index
    %c0_117 = arith.constant 0 : index
    %c0_118 = arith.constant 0 : index
    %156 = vector.load %arg0[%c7_116, %c0_117, %c0_118] : memref<8x8x64xf32, #tpu.memory_space<vmem>>, vector<1x8x64xf32>
    %157 = vector.shape_cast %156 : vector<1x8x64xf32> to vector<8x64xf32>
    %c7_119 = arith.constant 7 : index
    %c2_120 = arith.constant 2 : index
    %158 = memref.load %arg1[%c7_119, %c2_120] : memref<8x24xf32, #tpu.memory_space<smem>>
    %159 = vector.broadcast %158 : f32 to vector<8x64xf32>
    %160 = arith.mulf %157, %159 : vector<8x64xf32>
    %161 = arith.addf %155, %160 : vector<8x64xf32>
    %cst_121 = arith.constant 0.000000e+00 : f32
    %162 = vector.broadcast %cst_121 : f32 to vector<8x64xf32>
    %163 = arith.cmpf oge, %161, %162 : vector<8x64xf32>
    %cst_122 = arith.constant 0.00999999977 : f32
    %164 = vector.broadcast %cst_122 : f32 to vector<8x64xf32>
    %165 = arith.mulf %164, %161 : vector<8x64xf32>
    %166 = arith.select %163, %161, %165 : vector<8x64xi1>, vector<8x64xf32>
    %c0_123 = arith.constant 0 : index
    %c128 = arith.constant 128 : index
    %167 = vector.load %arg10[%c0_123, %c128] : memref<8x1536xf32, #tpu.memory_space<vmem>>, vector<8x64xf32>
    tpu.vector_store %arg10[%c0_123, %c128], %166 {strides = array<i32>} : memref<8x1536xf32, #tpu.memory_space<vmem>>, vector<8x64xf32>,
    %c0_124 = arith.constant 0 : index
    %c0_125 = arith.constant 0 : index
    %c0_126 = arith.constant 0 : index
    %168 = vector.load %arg0[%c0_124, %c0_125, %c0_126] : memref<8x8x64xf32, #tpu.memory_space<vmem>>, vector<1x8x64xf32>
    %169 = vector.shape_cast %168 : vector<1x8x64xf32> to vector<8x64xf32>
    %c0_127 = arith.constant 0 : index
    %c3_128 = arith.constant 3 : index
    %170 = memref.load %arg1[%c0_127, %c3_128] : memref<8x24xf32, #tpu.memory_space<smem>>
    %171 = vector.broadcast %170 : f32 to vector<8x64xf32>
    %172 = arith.mulf %169, %171 : vector<8x64xf32>
    %c3_129 = arith.constant 3 : index
    %173 = memref.load %arg2[%c3_129] : memref<24xf32, #tpu.memory_space<smem>>
    %174 = vector.broadcast %173 : f32 to vector<8x64xf32>
    %175 = arith.addf %172, %174 : vector<8x64xf32>
    %c1_130 = arith.constant 1 : index
    %c0_131 = arith.constant 0 : index
    %c0_132 = arith.constant 0 : index
    %176 = vector.load %arg0[%c1_130, %c0_131, %c0_132] : memref<8x8x64xf32, #tpu.memory_space<vmem>>, vector<1x8x64xf32>
    %177 = vector.shape_cast %176 : vector<1x8x64xf32> to vector<8x64xf32>
    %c1_133 = arith.constant 1 : index
    %c3_134 = arith.constant 3 : index
    %178 = memref.load %arg1[%c1_133, %c3_134] : memref<8x24xf32, #tpu.memory_space<smem>>
    %179 = vector.broadcast %178 : f32 to vector<8x64xf32>
    %180 = arith.mulf %177, %179 : vector<8x64xf32>
    %181 = arith.addf %175, %180 : vector<8x64xf32>
    %c2_135 = arith.constant 2 : index
    %c0_136 = arith.constant 0 : index
    %c0_137 = arith.constant 0 : index
    %182 = vector.load %arg0[%c2_135, %c0_136, %c0_137] : memref<8x8x64xf32, #tpu.memory_space<vmem>>, vector<1x8x64xf32>
    %183 = vector.shape_cast %182 : vector<1x8x64xf32> to vector<8x64xf32>
    %c2_138 = arith.constant 2 : index
    %c3_139 = arith.constant 3 : index
    %184 = memref.load %arg1[%c2_138, %c3_139] : memref<8x24xf32, #tpu.memory_space<smem>>
    %185 = vector.broadcast %184 : f32 to vector<8x64xf32>
    %186 = arith.mulf %183, %185 : vector<8x64xf32>
    %187 = arith.addf %181, %186 : vector<8x64xf32>
    %c3_140 = arith.constant 3 : index
    %c0_141 = arith.constant 0 : index
    %c0_142 = arith.constant 0 : index
    %188 = vector.load %arg0[%c3_140, %c0_141, %c0_142] : memref<8x8x64xf32, #tpu.memory_space<vmem>>, vector<1x8x64xf32>
    %189 = vector.shape_cast %188 : vector<1x8x64xf32> to vector<8x64xf32>
    %c3_143 = arith.constant 3 : index
    %c3_144 = arith.constant 3 : index
    %190 = memref.load %arg1[%c3_143, %c3_144] : memref<8x24xf32, #tpu.memory_space<smem>>
    %191 = vector.broadcast %190 : f32 to vector<8x64xf32>
    %192 = arith.mulf %189, %191 : vector<8x64xf32>
    %193 = arith.addf %187, %192 : vector<8x64xf32>
    %c4_145 = arith.constant 4 : index
    %c0_146 = arith.constant 0 : index
    %c0_147 = arith.constant 0 : index
    %194 = vector.load %arg0[%c4_145, %c0_146, %c0_147] : memref<8x8x64xf32, #tpu.memory_space<vmem>>, vector<1x8x64xf32>
    %195 = vector.shape_cast %194 : vector<1x8x64xf32> to vector<8x64xf32>
    %c4_148 = arith.constant 4 : index
    %c3_149 = arith.constant 3 : index
    %196 = memref.load %arg1[%c4_148, %c3_149] : memref<8x24xf32, #tpu.memory_space<smem>>
    %197 = vector.broadcast %196 : f32 to vector<8x64xf32>
    %198 = arith.mulf %195, %197 : vector<8x64xf32>
    %199 = arith.addf %193, %198 : vector<8x64xf32>
    %c5_150 = arith.constant 5 : index
    %c0_151 = arith.constant 0 : index
    %c0_152 = arith.constant 0 : index
    %200 = vector.load %arg0[%c5_150, %c0_151, %c0_152] : memref<8x8x64xf32, #tpu.memory_space<vmem>>, vector<1x8x64xf32>
    %201 = vector.shape_cast %200 : vector<1x8x64xf32> to vector<8x64xf32>
    %c5_153 = arith.constant 5 : index
    %c3_154 = arith.constant 3 : index
    %202 = memref.load %arg1[%c5_153, %c3_154] : memref<8x24xf32, #tpu.memory_space<smem>>
    %203 = vector.broadcast %202 : f32 to vector<8x64xf32>
    %204 = arith.mulf %201, %203 : vector<8x64xf32>
    %205 = arith.addf %199, %204 : vector<8x64xf32>
    %c6_155 = arith.constant 6 : index
    %c0_156 = arith.constant 0 : index
    %c0_157 = arith.constant 0 : index
    %206 = vector.load %arg0[%c6_155, %c0_156, %c0_157] : memref<8x8x64xf32, #tpu.memory_space<vmem>>, vector<1x8x64xf32>
    %207 = vector.shape_cast %206 : vector<1x8x64xf32> to vector<8x64xf32>
    %c6_158 = arith.constant 6 : index
    %c3_159 = arith.constant 3 : index
    %208 = memref.load %arg1[%c6_158, %c3_159] : memref<8x24xf32, #tpu.memory_space<smem>>
    %209 = vector.broadcast %208 : f32 to vector<8x64xf32>
    %210 = arith.mulf %207, %209 : vector<8x64xf32>
    %211 = arith.addf %205, %210 : vector<8x64xf32>
    %c7_160 = arith.constant 7 : index
    %c0_161 = arith.constant 0 : index
    %c0_162 = arith.constant 0 : index
    %212 = vector.load %arg0[%c7_160, %c0_161, %c0_162] : memref<8x8x64xf32, #tpu.memory_space<vmem>>, vector<1x8x64xf32>
    %213 = vector.shape_cast %212 : vector<1x8x64xf32> to vector<8x64xf32>
    %c7_163 = arith.constant 7 : index
    %c3_164 = arith.constant 3 : index
    %214 = memref.load %arg1[%c7_163, %c3_164] : memref<8x24xf32, #tpu.memory_space<smem>>
    %215 = vector.broadcast %214 : f32 to vector<8x64xf32>
    %216 = arith.mulf %213, %215 : vector<8x64xf32>
    %217 = arith.addf %211, %216 : vector<8x64xf32>
    %cst_165 = arith.constant 0.000000e+00 : f32
    %218 = vector.broadcast %cst_165 : f32 to vector<8x64xf32>
    %219 = arith.cmpf oge, %217, %218 : vector<8x64xf32>
    %cst_166 = arith.constant 0.00999999977 : f32
    %220 = vector.broadcast %cst_166 : f32 to vector<8x64xf32>
    %221 = arith.mulf %220, %217 : vector<8x64xf32>
    %222 = arith.select %219, %217, %221 : vector<8x64xi1>, vector<8x64xf32>
    %c0_167 = arith.constant 0 : index
    %c192 = arith.constant 192 : index
    %223 = vector.load %arg10[%c0_167, %c192] : memref<8x1536xf32, #tpu.memory_space<vmem>>, vector<8x64xf32>
    tpu.vector_store %arg10[%c0_167, %c192], %222 {strides = array<i32>} : memref<8x1536xf32, #tpu.memory_space<vmem>>, vector<8x64xf32>,
    %c0_168 = arith.constant 0 : index
    %c0_169 = arith.constant 0 : index
    %c0_170 = arith.constant 0 : index
    %224 = vector.load %arg0[%c0_168, %c0_169, %c0_170] : memref<8x8x64xf32, #tpu.memory_space<vmem>>, vector<1x8x64xf32>
    %225 = vector.shape_cast %224 : vector<1x8x64xf32> to vector<8x64xf32>
    %c0_171 = arith.constant 0 : index
    %c4_172 = arith.constant 4 : index
    %226 = memref.load %arg1[%c0_171, %c4_172] : memref<8x24xf32, #tpu.memory_space<smem>>
    %227 = vector.broadcast %226 : f32 to vector<8x64xf32>
    %228 = arith.mulf %225, %227 : vector<8x64xf32>
    %c4_173 = arith.constant 4 : index
    %229 = memref.load %arg2[%c4_173] : memref<24xf32, #tpu.memory_space<smem>>
    %230 = vector.broadcast %229 : f32 to vector<8x64xf32>
    %231 = arith.addf %228, %230 : vector<8x64xf32>
    %c1_174 = arith.constant 1 : index
    %c0_175 = arith.constant 0 : index
    %c0_176 = arith.constant 0 : index
    %232 = vector.load %arg0[%c1_174, %c0_175, %c0_176] : memref<8x8x64xf32, #tpu.memory_space<vmem>>, vector<1x8x64xf32>
    %233 = vector.shape_cast %232 : vector<1x8x64xf32> to vector<8x64xf32>
    %c1_177 = arith.constant 1 : index
    %c4_178 = arith.constant 4 : index
    %234 = memref.load %arg1[%c1_177, %c4_178] : memref<8x24xf32, #tpu.memory_space<smem>>
    %235 = vector.broadcast %234 : f32 to vector<8x64xf32>
    %236 = arith.mulf %233, %235 : vector<8x64xf32>
    %237 = arith.addf %231, %236 : vector<8x64xf32>
    %c2_179 = arith.constant 2 : index
    %c0_180 = arith.constant 0 : index
    %c0_181 = arith.constant 0 : index
    %238 = vector.load %arg0[%c2_179, %c0_180, %c0_181] : memref<8x8x64xf32, #tpu.memory_space<vmem>>, vector<1x8x64xf32>
    %239 = vector.shape_cast %238 : vector<1x8x64xf32> to vector<8x64xf32>
    %c2_182 = arith.constant 2 : index
    %c4_183 = arith.constant 4 : index
    %240 = memref.load %arg1[%c2_182, %c4_183] : memref<8x24xf32, #tpu.memory_space<smem>>
    %241 = vector.broadcast %240 : f32 to vector<8x64xf32>
    %242 = arith.mulf %239, %241 : vector<8x64xf32>
    %243 = arith.addf %237, %242 : vector<8x64xf32>
    %c3_184 = arith.constant 3 : index
    %c0_185 = arith.constant 0 : index
    %c0_186 = arith.constant 0 : index
    %244 = vector.load %arg0[%c3_184, %c0_185, %c0_186] : memref<8x8x64xf32, #tpu.memory_space<vmem>>, vector<1x8x64xf32>
    %245 = vector.shape_cast %244 : vector<1x8x64xf32> to vector<8x64xf32>
    %c3_187 = arith.constant 3 : index
    %c4_188 = arith.constant 4 : index
    %246 = memref.load %arg1[%c3_187, %c4_188] : memref<8x24xf32, #tpu.memory_space<smem>>
    %247 = vector.broadcast %246 : f32 to vector<8x64xf32>
    %248 = arith.mulf %245, %247 : vector<8x64xf32>
    %249 = arith.addf %243, %248 : vector<8x64xf32>
    %c4_189 = arith.constant 4 : index
    %c0_190 = arith.constant 0 : index
    %c0_191 = arith.constant 0 : index
    %250 = vector.load %arg0[%c4_189, %c0_190, %c0_191] : memref<8x8x64xf32, #tpu.memory_space<vmem>>, vector<1x8x64xf32>
    %251 = vector.shape_cast %250 : vector<1x8x64xf32> to vector<8x64xf32>
    %c4_192 = arith.constant 4 : index
    %c4_193 = arith.constant 4 : index
    %252 = memref.load %arg1[%c4_192, %c4_193] : memref<8x24xf32, #tpu.memory_space<smem>>
    %253 = vector.broadcast %252 : f32 to vector<8x64xf32>
    %254 = arith.mulf %251, %253 : vector<8x64xf32>
    %255 = arith.addf %249, %254 : vector<8x64xf32>
    %c5_194 = arith.constant 5 : index
    %c0_195 = arith.constant 0 : index
    %c0_196 = arith.constant 0 : index
    %256 = vector.load %arg0[%c5_194, %c0_195, %c0_196] : memref<8x8x64xf32, #tpu.memory_space<vmem>>, vector<1x8x64xf32>
    %257 = vector.shape_cast %256 : vector<1x8x64xf32> to vector<8x64xf32>
    %c5_197 = arith.constant 5 : index
    %c4_198 = arith.constant 4 : index
    %258 = memref.load %arg1[%c5_197, %c4_198] : memref<8x24xf32, #tpu.memory_space<smem>>
    %259 = vector.broadcast %258 : f32 to vector<8x64xf32>
    %260 = arith.mulf %257, %259 : vector<8x64xf32>
    %261 = arith.addf %255, %260 : vector<8x64xf32>
    %c6_199 = arith.constant 6 : index
    %c0_200 = arith.constant 0 : index
    %c0_201 = arith.constant 0 : index
    %262 = vector.load %arg0[%c6_199, %c0_200, %c0_201] : memref<8x8x64xf32, #tpu.memory_space<vmem>>, vector<1x8x64xf32>
    %263 = vector.shape_cast %262 : vector<1x8x64xf32> to vector<8x64xf32>
    %c6_202 = arith.constant 6 : index
    %c4_203 = arith.constant 4 : index
    %264 = memref.load %arg1[%c6_202, %c4_203] : memref<8x24xf32, #tpu.memory_space<smem>>
    %265 = vector.broadcast %264 : f32 to vector<8x64xf32>
    %266 = arith.mulf %263, %265 : vector<8x64xf32>
    %267 = arith.addf %261, %266 : vector<8x64xf32>
    %c7_204 = arith.constant 7 : index
    %c0_205 = arith.constant 0 : index
    %c0_206 = arith.constant 0 : index
    %268 = vector.load %arg0[%c7_204, %c0_205, %c0_206] : memref<8x8x64xf32, #tpu.memory_space<vmem>>, vector<1x8x64xf32>
    %269 = vector.shape_cast %268 : vector<1x8x64xf32> to vector<8x64xf32>
    %c7_207 = arith.constant 7 : index
    %c4_208 = arith.constant 4 : index
    %270 = memref.load %arg1[%c7_207, %c4_208] : memref<8x24xf32, #tpu.memory_space<smem>>
    %271 = vector.broadcast %270 : f32 to vector<8x64xf32>
    %272 = arith.mulf %269, %271 : vector<8x64xf32>
    %273 = arith.addf %267, %272 : vector<8x64xf32>
    %cst_209 = arith.constant 0.000000e+00 : f32
    %274 = vector.broadcast %cst_209 : f32 to vector<8x64xf32>
    %275 = arith.cmpf oge, %273, %274 : vector<8x64xf32>
    %cst_210 = arith.constant 0.00999999977 : f32
    %276 = vector.broadcast %cst_210 : f32 to vector<8x64xf32>
    %277 = arith.mulf %276, %273 : vector<8x64xf32>
    %278 = arith.select %275, %273, %277 : vector<8x64xi1>, vector<8x64xf32>
    %c0_211 = arith.constant 0 : index
    %c256 = arith.constant 256 : index
    %279 = vector.load %arg10[%c0_211, %c256] : memref<8x1536xf32, #tpu.memory_space<vmem>>, vector<8x64xf32>
    tpu.vector_store %arg10[%c0_211, %c256], %278 {strides = array<i32>} : memref<8x1536xf32, #tpu.memory_space<vmem>>, vector<8x64xf32>,
    %c0_212 = arith.constant 0 : index
    %c0_213 = arith.constant 0 : index
    %c0_214 = arith.constant 0 : index
    %280 = vector.load %arg0[%c0_212, %c0_213, %c0_214] : memref<8x8x64xf32, #tpu.memory_space<vmem>>, vector<1x8x64xf32>
    %281 = vector.shape_cast %280 : vector<1x8x64xf32> to vector<8x64xf32>
    %c0_215 = arith.constant 0 : index
    %c5_216 = arith.constant 5 : index
    %282 = memref.load %arg1[%c0_215, %c5_216] : memref<8x24xf32, #tpu.memory_space<smem>>
    %283 = vector.broadcast %282 : f32 to vector<8x64xf32>
    %284 = arith.mulf %281, %283 : vector<8x64xf32>
    %c5_217 = arith.constant 5 : index
    %285 = memref.load %arg2[%c5_217] : memref<24xf32, #tpu.memory_space<smem>>
    %286 = vector.broadcast %285 : f32 to vector<8x64xf32>
    %287 = arith.addf %284, %286 : vector<8x64xf32>
    %c1_218 = arith.constant 1 : index
    %c0_219 = arith.constant 0 : index
    %c0_220 = arith.constant 0 : index
    %288 = vector.load %arg0[%c1_218, %c0_219, %c0_220] : memref<8x8x64xf32, #tpu.memory_space<vmem>>, vector<1x8x64xf32>
    %289 = vector.shape_cast %288 : vector<1x8x64xf32> to vector<8x64xf32>
    %c1_221 = arith.constant 1 : index
    %c5_222 = arith.constant 5 : index
    %290 = memref.load %arg1[%c1_221, %c5_222] : memref<8x24xf32, #tpu.memory_space<smem>>
    %291 = vector.broadcast %290 : f32 to vector<8x64xf32>
    %292 = arith.mulf %289, %291 : vector<8x64xf32>
    %293 = arith.addf %287, %292 : vector<8x64xf32>
    %c2_223 = arith.constant 2 : index
    %c0_224 = arith.constant 0 : index
    %c0_225 = arith.constant 0 : index
    %294 = vector.load %arg0[%c2_223, %c0_224, %c0_225] : memref<8x8x64xf32, #tpu.memory_space<vmem>>, vector<1x8x64xf32>
    %295 = vector.shape_cast %294 : vector<1x8x64xf32> to vector<8x64xf32>
    %c2_226 = arith.constant 2 : index
    %c5_227 = arith.constant 5 : index
    %296 = memref.load %arg1[%c2_226, %c5_227] : memref<8x24xf32, #tpu.memory_space<smem>>
    %297 = vector.broadcast %296 : f32 to vector<8x64xf32>
    %298 = arith.mulf %295, %297 : vector<8x64xf32>
    %299 = arith.addf %293, %298 : vector<8x64xf32>
    %c3_228 = arith.constant 3 : index
    %c0_229 = arith.constant 0 : index
    %c0_230 = arith.constant 0 : index
    %300 = vector.load %arg0[%c3_228, %c0_229, %c0_230] : memref<8x8x64xf32, #tpu.memory_space<vmem>>, vector<1x8x64xf32>
    %301 = vector.shape_cast %300 : vector<1x8x64xf32> to vector<8x64xf32>
    %c3_231 = arith.constant 3 : index
    %c5_232 = arith.constant 5 : index
    %302 = memref.load %arg1[%c3_231, %c5_232] : memref<8x24xf32, #tpu.memory_space<smem>>
    %303 = vector.broadcast %302 : f32 to vector<8x64xf32>
    %304 = arith.mulf %301, %303 : vector<8x64xf32>
    %305 = arith.addf %299, %304 : vector<8x64xf32>
    %c4_233 = arith.constant 4 : index
    %c0_234 = arith.constant 0 : index
    %c0_235 = arith.constant 0 : index
    %306 = vector.load %arg0[%c4_233, %c0_234, %c0_235] : memref<8x8x64xf32, #tpu.memory_space<vmem>>, vector<1x8x64xf32>
    %307 = vector.shape_cast %306 : vector<1x8x64xf32> to vector<8x64xf32>
    %c4_236 = arith.constant 4 : index
    %c5_237 = arith.constant 5 : index
    %308 = memref.load %arg1[%c4_236, %c5_237] : memref<8x24xf32, #tpu.memory_space<smem>>
    %309 = vector.broadcast %308 : f32 to vector<8x64xf32>
    %310 = arith.mulf %307, %309 : vector<8x64xf32>
    %311 = arith.addf %305, %310 : vector<8x64xf32>
    %c5_238 = arith.constant 5 : index
    %c0_239 = arith.constant 0 : index
    %c0_240 = arith.constant 0 : index
    %312 = vector.load %arg0[%c5_238, %c0_239, %c0_240] : memref<8x8x64xf32, #tpu.memory_space<vmem>>, vector<1x8x64xf32>
    %313 = vector.shape_cast %312 : vector<1x8x64xf32> to vector<8x64xf32>
    %c5_241 = arith.constant 5 : index
    %c5_242 = arith.constant 5 : index
    %314 = memref.load %arg1[%c5_241, %c5_242] : memref<8x24xf32, #tpu.memory_space<smem>>
    %315 = vector.broadcast %314 : f32 to vector<8x64xf32>
    %316 = arith.mulf %313, %315 : vector<8x64xf32>
    %317 = arith.addf %311, %316 : vector<8x64xf32>
    %c6_243 = arith.constant 6 : index
    %c0_244 = arith.constant 0 : index
    %c0_245 = arith.constant 0 : index
    %318 = vector.load %arg0[%c6_243, %c0_244, %c0_245] : memref<8x8x64xf32, #tpu.memory_space<vmem>>, vector<1x8x64xf32>
    %319 = vector.shape_cast %318 : vector<1x8x64xf32> to vector<8x64xf32>
    %c6_246 = arith.constant 6 : index
    %c5_247 = arith.constant 5 : index
    %320 = memref.load %arg1[%c6_246, %c5_247] : memref<8x24xf32, #tpu.memory_space<smem>>
    %321 = vector.broadcast %320 : f32 to vector<8x64xf32>
    %322 = arith.mulf %319, %321 : vector<8x64xf32>
    %323 = arith.addf %317, %322 : vector<8x64xf32>
    %c7_248 = arith.constant 7 : index
    %c0_249 = arith.constant 0 : index
    %c0_250 = arith.constant 0 : index
    %324 = vector.load %arg0[%c7_248, %c0_249, %c0_250] : memref<8x8x64xf32, #tpu.memory_space<vmem>>, vector<1x8x64xf32>
    %325 = vector.shape_cast %324 : vector<1x8x64xf32> to vector<8x64xf32>
    %c7_251 = arith.constant 7 : index
    %c5_252 = arith.constant 5 : index
    %326 = memref.load %arg1[%c7_251, %c5_252] : memref<8x24xf32, #tpu.memory_space<smem>>
    %327 = vector.broadcast %326 : f32 to vector<8x64xf32>
    %328 = arith.mulf %325, %327 : vector<8x64xf32>
    %329 = arith.addf %323, %328 : vector<8x64xf32>
    %cst_253 = arith.constant 0.000000e+00 : f32
    %330 = vector.broadcast %cst_253 : f32 to vector<8x64xf32>
    %331 = arith.cmpf oge, %329, %330 : vector<8x64xf32>
    %cst_254 = arith.constant 0.00999999977 : f32
    %332 = vector.broadcast %cst_254 : f32 to vector<8x64xf32>
    %333 = arith.mulf %332, %329 : vector<8x64xf32>
    %334 = arith.select %331, %329, %333 : vector<8x64xi1>, vector<8x64xf32>
    %c0_255 = arith.constant 0 : index
    %c320 = arith.constant 320 : index
    %335 = vector.load %arg10[%c0_255, %c320] : memref<8x1536xf32, #tpu.memory_space<vmem>>, vector<8x64xf32>
    tpu.vector_store %arg10[%c0_255, %c320], %334 {strides = array<i32>} : memref<8x1536xf32, #tpu.memory_space<vmem>>, vector<8x64xf32>,
    %c0_256 = arith.constant 0 : index
    %c0_257 = arith.constant 0 : index
    %c0_258 = arith.constant 0 : index
    %336 = vector.load %arg0[%c0_256, %c0_257, %c0_258] : memref<8x8x64xf32, #tpu.memory_space<vmem>>, vector<1x8x64xf32>
    %337 = vector.shape_cast %336 : vector<1x8x64xf32> to vector<8x64xf32>
    %c0_259 = arith.constant 0 : index
    %c6_260 = arith.constant 6 : index
    %338 = memref.load %arg1[%c0_259, %c6_260] : memref<8x24xf32, #tpu.memory_space<smem>>
    %339 = vector.broadcast %338 : f32 to vector<8x64xf32>
    %340 = arith.mulf %337, %339 : vector<8x64xf32>
    %c6_261 = arith.constant 6 : index
    %341 = memref.load %arg2[%c6_261] : memref<24xf32, #tpu.memory_space<smem>>
    %342 = vector.broadcast %341 : f32 to vector<8x64xf32>
    %343 = arith.addf %340, %342 : vector<8x64xf32>
    %c1_262 = arith.constant 1 : index
    %c0_263 = arith.constant 0 : index
    %c0_264 = arith.constant 0 : index
    %344 = vector.load %arg0[%c1_262, %c0_263, %c0_264] : memref<8x8x64xf32, #tpu.memory_space<vmem>>, vector<1x8x64xf32>
    %345 = vector.shape_cast %344 : vector<1x8x64xf32> to vector<8x64xf32>
    %c1_265 = arith.constant 1 : index
    %c6_266 = arith.constant 6 : index
    %346 = memref.load %arg1[%c1_265, %c6_266] : memref<8x24xf32, #tpu.memory_space<smem>>
    %347 = vector.broadcast %346 : f32 to vector<8x64xf32>
    %348 = arith.mulf %345, %347 : vector<8x64xf32>
    %349 = arith.addf %343, %348 : vector<8x64xf32>
    %c2_267 = arith.constant 2 : index
    %c0_268 = arith.constant 0 : index
    %c0_269 = arith.constant 0 : index
    %350 = vector.load %arg0[%c2_267, %c0_268, %c0_269] : memref<8x8x64xf32, #tpu.memory_space<vmem>>, vector<1x8x64xf32>
    %351 = vector.shape_cast %350 : vector<1x8x64xf32> to vector<8x64xf32>
    %c2_270 = arith.constant 2 : index
    %c6_271 = arith.constant 6 : index
    %352 = memref.load %arg1[%c2_270, %c6_271] : memref<8x24xf32, #tpu.memory_space<smem>>
    %353 = vector.broadcast %352 : f32 to vector<8x64xf32>
    %354 = arith.mulf %351, %353 : vector<8x64xf32>
    %355 = arith.addf %349, %354 : vector<8x64xf32>
    %c3_272 = arith.constant 3 : index
    %c0_273 = arith.constant 0 : index
    %c0_274 = arith.constant 0 : index
    %356 = vector.load %arg0[%c3_272, %c0_273, %c0_274] : memref<8x8x64xf32, #tpu.memory_space<vmem>>, vector<1x8x64xf32>
    %357 = vector.shape_cast %356 : vector<1x8x64xf32> to vector<8x64xf32>
    %c3_275 = arith.constant 3 : index
    %c6_276 = arith.constant 6 : index
    %358 = memref.load %arg1[%c3_275, %c6_276] : memref<8x24xf32, #tpu.memory_space<smem>>
    %359 = vector.broadcast %358 : f32 to vector<8x64xf32>
    %360 = arith.mulf %357, %359 : vector<8x64xf32>
    %361 = arith.addf %355, %360 : vector<8x64xf32>
    %c4_277 = arith.constant 4 : index
    %c0_278 = arith.constant 0 : index
    %c0_279 = arith.constant 0 : index
    %362 = vector.load %arg0[%c4_277, %c0_278, %c0_279] : memref<8x8x64xf32, #tpu.memory_space<vmem>>, vector<1x8x64xf32>
    %363 = vector.shape_cast %362 : vector<1x8x64xf32> to vector<8x64xf32>
    %c4_280 = arith.constant 4 : index
    %c6_281 = arith.constant 6 : index
    %364 = memref.load %arg1[%c4_280, %c6_281] : memref<8x24xf32, #tpu.memory_space<smem>>
    %365 = vector.broadcast %364 : f32 to vector<8x64xf32>
    %366 = arith.mulf %363, %365 : vector<8x64xf32>
    %367 = arith.addf %361, %366 : vector<8x64xf32>
    %c5_282 = arith.constant 5 : index
    %c0_283 = arith.constant 0 : index
    %c0_284 = arith.constant 0 : index
    %368 = vector.load %arg0[%c5_282, %c0_283, %c0_284] : memref<8x8x64xf32, #tpu.memory_space<vmem>>, vector<1x8x64xf32>
    %369 = vector.shape_cast %368 : vector<1x8x64xf32> to vector<8x64xf32>
    %c5_285 = arith.constant 5 : index
    %c6_286 = arith.constant 6 : index
    %370 = memref.load %arg1[%c5_285, %c6_286] : memref<8x24xf32, #tpu.memory_space<smem>>
    %371 = vector.broadcast %370 : f32 to vector<8x64xf32>
    %372 = arith.mulf %369, %371 : vector<8x64xf32>
    %373 = arith.addf %367, %372 : vector<8x64xf32>
    %c6_287 = arith.constant 6 : index
    %c0_288 = arith.constant 0 : index
    %c0_289 = arith.constant 0 : index
    %374 = vector.load %arg0[%c6_287, %c0_288, %c0_289] : memref<8x8x64xf32, #tpu.memory_space<vmem>>, vector<1x8x64xf32>
    %375 = vector.shape_cast %374 : vector<1x8x64xf32> to vector<8x64xf32>
    %c6_290 = arith.constant 6 : index
    %c6_291 = arith.constant 6 : index
    %376 = memref.load %arg1[%c6_290, %c6_291] : memref<8x24xf32, #tpu.memory_space<smem>>
    %377 = vector.broadcast %376 : f32 to vector<8x64xf32>
    %378 = arith.mulf %375, %377 : vector<8x64xf32>
    %379 = arith.addf %373, %378 : vector<8x64xf32>
    %c7_292 = arith.constant 7 : index
    %c0_293 = arith.constant 0 : index
    %c0_294 = arith.constant 0 : index
    %380 = vector.load %arg0[%c7_292, %c0_293, %c0_294] : memref<8x8x64xf32, #tpu.memory_space<vmem>>, vector<1x8x64xf32>
    %381 = vector.shape_cast %380 : vector<1x8x64xf32> to vector<8x64xf32>
    %c7_295 = arith.constant 7 : index
    %c6_296 = arith.constant 6 : index
    %382 = memref.load %arg1[%c7_295, %c6_296] : memref<8x24xf32, #tpu.memory_space<smem>>
    %383 = vector.broadcast %382 : f32 to vector<8x64xf32>
    %384 = arith.mulf %381, %383 : vector<8x64xf32>
    %385 = arith.addf %379, %384 : vector<8x64xf32>
    %cst_297 = arith.constant 0.000000e+00 : f32
    %386 = vector.broadcast %cst_297 : f32 to vector<8x64xf32>
    %387 = arith.cmpf oge, %385, %386 : vector<8x64xf32>
    %cst_298 = arith.constant 0.00999999977 : f32
    %388 = vector.broadcast %cst_298 : f32 to vector<8x64xf32>
    %389 = arith.mulf %388, %385 : vector<8x64xf32>
    %390 = arith.select %387, %385, %389 : vector<8x64xi1>, vector<8x64xf32>
    %c0_299 = arith.constant 0 : index
    %c384 = arith.constant 384 : index
    %391 = vector.load %arg10[%c0_299, %c384] : memref<8x1536xf32, #tpu.memory_space<vmem>>, vector<8x64xf32>
    tpu.vector_store %arg10[%c0_299, %c384], %390 {strides = array<i32>} : memref<8x1536xf32, #tpu.memory_space<vmem>>, vector<8x64xf32>,
    %c0_300 = arith.constant 0 : index
    %c0_301 = arith.constant 0 : index
    %c0_302 = arith.constant 0 : index
    %392 = vector.load %arg0[%c0_300, %c0_301, %c0_302] : memref<8x8x64xf32, #tpu.memory_space<vmem>>, vector<1x8x64xf32>
    %393 = vector.shape_cast %392 : vector<1x8x64xf32> to vector<8x64xf32>
    %c0_303 = arith.constant 0 : index
    %c7_304 = arith.constant 7 : index
    %394 = memref.load %arg1[%c0_303, %c7_304] : memref<8x24xf32, #tpu.memory_space<smem>>
    %395 = vector.broadcast %394 : f32 to vector<8x64xf32>
    %396 = arith.mulf %393, %395 : vector<8x64xf32>
    %c7_305 = arith.constant 7 : index
    %397 = memref.load %arg2[%c7_305] : memref<24xf32, #tpu.memory_space<smem>>
    %398 = vector.broadcast %397 : f32 to vector<8x64xf32>
    %399 = arith.addf %396, %398 : vector<8x64xf32>
    %c1_306 = arith.constant 1 : index
    %c0_307 = arith.constant 0 : index
    %c0_308 = arith.constant 0 : index
    %400 = vector.load %arg0[%c1_306, %c0_307, %c0_308] : memref<8x8x64xf32, #tpu.memory_space<vmem>>, vector<1x8x64xf32>
    %401 = vector.shape_cast %400 : vector<1x8x64xf32> to vector<8x64xf32>
    %c1_309 = arith.constant 1 : index
    %c7_310 = arith.constant 7 : index
    %402 = memref.load %arg1[%c1_309, %c7_310] : memref<8x24xf32, #tpu.memory_space<smem>>
    %403 = vector.broadcast %402 : f32 to vector<8x64xf32>
    %404 = arith.mulf %401, %403 : vector<8x64xf32>
    %405 = arith.addf %399, %404 : vector<8x64xf32>
    %c2_311 = arith.constant 2 : index
    %c0_312 = arith.constant 0 : index
    %c0_313 = arith.constant 0 : index
    %406 = vector.load %arg0[%c2_311, %c0_312, %c0_313] : memref<8x8x64xf32, #tpu.memory_space<vmem>>, vector<1x8x64xf32>
    %407 = vector.shape_cast %406 : vector<1x8x64xf32> to vector<8x64xf32>
    %c2_314 = arith.constant 2 : index
    %c7_315 = arith.constant 7 : index
    %408 = memref.load %arg1[%c2_314, %c7_315] : memref<8x24xf32, #tpu.memory_space<smem>>
    %409 = vector.broadcast %408 : f32 to vector<8x64xf32>
    %410 = arith.mulf %407, %409 : vector<8x64xf32>
    %411 = arith.addf %405, %410 : vector<8x64xf32>
    %c3_316 = arith.constant 3 : index
    %c0_317 = arith.constant 0 : index
    %c0_318 = arith.constant 0 : index
    %412 = vector.load %arg0[%c3_316, %c0_317, %c0_318] : memref<8x8x64xf32, #tpu.memory_space<vmem>>, vector<1x8x64xf32>
    %413 = vector.shape_cast %412 : vector<1x8x64xf32> to vector<8x64xf32>
    %c3_319 = arith.constant 3 : index
    %c7_320 = arith.constant 7 : index
    %414 = memref.load %arg1[%c3_319, %c7_320] : memref<8x24xf32, #tpu.memory_space<smem>>
    %415 = vector.broadcast %414 : f32 to vector<8x64xf32>
    %416 = arith.mulf %413, %415 : vector<8x64xf32>
    %417 = arith.addf %411, %416 : vector<8x64xf32>
    %c4_321 = arith.constant 4 : index
    %c0_322 = arith.constant 0 : index
    %c0_323 = arith.constant 0 : index
    %418 = vector.load %arg0[%c4_321, %c0_322, %c0_323] : memref<8x8x64xf32, #tpu.memory_space<vmem>>, vector<1x8x64xf32>
    %419 = vector.shape_cast %418 : vector<1x8x64xf32> to vector<8x64xf32>
    %c4_324 = arith.constant 4 : index
    %c7_325 = arith.constant 7 : index
    %420 = memref.load %arg1[%c4_324, %c7_325] : memref<8x24xf32, #tpu.memory_space<smem>>
    %421 = vector.broadcast %420 : f32 to vector<8x64xf32>
    %422 = arith.mulf %419, %421 : vector<8x64xf32>
    %423 = arith.addf %417, %422 : vector<8x64xf32>
    %c5_326 = arith.constant 5 : index
    %c0_327 = arith.constant 0 : index
    %c0_328 = arith.constant 0 : index
    %424 = vector.load %arg0[%c5_326, %c0_327, %c0_328] : memref<8x8x64xf32, #tpu.memory_space<vmem>>, vector<1x8x64xf32>
    %425 = vector.shape_cast %424 : vector<1x8x64xf32> to vector<8x64xf32>
    %c5_329 = arith.constant 5 : index
    %c7_330 = arith.constant 7 : index
    %426 = memref.load %arg1[%c5_329, %c7_330] : memref<8x24xf32, #tpu.memory_space<smem>>
    %427 = vector.broadcast %426 : f32 to vector<8x64xf32>
    %428 = arith.mulf %425, %427 : vector<8x64xf32>
    %429 = arith.addf %423, %428 : vector<8x64xf32>
    %c6_331 = arith.constant 6 : index
    %c0_332 = arith.constant 0 : index
    %c0_333 = arith.constant 0 : index
    %430 = vector.load %arg0[%c6_331, %c0_332, %c0_333] : memref<8x8x64xf32, #tpu.memory_space<vmem>>, vector<1x8x64xf32>
    %431 = vector.shape_cast %430 : vector<1x8x64xf32> to vector<8x64xf32>
    %c6_334 = arith.constant 6 : index
    %c7_335 = arith.constant 7 : index
    %432 = memref.load %arg1[%c6_334, %c7_335] : memref<8x24xf32, #tpu.memory_space<smem>>
    %433 = vector.broadcast %432 : f32 to vector<8x64xf32>
    %434 = arith.mulf %431, %433 : vector<8x64xf32>
    %435 = arith.addf %429, %434 : vector<8x64xf32>
    %c7_336 = arith.constant 7 : index
    %c0_337 = arith.constant 0 : index
    %c0_338 = arith.constant 0 : index
    %436 = vector.load %arg0[%c7_336, %c0_337, %c0_338] : memref<8x8x64xf32, #tpu.memory_space<vmem>>, vector<1x8x64xf32>
    %437 = vector.shape_cast %436 : vector<1x8x64xf32> to vector<8x64xf32>
    %c7_339 = arith.constant 7 : index
    %c7_340 = arith.constant 7 : index
    %438 = memref.load %arg1[%c7_339, %c7_340] : memref<8x24xf32, #tpu.memory_space<smem>>
    %439 = vector.broadcast %438 : f32 to vector<8x64xf32>
    %440 = arith.mulf %437, %439 : vector<8x64xf32>
    %441 = arith.addf %435, %440 : vector<8x64xf32>
    %cst_341 = arith.constant 0.000000e+00 : f32
    %442 = vector.broadcast %cst_341 : f32 to vector<8x64xf32>
    %443 = arith.cmpf oge, %441, %442 : vector<8x64xf32>
    %cst_342 = arith.constant 0.00999999977 : f32
    %444 = vector.broadcast %cst_342 : f32 to vector<8x64xf32>
    %445 = arith.mulf %444, %441 : vector<8x64xf32>
    %446 = arith.select %443, %441, %445 : vector<8x64xi1>, vector<8x64xf32>
    %c0_343 = arith.constant 0 : index
    %c448 = arith.constant 448 : index
    %447 = vector.load %arg10[%c0_343, %c448] : memref<8x1536xf32, #tpu.memory_space<vmem>>, vector<8x64xf32>
    tpu.vector_store %arg10[%c0_343, %c448], %446 {strides = array<i32>} : memref<8x1536xf32, #tpu.memory_space<vmem>>, vector<8x64xf32>,
    %c0_344 = arith.constant 0 : index
    %c0_345 = arith.constant 0 : index
    %c0_346 = arith.constant 0 : index
    %448 = vector.load %arg0[%c0_344, %c0_345, %c0_346] : memref<8x8x64xf32, #tpu.memory_space<vmem>>, vector<1x8x64xf32>
    %449 = vector.shape_cast %448 : vector<1x8x64xf32> to vector<8x64xf32>
    %c0_347 = arith.constant 0 : index
    %c8 = arith.constant 8 : index
    %450 = memref.load %arg1[%c0_347, %c8] : memref<8x24xf32, #tpu.memory_space<smem>>
    %451 = vector.broadcast %450 : f32 to vector<8x64xf32>
    %452 = arith.mulf %449, %451 : vector<8x64xf32>
    %c8_348 = arith.constant 8 : index
    %453 = memref.load %arg2[%c8_348] : memref<24xf32, #tpu.memory_space<smem>>
    %454 = vector.broadcast %453 : f32 to vector<8x64xf32>
    %455 = arith.addf %452, %454 : vector<8x64xf32>
    %c1_349 = arith.constant 1 : index
    %c0_350 = arith.constant 0 : index
    %c0_351 = arith.constant 0 : index
    %456 = vector.load %arg0[%c1_349, %c0_350, %c0_351] : memref<8x8x64xf32, #tpu.memory_space<vmem>>, vector<1x8x64xf32>
    %457 = vector.shape_cast %456 : vector<1x8x64xf32> to vector<8x64xf32>
    %c1_352 = arith.constant 1 : index
    %c8_353 = arith.constant 8 : index
    %458 = memref.load %arg1[%c1_352, %c8_353] : memref<8x24xf32, #tpu.memory_space<smem>>
    %459 = vector.broadcast %458 : f32 to vector<8x64xf32>
    %460 = arith.mulf %457, %459 : vector<8x64xf32>
    %461 = arith.addf %455, %460 : vector<8x64xf32>
    %c2_354 = arith.constant 2 : index
    %c0_355 = arith.constant 0 : index
    %c0_356 = arith.constant 0 : index
    %462 = vector.load %arg0[%c2_354, %c0_355, %c0_356] : memref<8x8x64xf32, #tpu.memory_space<vmem>>, vector<1x8x64xf32>
    %463 = vector.shape_cast %462 : vector<1x8x64xf32> to vector<8x64xf32>
    %c2_357 = arith.constant 2 : index
    %c8_358 = arith.constant 8 : index
    %464 = memref.load %arg1[%c2_357, %c8_358] : memref<8x24xf32, #tpu.memory_space<smem>>
    %465 = vector.broadcast %464 : f32 to vector<8x64xf32>
    %466 = arith.mulf %463, %465 : vector<8x64xf32>
    %467 = arith.addf %461, %466 : vector<8x64xf32>
    %c3_359 = arith.constant 3 : index
    %c0_360 = arith.constant 0 : index
    %c0_361 = arith.constant 0 : index
    %468 = vector.load %arg0[%c3_359, %c0_360, %c0_361] : memref<8x8x64xf32, #tpu.memory_space<vmem>>, vector<1x8x64xf32>
    %469 = vector.shape_cast %468 : vector<1x8x64xf32> to vector<8x64xf32>
    %c3_362 = arith.constant 3 : index
    %c8_363 = arith.constant 8 : index
    %470 = memref.load %arg1[%c3_362, %c8_363] : memref<8x24xf32, #tpu.memory_space<smem>>
    %471 = vector.broadcast %470 : f32 to vector<8x64xf32>
    %472 = arith.mulf %469, %471 : vector<8x64xf32>
    %473 = arith.addf %467, %472 : vector<8x64xf32>
    %c4_364 = arith.constant 4 : index
    %c0_365 = arith.constant 0 : index
    %c0_366 = arith.constant 0 : index
    %474 = vector.load %arg0[%c4_364, %c0_365, %c0_366] : memref<8x8x64xf32, #tpu.memory_space<vmem>>, vector<1x8x64xf32>
    %475 = vector.shape_cast %474 : vector<1x8x64xf32> to vector<8x64xf32>
    %c4_367 = arith.constant 4 : index
    %c8_368 = arith.constant 8 : index
    %476 = memref.load %arg1[%c4_367, %c8_368] : memref<8x24xf32, #tpu.memory_space<smem>>
    %477 = vector.broadcast %476 : f32 to vector<8x64xf32>
    %478 = arith.mulf %475, %477 : vector<8x64xf32>
    %479 = arith.addf %473, %478 : vector<8x64xf32>
    %c5_369 = arith.constant 5 : index
    %c0_370 = arith.constant 0 : index
    %c0_371 = arith.constant 0 : index
    %480 = vector.load %arg0[%c5_369, %c0_370, %c0_371] : memref<8x8x64xf32, #tpu.memory_space<vmem>>, vector<1x8x64xf32>
    %481 = vector.shape_cast %480 : vector<1x8x64xf32> to vector<8x64xf32>
    %c5_372 = arith.constant 5 : index
    %c8_373 = arith.constant 8 : index
    %482 = memref.load %arg1[%c5_372, %c8_373] : memref<8x24xf32, #tpu.memory_space<smem>>
    %483 = vector.broadcast %482 : f32 to vector<8x64xf32>
    %484 = arith.mulf %481, %483 : vector<8x64xf32>
    %485 = arith.addf %479, %484 : vector<8x64xf32>
    %c6_374 = arith.constant 6 : index
    %c0_375 = arith.constant 0 : index
    %c0_376 = arith.constant 0 : index
    %486 = vector.load %arg0[%c6_374, %c0_375, %c0_376] : memref<8x8x64xf32, #tpu.memory_space<vmem>>, vector<1x8x64xf32>
    %487 = vector.shape_cast %486 : vector<1x8x64xf32> to vector<8x64xf32>
    %c6_377 = arith.constant 6 : index
    %c8_378 = arith.constant 8 : index
    %488 = memref.load %arg1[%c6_377, %c8_378] : memref<8x24xf32, #tpu.memory_space<smem>>
    %489 = vector.broadcast %488 : f32 to vector<8x64xf32>
    %490 = arith.mulf %487, %489 : vector<8x64xf32>
    %491 = arith.addf %485, %490 : vector<8x64xf32>
    %c7_379 = arith.constant 7 : index
    %c0_380 = arith.constant 0 : index
    %c0_381 = arith.constant 0 : index
    %492 = vector.load %arg0[%c7_379, %c0_380, %c0_381] : memref<8x8x64xf32, #tpu.memory_space<vmem>>, vector<1x8x64xf32>
    %493 = vector.shape_cast %492 : vector<1x8x64xf32> to vector<8x64xf32>
    %c7_382 = arith.constant 7 : index
    %c8_383 = arith.constant 8 : index
    %494 = memref.load %arg1[%c7_382, %c8_383] : memref<8x24xf32, #tpu.memory_space<smem>>
    %495 = vector.broadcast %494 : f32 to vector<8x64xf32>
    %496 = arith.mulf %493, %495 : vector<8x64xf32>
    %497 = arith.addf %491, %496 : vector<8x64xf32>
    %cst_384 = arith.constant 0.000000e+00 : f32
    %498 = vector.broadcast %cst_384 : f32 to vector<8x64xf32>
    %499 = arith.cmpf oge, %497, %498 : vector<8x64xf32>
    %cst_385 = arith.constant 0.00999999977 : f32
    %500 = vector.broadcast %cst_385 : f32 to vector<8x64xf32>
    %501 = arith.mulf %500, %497 : vector<8x64xf32>
    %502 = arith.select %499, %497, %501 : vector<8x64xi1>, vector<8x64xf32>
    %c0_386 = arith.constant 0 : index
    %c512 = arith.constant 512 : index
    %503 = vector.load %arg10[%c0_386, %c512] : memref<8x1536xf32, #tpu.memory_space<vmem>>, vector<8x64xf32>
    tpu.vector_store %arg10[%c0_386, %c512], %502 {strides = array<i32>} : memref<8x1536xf32, #tpu.memory_space<vmem>>, vector<8x64xf32>,
    %c0_387 = arith.constant 0 : index
    %c0_388 = arith.constant 0 : index
    %c0_389 = arith.constant 0 : index
    %504 = vector.load %arg0[%c0_387, %c0_388, %c0_389] : memref<8x8x64xf32, #tpu.memory_space<vmem>>, vector<1x8x64xf32>
    %505 = vector.shape_cast %504 : vector<1x8x64xf32> to vector<8x64xf32>
    %c0_390 = arith.constant 0 : index
    %c9 = arith.constant 9 : index
    %506 = memref.load %arg1[%c0_390, %c9] : memref<8x24xf32, #tpu.memory_space<smem>>
    %507 = vector.broadcast %506 : f32 to vector<8x64xf32>
    %508 = arith.mulf %505, %507 : vector<8x64xf32>
    %c9_391 = arith.constant 9 : index
    %509 = memref.load %arg2[%c9_391] : memref<24xf32, #tpu.memory_space<smem>>
    %510 = vector.broadcast %509 : f32 to vector<8x64xf32>
    %511 = arith.addf %508, %510 : vector<8x64xf32>
    %c1_392 = arith.constant 1 : index
    %c0_393 = arith.constant 0 : index
    %c0_394 = arith.constant 0 : index
    %512 = vector.load %arg0[%c1_392, %c0_393, %c0_394] : memref<8x8x64xf32, #tpu.memory_space<vmem>>, vector<1x8x64xf32>
    %513 = vector.shape_cast %512 : vector<1x8x64xf32> to vector<8x64xf32>
    %c1_395 = arith.constant 1 : index
    %c9_396 = arith.constant 9 : index
    %514 = memref.load %arg1[%c1_395, %c9_396] : memref<8x24xf32, #tpu.memory_space<smem>>
    %515 = vector.broadcast %514 : f32 to vector<8x64xf32>
    %516 = arith.mulf %513, %515 : vector<8x64xf32>
    %517 = arith.addf %511, %516 : vector<8x64xf32>
    %c2_397 = arith.constant 2 : index
    %c0_398 = arith.constant 0 : index
    %c0_399 = arith.constant 0 : index
    %518 = vector.load %arg0[%c2_397, %c0_398, %c0_399] : memref<8x8x64xf32, #tpu.memory_space<vmem>>, vector<1x8x64xf32>
    %519 = vector.shape_cast %518 : vector<1x8x64xf32> to vector<8x64xf32>
    %c2_400 = arith.constant 2 : index
    %c9_401 = arith.constant 9 : index
    %520 = memref.load %arg1[%c2_400, %c9_401] : memref<8x24xf32, #tpu.memory_space<smem>>
    %521 = vector.broadcast %520 : f32 to vector<8x64xf32>
    %522 = arith.mulf %519, %521 : vector<8x64xf32>
    %523 = arith.addf %517, %522 : vector<8x64xf32>
    %c3_402 = arith.constant 3 : index
    %c0_403 = arith.constant 0 : index
    %c0_404 = arith.constant 0 : index
    %524 = vector.load %arg0[%c3_402, %c0_403, %c0_404] : memref<8x8x64xf32, #tpu.memory_space<vmem>>, vector<1x8x64xf32>
    %525 = vector.shape_cast %524 : vector<1x8x64xf32> to vector<8x64xf32>
    %c3_405 = arith.constant 3 : index
    %c9_406 = arith.constant 9 : index
    %526 = memref.load %arg1[%c3_405, %c9_406] : memref<8x24xf32, #tpu.memory_space<smem>>
    %527 = vector.broadcast %526 : f32 to vector<8x64xf32>
    %528 = arith.mulf %525, %527 : vector<8x64xf32>
    %529 = arith.addf %523, %528 : vector<8x64xf32>
    %c4_407 = arith.constant 4 : index
    %c0_408 = arith.constant 0 : index
    %c0_409 = arith.constant 0 : index
    %530 = vector.load %arg0[%c4_407, %c0_408, %c0_409] : memref<8x8x64xf32, #tpu.memory_space<vmem>>, vector<1x8x64xf32>
    %531 = vector.shape_cast %530 : vector<1x8x64xf32> to vector<8x64xf32>
    %c4_410 = arith.constant 4 : index
    %c9_411 = arith.constant 9 : index
    %532 = memref.load %arg1[%c4_410, %c9_411] : memref<8x24xf32, #tpu.memory_space<smem>>
    %533 = vector.broadcast %532 : f32 to vector<8x64xf32>
    %534 = arith.mulf %531, %533 : vector<8x64xf32>
    %535 = arith.addf %529, %534 : vector<8x64xf32>
    %c5_412 = arith.constant 5 : index
    %c0_413 = arith.constant 0 : index
    %c0_414 = arith.constant 0 : index
    %536 = vector.load %arg0[%c5_412, %c0_413, %c0_414] : memref<8x8x64xf32, #tpu.memory_space<vmem>>, vector<1x8x64xf32>
    %537 = vector.shape_cast %536 : vector<1x8x64xf32> to vector<8x64xf32>
    %c5_415 = arith.constant 5 : index
    %c9_416 = arith.constant 9 : index
    %538 = memref.load %arg1[%c5_415, %c9_416] : memref<8x24xf32, #tpu.memory_space<smem>>
    %539 = vector.broadcast %538 : f32 to vector<8x64xf32>
    %540 = arith.mulf %537, %539 : vector<8x64xf32>
    %541 = arith.addf %535, %540 : vector<8x64xf32>
    %c6_417 = arith.constant 6 : index
    %c0_418 = arith.constant 0 : index
    %c0_419 = arith.constant 0 : index
    %542 = vector.load %arg0[%c6_417, %c0_418, %c0_419] : memref<8x8x64xf32, #tpu.memory_space<vmem>>, vector<1x8x64xf32>
    %543 = vector.shape_cast %542 : vector<1x8x64xf32> to vector<8x64xf32>
    %c6_420 = arith.constant 6 : index
    %c9_421 = arith.constant 9 : index
    %544 = memref.load %arg1[%c6_420, %c9_421] : memref<8x24xf32, #tpu.memory_space<smem>>
    %545 = vector.broadcast %544 : f32 to vector<8x64xf32>
    %546 = arith.mulf %543, %545 : vector<8x64xf32>
    %547 = arith.addf %541, %546 : vector<8x64xf32>
    %c7_422 = arith.constant 7 : index
    %c0_423 = arith.constant 0 : index
    %c0_424 = arith.constant 0 : index
    %548 = vector.load %arg0[%c7_422, %c0_423, %c0_424] : memref<8x8x64xf32, #tpu.memory_space<vmem>>, vector<1x8x64xf32>
    %549 = vector.shape_cast %548 : vector<1x8x64xf32> to vector<8x64xf32>
    %c7_425 = arith.constant 7 : index
    %c9_426 = arith.constant 9 : index
    %550 = memref.load %arg1[%c7_425, %c9_426] : memref<8x24xf32, #tpu.memory_space<smem>>
    %551 = vector.broadcast %550 : f32 to vector<8x64xf32>
    %552 = arith.mulf %549, %551 : vector<8x64xf32>
    %553 = arith.addf %547, %552 : vector<8x64xf32>
    %cst_427 = arith.constant 0.000000e+00 : f32
    %554 = vector.broadcast %cst_427 : f32 to vector<8x64xf32>
    %555 = arith.cmpf oge, %553, %554 : vector<8x64xf32>
    %cst_428 = arith.constant 0.00999999977 : f32
    %556 = vector.broadcast %cst_428 : f32 to vector<8x64xf32>
    %557 = arith.mulf %556, %553 : vector<8x64xf32>
    %558 = arith.select %555, %553, %557 : vector<8x64xi1>, vector<8x64xf32>
    %c0_429 = arith.constant 0 : index
    %c576 = arith.constant 576 : index
    %559 = vector.load %arg10[%c0_429, %c576] : memref<8x1536xf32, #tpu.memory_space<vmem>>, vector<8x64xf32>
    tpu.vector_store %arg10[%c0_429, %c576], %558 {strides = array<i32>} : memref<8x1536xf32, #tpu.memory_space<vmem>>, vector<8x64xf32>,
    %c0_430 = arith.constant 0 : index
    %c0_431 = arith.constant 0 : index
    %c0_432 = arith.constant 0 : index
    %560 = vector.load %arg0[%c0_430, %c0_431, %c0_432] : memref<8x8x64xf32, #tpu.memory_space<vmem>>, vector<1x8x64xf32>
    %561 = vector.shape_cast %560 : vector<1x8x64xf32> to vector<8x64xf32>
    %c0_433 = arith.constant 0 : index
    %c10 = arith.constant 10 : index
    %562 = memref.load %arg1[%c0_433, %c10] : memref<8x24xf32, #tpu.memory_space<smem>>
    %563 = vector.broadcast %562 : f32 to vector<8x64xf32>
    %564 = arith.mulf %561, %563 : vector<8x64xf32>
    %c10_434 = arith.constant 10 : index
    %565 = memref.load %arg2[%c10_434] : memref<24xf32, #tpu.memory_space<smem>>
    %566 = vector.broadcast %565 : f32 to vector<8x64xf32>
    %567 = arith.addf %564, %566 : vector<8x64xf32>
    %c1_435 = arith.constant 1 : index
    %c0_436 = arith.constant 0 : index
    %c0_437 = arith.constant 0 : index
    %568 = vector.load %arg0[%c1_435, %c0_436, %c0_437] : memref<8x8x64xf32, #tpu.memory_space<vmem>>, vector<1x8x64xf32>
    %569 = vector.shape_cast %568 : vector<1x8x64xf32> to vector<8x64xf32>
    %c1_438 = arith.constant 1 : index
    %c10_439 = arith.constant 10 : index
    %570 = memref.load %arg1[%c1_438, %c10_439] : memref<8x24xf32, #tpu.memory_space<smem>>
    %571 = vector.broadcast %570 : f32 to vector<8x64xf32>
    %572 = arith.mulf %569, %571 : vector<8x64xf32>
    %573 = arith.addf %567, %572 : vector<8x64xf32>
    %c2_440 = arith.constant 2 : index
    %c0_441 = arith.constant 0 : index
    %c0_442 = arith.constant 0 : index
    %574 = vector.load %arg0[%c2_440, %c0_441, %c0_442] : memref<8x8x64xf32, #tpu.memory_space<vmem>>, vector<1x8x64xf32>
    %575 = vector.shape_cast %574 : vector<1x8x64xf32> to vector<8x64xf32>
    %c2_443 = arith.constant 2 : index
    %c10_444 = arith.constant 10 : index
    %576 = memref.load %arg1[%c2_443, %c10_444] : memref<8x24xf32, #tpu.memory_space<smem>>
    %577 = vector.broadcast %576 : f32 to vector<8x64xf32>
    %578 = arith.mulf %575, %577 : vector<8x64xf32>
    %579 = arith.addf %573, %578 : vector<8x64xf32>
    %c3_445 = arith.constant 3 : index
    %c0_446 = arith.constant 0 : index
    %c0_447 = arith.constant 0 : index
    %580 = vector.load %arg0[%c3_445, %c0_446, %c0_447] : memref<8x8x64xf32, #tpu.memory_space<vmem>>, vector<1x8x64xf32>
    %581 = vector.shape_cast %580 : vector<1x8x64xf32> to vector<8x64xf32>
    %c3_448 = arith.constant 3 : index
    %c10_449 = arith.constant 10 : index
    %582 = memref.load %arg1[%c3_448, %c10_449] : memref<8x24xf32, #tpu.memory_space<smem>>
    %583 = vector.broadcast %582 : f32 to vector<8x64xf32>
    %584 = arith.mulf %581, %583 : vector<8x64xf32>
    %585 = arith.addf %579, %584 : vector<8x64xf32>
    %c4_450 = arith.constant 4 : index
    %c0_451 = arith.constant 0 : index
    %c0_452 = arith.constant 0 : index
    %586 = vector.load %arg0[%c4_450, %c0_451, %c0_452] : memref<8x8x64xf32, #tpu.memory_space<vmem>>, vector<1x8x64xf32>
    %587 = vector.shape_cast %586 : vector<1x8x64xf32> to vector<8x64xf32>
    %c4_453 = arith.constant 4 : index
    %c10_454 = arith.constant 10 : index
    %588 = memref.load %arg1[%c4_453, %c10_454] : memref<8x24xf32, #tpu.memory_space<smem>>
    %589 = vector.broadcast %588 : f32 to vector<8x64xf32>
    %590 = arith.mulf %587, %589 : vector<8x64xf32>
    %591 = arith.addf %585, %590 : vector<8x64xf32>
    %c5_455 = arith.constant 5 : index
    %c0_456 = arith.constant 0 : index
    %c0_457 = arith.constant 0 : index
    %592 = vector.load %arg0[%c5_455, %c0_456, %c0_457] : memref<8x8x64xf32, #tpu.memory_space<vmem>>, vector<1x8x64xf32>
    %593 = vector.shape_cast %592 : vector<1x8x64xf32> to vector<8x64xf32>
    %c5_458 = arith.constant 5 : index
    %c10_459 = arith.constant 10 : index
    %594 = memref.load %arg1[%c5_458, %c10_459] : memref<8x24xf32, #tpu.memory_space<smem>>
    %595 = vector.broadcast %594 : f32 to vector<8x64xf32>
    %596 = arith.mulf %593, %595 : vector<8x64xf32>
    %597 = arith.addf %591, %596 : vector<8x64xf32>
    %c6_460 = arith.constant 6 : index
    %c0_461 = arith.constant 0 : index
    %c0_462 = arith.constant 0 : index
    %598 = vector.load %arg0[%c6_460, %c0_461, %c0_462] : memref<8x8x64xf32, #tpu.memory_space<vmem>>, vector<1x8x64xf32>
    %599 = vector.shape_cast %598 : vector<1x8x64xf32> to vector<8x64xf32>
    %c6_463 = arith.constant 6 : index
    %c10_464 = arith.constant 10 : index
    %600 = memref.load %arg1[%c6_463, %c10_464] : memref<8x24xf32, #tpu.memory_space<smem>>
    %601 = vector.broadcast %600 : f32 to vector<8x64xf32>
    %602 = arith.mulf %599, %601 : vector<8x64xf32>
    %603 = arith.addf %597, %602 : vector<8x64xf32>
    %c7_465 = arith.constant 7 : index
    %c0_466 = arith.constant 0 : index
    %c0_467 = arith.constant 0 : index
    %604 = vector.load %arg0[%c7_465, %c0_466, %c0_467] : memref<8x8x64xf32, #tpu.memory_space<vmem>>, vector<1x8x64xf32>
    %605 = vector.shape_cast %604 : vector<1x8x64xf32> to vector<8x64xf32>
    %c7_468 = arith.constant 7 : index
    %c10_469 = arith.constant 10 : index
    %606 = memref.load %arg1[%c7_468, %c10_469] : memref<8x24xf32, #tpu.memory_space<smem>>
    %607 = vector.broadcast %606 : f32 to vector<8x64xf32>
    %608 = arith.mulf %605, %607 : vector<8x64xf32>
    %609 = arith.addf %603, %608 : vector<8x64xf32>
    %cst_470 = arith.constant 0.000000e+00 : f32
    %610 = vector.broadcast %cst_470 : f32 to vector<8x64xf32>
    %611 = arith.cmpf oge, %609, %610 : vector<8x64xf32>
    %cst_471 = arith.constant 0.00999999977 : f32
    %612 = vector.broadcast %cst_471 : f32 to vector<8x64xf32>
    %613 = arith.mulf %612, %609 : vector<8x64xf32>
    %614 = arith.select %611, %609, %613 : vector<8x64xi1>, vector<8x64xf32>
    %c0_472 = arith.constant 0 : index
    %c640 = arith.constant 640 : index
    %615 = vector.load %arg10[%c0_472, %c640] : memref<8x1536xf32, #tpu.memory_space<vmem>>, vector<8x64xf32>
    tpu.vector_store %arg10[%c0_472, %c640], %614 {strides = array<i32>} : memref<8x1536xf32, #tpu.memory_space<vmem>>, vector<8x64xf32>,
    %c0_473 = arith.constant 0 : index
    %c0_474 = arith.constant 0 : index
    %c0_475 = arith.constant 0 : index
    %616 = vector.load %arg0[%c0_473, %c0_474, %c0_475] : memref<8x8x64xf32, #tpu.memory_space<vmem>>, vector<1x8x64xf32>
    %617 = vector.shape_cast %616 : vector<1x8x64xf32> to vector<8x64xf32>
    %c0_476 = arith.constant 0 : index
    %c11 = arith.constant 11 : index
    %618 = memref.load %arg1[%c0_476, %c11] : memref<8x24xf32, #tpu.memory_space<smem>>
    %619 = vector.broadcast %618 : f32 to vector<8x64xf32>
    %620 = arith.mulf %617, %619 : vector<8x64xf32>
    %c11_477 = arith.constant 11 : index
    %621 = memref.load %arg2[%c11_477] : memref<24xf32, #tpu.memory_space<smem>>
    %622 = vector.broadcast %621 : f32 to vector<8x64xf32>
    %623 = arith.addf %620, %622 : vector<8x64xf32>
    %c1_478 = arith.constant 1 : index
    %c0_479 = arith.constant 0 : index
    %c0_480 = arith.constant 0 : index
    %624 = vector.load %arg0[%c1_478, %c0_479, %c0_480] : memref<8x8x64xf32, #tpu.memory_space<vmem>>, vector<1x8x64xf32>
    %625 = vector.shape_cast %624 : vector<1x8x64xf32> to vector<8x64xf32>
    %c1_481 = arith.constant 1 : index
    %c11_482 = arith.constant 11 : index
    %626 = memref.load %arg1[%c1_481, %c11_482] : memref<8x24xf32, #tpu.memory_space<smem>>
    %627 = vector.broadcast %626 : f32 to vector<8x64xf32>
    %628 = arith.mulf %625, %627 : vector<8x64xf32>
    %629 = arith.addf %623, %628 : vector<8x64xf32>
    %c2_483 = arith.constant 2 : index
    %c0_484 = arith.constant 0 : index
    %c0_485 = arith.constant 0 : index
    %630 = vector.load %arg0[%c2_483, %c0_484, %c0_485] : memref<8x8x64xf32, #tpu.memory_space<vmem>>, vector<1x8x64xf32>
    %631 = vector.shape_cast %630 : vector<1x8x64xf32> to vector<8x64xf32>
    %c2_486 = arith.constant 2 : index
    %c11_487 = arith.constant 11 : index
    %632 = memref.load %arg1[%c2_486, %c11_487] : memref<8x24xf32, #tpu.memory_space<smem>>
    %633 = vector.broadcast %632 : f32 to vector<8x64xf32>
    %634 = arith.mulf %631, %633 : vector<8x64xf32>
    %635 = arith.addf %629, %634 : vector<8x64xf32>
    %c3_488 = arith.constant 3 : index
    %c0_489 = arith.constant 0 : index
    %c0_490 = arith.constant 0 : index
    %636 = vector.load %arg0[%c3_488, %c0_489, %c0_490] : memref<8x8x64xf32, #tpu.memory_space<vmem>>, vector<1x8x64xf32>
    %637 = vector.shape_cast %636 : vector<1x8x64xf32> to vector<8x64xf32>
    %c3_491 = arith.constant 3 : index
    %c11_492 = arith.constant 11 : index
    %638 = memref.load %arg1[%c3_491, %c11_492] : memref<8x24xf32, #tpu.memory_space<smem>>
    %639 = vector.broadcast %638 : f32 to vector<8x64xf32>
    %640 = arith.mulf %637, %639 : vector<8x64xf32>
    %641 = arith.addf %635, %640 : vector<8x64xf32>
    %c4_493 = arith.constant 4 : index
    %c0_494 = arith.constant 0 : index
    %c0_495 = arith.constant 0 : index
    %642 = vector.load %arg0[%c4_493, %c0_494, %c0_495] : memref<8x8x64xf32, #tpu.memory_space<vmem>>, vector<1x8x64xf32>
    %643 = vector.shape_cast %642 : vector<1x8x64xf32> to vector<8x64xf32>
    %c4_496 = arith.constant 4 : index
    %c11_497 = arith.constant 11 : index
    %644 = memref.load %arg1[%c4_496, %c11_497] : memref<8x24xf32, #tpu.memory_space<smem>>
    %645 = vector.broadcast %644 : f32 to vector<8x64xf32>
    %646 = arith.mulf %643, %645 : vector<8x64xf32>
    %647 = arith.addf %641, %646 : vector<8x64xf32>
    %c5_498 = arith.constant 5 : index
    %c0_499 = arith.constant 0 : index
    %c0_500 = arith.constant 0 : index
    %648 = vector.load %arg0[%c5_498, %c0_499, %c0_500] : memref<8x8x64xf32, #tpu.memory_space<vmem>>, vector<1x8x64xf32>
    %649 = vector.shape_cast %648 : vector<1x8x64xf32> to vector<8x64xf32>
    %c5_501 = arith.constant 5 : index
    %c11_502 = arith.constant 11 : index
    %650 = memref.load %arg1[%c5_501, %c11_502] : memref<8x24xf32, #tpu.memory_space<smem>>
    %651 = vector.broadcast %650 : f32 to vector<8x64xf32>
    %652 = arith.mulf %649, %651 : vector<8x64xf32>
    %653 = arith.addf %647, %652 : vector<8x64xf32>
    %c6_503 = arith.constant 6 : index
    %c0_504 = arith.constant 0 : index
    %c0_505 = arith.constant 0 : index
    %654 = vector.load %arg0[%c6_503, %c0_504, %c0_505] : memref<8x8x64xf32, #tpu.memory_space<vmem>>, vector<1x8x64xf32>
    %655 = vector.shape_cast %654 : vector<1x8x64xf32> to vector<8x64xf32>
    %c6_506 = arith.constant 6 : index
    %c11_507 = arith.constant 11 : index
    %656 = memref.load %arg1[%c6_506, %c11_507] : memref<8x24xf32, #tpu.memory_space<smem>>
    %657 = vector.broadcast %656 : f32 to vector<8x64xf32>
    %658 = arith.mulf %655, %657 : vector<8x64xf32>
    %659 = arith.addf %653, %658 : vector<8x64xf32>
    %c7_508 = arith.constant 7 : index
    %c0_509 = arith.constant 0 : index
    %c0_510 = arith.constant 0 : index
    %660 = vector.load %arg0[%c7_508, %c0_509, %c0_510] : memref<8x8x64xf32, #tpu.memory_space<vmem>>, vector<1x8x64xf32>
    %661 = vector.shape_cast %660 : vector<1x8x64xf32> to vector<8x64xf32>
    %c7_511 = arith.constant 7 : index
    %c11_512 = arith.constant 11 : index
    %662 = memref.load %arg1[%c7_511, %c11_512] : memref<8x24xf32, #tpu.memory_space<smem>>
    %663 = vector.broadcast %662 : f32 to vector<8x64xf32>
    %664 = arith.mulf %661, %663 : vector<8x64xf32>
    %665 = arith.addf %659, %664 : vector<8x64xf32>
    %cst_513 = arith.constant 0.000000e+00 : f32
    %666 = vector.broadcast %cst_513 : f32 to vector<8x64xf32>
    %667 = arith.cmpf oge, %665, %666 : vector<8x64xf32>
    %cst_514 = arith.constant 0.00999999977 : f32
    %668 = vector.broadcast %cst_514 : f32 to vector<8x64xf32>
    %669 = arith.mulf %668, %665 : vector<8x64xf32>
    %670 = arith.select %667, %665, %669 : vector<8x64xi1>, vector<8x64xf32>
    %c0_515 = arith.constant 0 : index
    %c704 = arith.constant 704 : index
    %671 = vector.load %arg10[%c0_515, %c704] : memref<8x1536xf32, #tpu.memory_space<vmem>>, vector<8x64xf32>
    tpu.vector_store %arg10[%c0_515, %c704], %670 {strides = array<i32>} : memref<8x1536xf32, #tpu.memory_space<vmem>>, vector<8x64xf32>,
    %c0_516 = arith.constant 0 : index
    %c0_517 = arith.constant 0 : index
    %c0_518 = arith.constant 0 : index
    %672 = vector.load %arg0[%c0_516, %c0_517, %c0_518] : memref<8x8x64xf32, #tpu.memory_space<vmem>>, vector<1x8x64xf32>
    %673 = vector.shape_cast %672 : vector<1x8x64xf32> to vector<8x64xf32>
    %c0_519 = arith.constant 0 : index
    %c12 = arith.constant 12 : index
    %674 = memref.load %arg1[%c0_519, %c12] : memref<8x24xf32, #tpu.memory_space<smem>>
    %675 = vector.broadcast %674 : f32 to vector<8x64xf32>
    %676 = arith.mulf %673, %675 : vector<8x64xf32>
    %c12_520 = arith.constant 12 : index
    %677 = memref.load %arg2[%c12_520] : memref<24xf32, #tpu.memory_space<smem>>
    %678 = vector.broadcast %677 : f32 to vector<8x64xf32>
    %679 = arith.addf %676, %678 : vector<8x64xf32>
    %c1_521 = arith.constant 1 : index
    %c0_522 = arith.constant 0 : index
    %c0_523 = arith.constant 0 : index
    %680 = vector.load %arg0[%c1_521, %c0_522, %c0_523] : memref<8x8x64xf32, #tpu.memory_space<vmem>>, vector<1x8x64xf32>
    %681 = vector.shape_cast %680 : vector<1x8x64xf32> to vector<8x64xf32>
    %c1_524 = arith.constant 1 : index
    %c12_525 = arith.constant 12 : index
    %682 = memref.load %arg1[%c1_524, %c12_525] : memref<8x24xf32, #tpu.memory_space<smem>>
    %683 = vector.broadcast %682 : f32 to vector<8x64xf32>
    %684 = arith.mulf %681, %683 : vector<8x64xf32>
    %685 = arith.addf %679, %684 : vector<8x64xf32>
    %c2_526 = arith.constant 2 : index
    %c0_527 = arith.constant 0 : index
    %c0_528 = arith.constant 0 : index
    %686 = vector.load %arg0[%c2_526, %c0_527, %c0_528] : memref<8x8x64xf32, #tpu.memory_space<vmem>>, vector<1x8x64xf32>
    %687 = vector.shape_cast %686 : vector<1x8x64xf32> to vector<8x64xf32>
    %c2_529 = arith.constant 2 : index
    %c12_530 = arith.constant 12 : index
    %688 = memref.load %arg1[%c2_529, %c12_530] : memref<8x24xf32, #tpu.memory_space<smem>>
    %689 = vector.broadcast %688 : f32 to vector<8x64xf32>
    %690 = arith.mulf %687, %689 : vector<8x64xf32>
    %691 = arith.addf %685, %690 : vector<8x64xf32>
    %c3_531 = arith.constant 3 : index
    %c0_532 = arith.constant 0 : index
    %c0_533 = arith.constant 0 : index
    %692 = vector.load %arg0[%c3_531, %c0_532, %c0_533] : memref<8x8x64xf32, #tpu.memory_space<vmem>>, vector<1x8x64xf32>
    %693 = vector.shape_cast %692 : vector<1x8x64xf32> to vector<8x64xf32>
    %c3_534 = arith.constant 3 : index
    %c12_535 = arith.constant 12 : index
    %694 = memref.load %arg1[%c3_534, %c12_535] : memref<8x24xf32, #tpu.memory_space<smem>>
    %695 = vector.broadcast %694 : f32 to vector<8x64xf32>
    %696 = arith.mulf %693, %695 : vector<8x64xf32>
    %697 = arith.addf %691, %696 : vector<8x64xf32>
    %c4_536 = arith.constant 4 : index
    %c0_537 = arith.constant 0 : index
    %c0_538 = arith.constant 0 : index
    %698 = vector.load %arg0[%c4_536, %c0_537, %c0_538] : memref<8x8x64xf32, #tpu.memory_space<vmem>>, vector<1x8x64xf32>
    %699 = vector.shape_cast %698 : vector<1x8x64xf32> to vector<8x64xf32>
    %c4_539 = arith.constant 4 : index
    %c12_540 = arith.constant 12 : index
    %700 = memref.load %arg1[%c4_539, %c12_540] : memref<8x24xf32, #tpu.memory_space<smem>>
    %701 = vector.broadcast %700 : f32 to vector<8x64xf32>
    %702 = arith.mulf %699, %701 : vector<8x64xf32>
    %703 = arith.addf %697, %702 : vector<8x64xf32>
    %c5_541 = arith.constant 5 : index
    %c0_542 = arith.constant 0 : index
    %c0_543 = arith.constant 0 : index
    %704 = vector.load %arg0[%c5_541, %c0_542, %c0_543] : memref<8x8x64xf32, #tpu.memory_space<vmem>>, vector<1x8x64xf32>
    %705 = vector.shape_cast %704 : vector<1x8x64xf32> to vector<8x64xf32>
    %c5_544 = arith.constant 5 : index
    %c12_545 = arith.constant 12 : index
    %706 = memref.load %arg1[%c5_544, %c12_545] : memref<8x24xf32, #tpu.memory_space<smem>>
    %707 = vector.broadcast %706 : f32 to vector<8x64xf32>
    %708 = arith.mulf %705, %707 : vector<8x64xf32>
    %709 = arith.addf %703, %708 : vector<8x64xf32>
    %c6_546 = arith.constant 6 : index
    %c0_547 = arith.constant 0 : index
    %c0_548 = arith.constant 0 : index
    %710 = vector.load %arg0[%c6_546, %c0_547, %c0_548] : memref<8x8x64xf32, #tpu.memory_space<vmem>>, vector<1x8x64xf32>
    %711 = vector.shape_cast %710 : vector<1x8x64xf32> to vector<8x64xf32>
    %c6_549 = arith.constant 6 : index
    %c12_550 = arith.constant 12 : index
    %712 = memref.load %arg1[%c6_549, %c12_550] : memref<8x24xf32, #tpu.memory_space<smem>>
    %713 = vector.broadcast %712 : f32 to vector<8x64xf32>
    %714 = arith.mulf %711, %713 : vector<8x64xf32>
    %715 = arith.addf %709, %714 : vector<8x64xf32>
    %c7_551 = arith.constant 7 : index
    %c0_552 = arith.constant 0 : index
    %c0_553 = arith.constant 0 : index
    %716 = vector.load %arg0[%c7_551, %c0_552, %c0_553] : memref<8x8x64xf32, #tpu.memory_space<vmem>>, vector<1x8x64xf32>
    %717 = vector.shape_cast %716 : vector<1x8x64xf32> to vector<8x64xf32>
    %c7_554 = arith.constant 7 : index
    %c12_555 = arith.constant 12 : index
    %718 = memref.load %arg1[%c7_554, %c12_555] : memref<8x24xf32, #tpu.memory_space<smem>>
    %719 = vector.broadcast %718 : f32 to vector<8x64xf32>
    %720 = arith.mulf %717, %719 : vector<8x64xf32>
    %721 = arith.addf %715, %720 : vector<8x64xf32>
    %cst_556 = arith.constant 0.000000e+00 : f32
    %722 = vector.broadcast %cst_556 : f32 to vector<8x64xf32>
    %723 = arith.cmpf oge, %721, %722 : vector<8x64xf32>
    %cst_557 = arith.constant 0.00999999977 : f32
    %724 = vector.broadcast %cst_557 : f32 to vector<8x64xf32>
    %725 = arith.mulf %724, %721 : vector<8x64xf32>
    %726 = arith.select %723, %721, %725 : vector<8x64xi1>, vector<8x64xf32>
    %c0_558 = arith.constant 0 : index
    %c768 = arith.constant 768 : index
    %727 = vector.load %arg10[%c0_558, %c768] : memref<8x1536xf32, #tpu.memory_space<vmem>>, vector<8x64xf32>
    tpu.vector_store %arg10[%c0_558, %c768], %726 {strides = array<i32>} : memref<8x1536xf32, #tpu.memory_space<vmem>>, vector<8x64xf32>,
    %c0_559 = arith.constant 0 : index
    %c0_560 = arith.constant 0 : index
    %c0_561 = arith.constant 0 : index
    %728 = vector.load %arg0[%c0_559, %c0_560, %c0_561] : memref<8x8x64xf32, #tpu.memory_space<vmem>>, vector<1x8x64xf32>
    %729 = vector.shape_cast %728 : vector<1x8x64xf32> to vector<8x64xf32>
    %c0_562 = arith.constant 0 : index
    %c13 = arith.constant 13 : index
    %730 = memref.load %arg1[%c0_562, %c13] : memref<8x24xf32, #tpu.memory_space<smem>>
    %731 = vector.broadcast %730 : f32 to vector<8x64xf32>
    %732 = arith.mulf %729, %731 : vector<8x64xf32>
    %c13_563 = arith.constant 13 : index
    %733 = memref.load %arg2[%c13_563] : memref<24xf32, #tpu.memory_space<smem>>
    %734 = vector.broadcast %733 : f32 to vector<8x64xf32>
    %735 = arith.addf %732, %734 : vector<8x64xf32>
    %c1_564 = arith.constant 1 : index
    %c0_565 = arith.constant 0 : index
    %c0_566 = arith.constant 0 : index
    %736 = vector.load %arg0[%c1_564, %c0_565, %c0_566] : memref<8x8x64xf32, #tpu.memory_space<vmem>>, vector<1x8x64xf32>
    %737 = vector.shape_cast %736 : vector<1x8x64xf32> to vector<8x64xf32>
    %c1_567 = arith.constant 1 : index
    %c13_568 = arith.constant 13 : index
    %738 = memref.load %arg1[%c1_567, %c13_568] : memref<8x24xf32, #tpu.memory_space<smem>>
    %739 = vector.broadcast %738 : f32 to vector<8x64xf32>
    %740 = arith.mulf %737, %739 : vector<8x64xf32>
    %741 = arith.addf %735, %740 : vector<8x64xf32>
    %c2_569 = arith.constant 2 : index
    %c0_570 = arith.constant 0 : index
    %c0_571 = arith.constant 0 : index
    %742 = vector.load %arg0[%c2_569, %c0_570, %c0_571] : memref<8x8x64xf32, #tpu.memory_space<vmem>>, vector<1x8x64xf32>
    %743 = vector.shape_cast %742 : vector<1x8x64xf32> to vector<8x64xf32>
    %c2_572 = arith.constant 2 : index
    %c13_573 = arith.constant 13 : index
    %744 = memref.load %arg1[%c2_572, %c13_573] : memref<8x24xf32, #tpu.memory_space<smem>>
    %745 = vector.broadcast %744 : f32 to vector<8x64xf32>
    %746 = arith.mulf %743, %745 : vector<8x64xf32>
    %747 = arith.addf %741, %746 : vector<8x64xf32>
    %c3_574 = arith.constant 3 : index
    %c0_575 = arith.constant 0 : index
    %c0_576 = arith.constant 0 : index
    %748 = vector.load %arg0[%c3_574, %c0_575, %c0_576] : memref<8x8x64xf32, #tpu.memory_space<vmem>>, vector<1x8x64xf32>
    %749 = vector.shape_cast %748 : vector<1x8x64xf32> to vector<8x64xf32>
    %c3_577 = arith.constant 3 : index
    %c13_578 = arith.constant 13 : index
    %750 = memref.load %arg1[%c3_577, %c13_578] : memref<8x24xf32, #tpu.memory_space<smem>>
    %751 = vector.broadcast %750 : f32 to vector<8x64xf32>
    %752 = arith.mulf %749, %751 : vector<8x64xf32>
    %753 = arith.addf %747, %752 : vector<8x64xf32>
    %c4_579 = arith.constant 4 : index
    %c0_580 = arith.constant 0 : index
    %c0_581 = arith.constant 0 : index
    %754 = vector.load %arg0[%c4_579, %c0_580, %c0_581] : memref<8x8x64xf32, #tpu.memory_space<vmem>>, vector<1x8x64xf32>
    %755 = vector.shape_cast %754 : vector<1x8x64xf32> to vector<8x64xf32>
    %c4_582 = arith.constant 4 : index
    %c13_583 = arith.constant 13 : index
    %756 = memref.load %arg1[%c4_582, %c13_583] : memref<8x24xf32, #tpu.memory_space<smem>>
    %757 = vector.broadcast %756 : f32 to vector<8x64xf32>
    %758 = arith.mulf %755, %757 : vector<8x64xf32>
    %759 = arith.addf %753, %758 : vector<8x64xf32>
    %c5_584 = arith.constant 5 : index
    %c0_585 = arith.constant 0 : index
    %c0_586 = arith.constant 0 : index
    %760 = vector.load %arg0[%c5_584, %c0_585, %c0_586] : memref<8x8x64xf32, #tpu.memory_space<vmem>>, vector<1x8x64xf32>
    %761 = vector.shape_cast %760 : vector<1x8x64xf32> to vector<8x64xf32>
    %c5_587 = arith.constant 5 : index
    %c13_588 = arith.constant 13 : index
    %762 = memref.load %arg1[%c5_587, %c13_588] : memref<8x24xf32, #tpu.memory_space<smem>>
    %763 = vector.broadcast %762 : f32 to vector<8x64xf32>
    %764 = arith.mulf %761, %763 : vector<8x64xf32>
    %765 = arith.addf %759, %764 : vector<8x64xf32>
    %c6_589 = arith.constant 6 : index
    %c0_590 = arith.constant 0 : index
    %c0_591 = arith.constant 0 : index
    %766 = vector.load %arg0[%c6_589, %c0_590, %c0_591] : memref<8x8x64xf32, #tpu.memory_space<vmem>>, vector<1x8x64xf32>
    %767 = vector.shape_cast %766 : vector<1x8x64xf32> to vector<8x64xf32>
    %c6_592 = arith.constant 6 : index
    %c13_593 = arith.constant 13 : index
    %768 = memref.load %arg1[%c6_592, %c13_593] : memref<8x24xf32, #tpu.memory_space<smem>>
    %769 = vector.broadcast %768 : f32 to vector<8x64xf32>
    %770 = arith.mulf %767, %769 : vector<8x64xf32>
    %771 = arith.addf %765, %770 : vector<8x64xf32>
    %c7_594 = arith.constant 7 : index
    %c0_595 = arith.constant 0 : index
    %c0_596 = arith.constant 0 : index
    %772 = vector.load %arg0[%c7_594, %c0_595, %c0_596] : memref<8x8x64xf32, #tpu.memory_space<vmem>>, vector<1x8x64xf32>
    %773 = vector.shape_cast %772 : vector<1x8x64xf32> to vector<8x64xf32>
    %c7_597 = arith.constant 7 : index
    %c13_598 = arith.constant 13 : index
    %774 = memref.load %arg1[%c7_597, %c13_598] : memref<8x24xf32, #tpu.memory_space<smem>>
    %775 = vector.broadcast %774 : f32 to vector<8x64xf32>
    %776 = arith.mulf %773, %775 : vector<8x64xf32>
    %777 = arith.addf %771, %776 : vector<8x64xf32>
    %cst_599 = arith.constant 0.000000e+00 : f32
    %778 = vector.broadcast %cst_599 : f32 to vector<8x64xf32>
    %779 = arith.cmpf oge, %777, %778 : vector<8x64xf32>
    %cst_600 = arith.constant 0.00999999977 : f32
    %780 = vector.broadcast %cst_600 : f32 to vector<8x64xf32>
    %781 = arith.mulf %780, %777 : vector<8x64xf32>
    %782 = arith.select %779, %777, %781 : vector<8x64xi1>, vector<8x64xf32>
    %c0_601 = arith.constant 0 : index
    %c832 = arith.constant 832 : index
    %783 = vector.load %arg10[%c0_601, %c832] : memref<8x1536xf32, #tpu.memory_space<vmem>>, vector<8x64xf32>
    tpu.vector_store %arg10[%c0_601, %c832], %782 {strides = array<i32>} : memref<8x1536xf32, #tpu.memory_space<vmem>>, vector<8x64xf32>,
    %c0_602 = arith.constant 0 : index
    %c0_603 = arith.constant 0 : index
    %c0_604 = arith.constant 0 : index
    %784 = vector.load %arg0[%c0_602, %c0_603, %c0_604] : memref<8x8x64xf32, #tpu.memory_space<vmem>>, vector<1x8x64xf32>
    %785 = vector.shape_cast %784 : vector<1x8x64xf32> to vector<8x64xf32>
    %c0_605 = arith.constant 0 : index
    %c14 = arith.constant 14 : index
    %786 = memref.load %arg1[%c0_605, %c14] : memref<8x24xf32, #tpu.memory_space<smem>>
    %787 = vector.broadcast %786 : f32 to vector<8x64xf32>
    %788 = arith.mulf %785, %787 : vector<8x64xf32>
    %c14_606 = arith.constant 14 : index
    %789 = memref.load %arg2[%c14_606] : memref<24xf32, #tpu.memory_space<smem>>
    %790 = vector.broadcast %789 : f32 to vector<8x64xf32>
    %791 = arith.addf %788, %790 : vector<8x64xf32>
    %c1_607 = arith.constant 1 : index
    %c0_608 = arith.constant 0 : index
    %c0_609 = arith.constant 0 : index
    %792 = vector.load %arg0[%c1_607, %c0_608, %c0_609] : memref<8x8x64xf32, #tpu.memory_space<vmem>>, vector<1x8x64xf32>
    %793 = vector.shape_cast %792 : vector<1x8x64xf32> to vector<8x64xf32>
    %c1_610 = arith.constant 1 : index
    %c14_611 = arith.constant 14 : index
    %794 = memref.load %arg1[%c1_610, %c14_611] : memref<8x24xf32, #tpu.memory_space<smem>>
    %795 = vector.broadcast %794 : f32 to vector<8x64xf32>
    %796 = arith.mulf %793, %795 : vector<8x64xf32>
    %797 = arith.addf %791, %796 : vector<8x64xf32>
    %c2_612 = arith.constant 2 : index
    %c0_613 = arith.constant 0 : index
    %c0_614 = arith.constant 0 : index
    %798 = vector.load %arg0[%c2_612, %c0_613, %c0_614] : memref<8x8x64xf32, #tpu.memory_space<vmem>>, vector<1x8x64xf32>
    %799 = vector.shape_cast %798 : vector<1x8x64xf32> to vector<8x64xf32>
    %c2_615 = arith.constant 2 : index
    %c14_616 = arith.constant 14 : index
    %800 = memref.load %arg1[%c2_615, %c14_616] : memref<8x24xf32, #tpu.memory_space<smem>>
    %801 = vector.broadcast %800 : f32 to vector<8x64xf32>
    %802 = arith.mulf %799, %801 : vector<8x64xf32>
    %803 = arith.addf %797, %802 : vector<8x64xf32>
    %c3_617 = arith.constant 3 : index
    %c0_618 = arith.constant 0 : index
    %c0_619 = arith.constant 0 : index
    %804 = vector.load %arg0[%c3_617, %c0_618, %c0_619] : memref<8x8x64xf32, #tpu.memory_space<vmem>>, vector<1x8x64xf32>
    %805 = vector.shape_cast %804 : vector<1x8x64xf32> to vector<8x64xf32>
    %c3_620 = arith.constant 3 : index
    %c14_621 = arith.constant 14 : index
    %806 = memref.load %arg1[%c3_620, %c14_621] : memref<8x24xf32, #tpu.memory_space<smem>>
    %807 = vector.broadcast %806 : f32 to vector<8x64xf32>
    %808 = arith.mulf %805, %807 : vector<8x64xf32>
    %809 = arith.addf %803, %808 : vector<8x64xf32>
    %c4_622 = arith.constant 4 : index
    %c0_623 = arith.constant 0 : index
    %c0_624 = arith.constant 0 : index
    %810 = vector.load %arg0[%c4_622, %c0_623, %c0_624] : memref<8x8x64xf32, #tpu.memory_space<vmem>>, vector<1x8x64xf32>
    %811 = vector.shape_cast %810 : vector<1x8x64xf32> to vector<8x64xf32>
    %c4_625 = arith.constant 4 : index
    %c14_626 = arith.constant 14 : index
    %812 = memref.load %arg1[%c4_625, %c14_626] : memref<8x24xf32, #tpu.memory_space<smem>>
    %813 = vector.broadcast %812 : f32 to vector<8x64xf32>
    %814 = arith.mulf %811, %813 : vector<8x64xf32>
    %815 = arith.addf %809, %814 : vector<8x64xf32>
    %c5_627 = arith.constant 5 : index
    %c0_628 = arith.constant 0 : index
    %c0_629 = arith.constant 0 : index
    %816 = vector.load %arg0[%c5_627, %c0_628, %c0_629] : memref<8x8x64xf32, #tpu.memory_space<vmem>>, vector<1x8x64xf32>
    %817 = vector.shape_cast %816 : vector<1x8x64xf32> to vector<8x64xf32>
    %c5_630 = arith.constant 5 : index
    %c14_631 = arith.constant 14 : index
    %818 = memref.load %arg1[%c5_630, %c14_631] : memref<8x24xf32, #tpu.memory_space<smem>>
    %819 = vector.broadcast %818 : f32 to vector<8x64xf32>
    %820 = arith.mulf %817, %819 : vector<8x64xf32>
    %821 = arith.addf %815, %820 : vector<8x64xf32>
    %c6_632 = arith.constant 6 : index
    %c0_633 = arith.constant 0 : index
    %c0_634 = arith.constant 0 : index
    %822 = vector.load %arg0[%c6_632, %c0_633, %c0_634] : memref<8x8x64xf32, #tpu.memory_space<vmem>>, vector<1x8x64xf32>
    %823 = vector.shape_cast %822 : vector<1x8x64xf32> to vector<8x64xf32>
    %c6_635 = arith.constant 6 : index
    %c14_636 = arith.constant 14 : index
    %824 = memref.load %arg1[%c6_635, %c14_636] : memref<8x24xf32, #tpu.memory_space<smem>>
    %825 = vector.broadcast %824 : f32 to vector<8x64xf32>
    %826 = arith.mulf %823, %825 : vector<8x64xf32>
    %827 = arith.addf %821, %826 : vector<8x64xf32>
    %c7_637 = arith.constant 7 : index
    %c0_638 = arith.constant 0 : index
    %c0_639 = arith.constant 0 : index
    %828 = vector.load %arg0[%c7_637, %c0_638, %c0_639] : memref<8x8x64xf32, #tpu.memory_space<vmem>>, vector<1x8x64xf32>
    %829 = vector.shape_cast %828 : vector<1x8x64xf32> to vector<8x64xf32>
    %c7_640 = arith.constant 7 : index
    %c14_641 = arith.constant 14 : index
    %830 = memref.load %arg1[%c7_640, %c14_641] : memref<8x24xf32, #tpu.memory_space<smem>>
    %831 = vector.broadcast %830 : f32 to vector<8x64xf32>
    %832 = arith.mulf %829, %831 : vector<8x64xf32>
    %833 = arith.addf %827, %832 : vector<8x64xf32>
    %cst_642 = arith.constant 0.000000e+00 : f32
    %834 = vector.broadcast %cst_642 : f32 to vector<8x64xf32>
    %835 = arith.cmpf oge, %833, %834 : vector<8x64xf32>
    %cst_643 = arith.constant 0.00999999977 : f32
    %836 = vector.broadcast %cst_643 : f32 to vector<8x64xf32>
    %837 = arith.mulf %836, %833 : vector<8x64xf32>
    %838 = arith.select %835, %833, %837 : vector<8x64xi1>, vector<8x64xf32>
    %c0_644 = arith.constant 0 : index
    %c896 = arith.constant 896 : index
    %839 = vector.load %arg10[%c0_644, %c896] : memref<8x1536xf32, #tpu.memory_space<vmem>>, vector<8x64xf32>
    tpu.vector_store %arg10[%c0_644, %c896], %838 {strides = array<i32>} : memref<8x1536xf32, #tpu.memory_space<vmem>>, vector<8x64xf32>,
    %c0_645 = arith.constant 0 : index
    %c0_646 = arith.constant 0 : index
    %c0_647 = arith.constant 0 : index
    %840 = vector.load %arg0[%c0_645, %c0_646, %c0_647] : memref<8x8x64xf32, #tpu.memory_space<vmem>>, vector<1x8x64xf32>
    %841 = vector.shape_cast %840 : vector<1x8x64xf32> to vector<8x64xf32>
    %c0_648 = arith.constant 0 : index
    %c15 = arith.constant 15 : index
    %842 = memref.load %arg1[%c0_648, %c15] : memref<8x24xf32, #tpu.memory_space<smem>>
    %843 = vector.broadcast %842 : f32 to vector<8x64xf32>
    %844 = arith.mulf %841, %843 : vector<8x64xf32>
    %c15_649 = arith.constant 15 : index
    %845 = memref.load %arg2[%c15_649] : memref<24xf32, #tpu.memory_space<smem>>
    %846 = vector.broadcast %845 : f32 to vector<8x64xf32>
    %847 = arith.addf %844, %846 : vector<8x64xf32>
    %c1_650 = arith.constant 1 : index
    %c0_651 = arith.constant 0 : index
    %c0_652 = arith.constant 0 : index
    %848 = vector.load %arg0[%c1_650, %c0_651, %c0_652] : memref<8x8x64xf32, #tpu.memory_space<vmem>>, vector<1x8x64xf32>
    %849 = vector.shape_cast %848 : vector<1x8x64xf32> to vector<8x64xf32>
    %c1_653 = arith.constant 1 : index
    %c15_654 = arith.constant 15 : index
    %850 = memref.load %arg1[%c1_653, %c15_654] : memref<8x24xf32, #tpu.memory_space<smem>>
    %851 = vector.broadcast %850 : f32 to vector<8x64xf32>
    %852 = arith.mulf %849, %851 : vector<8x64xf32>
    %853 = arith.addf %847, %852 : vector<8x64xf32>
    %c2_655 = arith.constant 2 : index
    %c0_656 = arith.constant 0 : index
    %c0_657 = arith.constant 0 : index
    %854 = vector.load %arg0[%c2_655, %c0_656, %c0_657] : memref<8x8x64xf32, #tpu.memory_space<vmem>>, vector<1x8x64xf32>
    %855 = vector.shape_cast %854 : vector<1x8x64xf32> to vector<8x64xf32>
    %c2_658 = arith.constant 2 : index
    %c15_659 = arith.constant 15 : index
    %856 = memref.load %arg1[%c2_658, %c15_659] : memref<8x24xf32, #tpu.memory_space<smem>>
    %857 = vector.broadcast %856 : f32 to vector<8x64xf32>
    %858 = arith.mulf %855, %857 : vector<8x64xf32>
    %859 = arith.addf %853, %858 : vector<8x64xf32>
    %c3_660 = arith.constant 3 : index
    %c0_661 = arith.constant 0 : index
    %c0_662 = arith.constant 0 : index
    %860 = vector.load %arg0[%c3_660, %c0_661, %c0_662] : memref<8x8x64xf32, #tpu.memory_space<vmem>>, vector<1x8x64xf32>
    %861 = vector.shape_cast %860 : vector<1x8x64xf32> to vector<8x64xf32>
    %c3_663 = arith.constant 3 : index
    %c15_664 = arith.constant 15 : index
    %862 = memref.load %arg1[%c3_663, %c15_664] : memref<8x24xf32, #tpu.memory_space<smem>>
    %863 = vector.broadcast %862 : f32 to vector<8x64xf32>
    %864 = arith.mulf %861, %863 : vector<8x64xf32>
    %865 = arith.addf %859, %864 : vector<8x64xf32>
    %c4_665 = arith.constant 4 : index
    %c0_666 = arith.constant 0 : index
    %c0_667 = arith.constant 0 : index
    %866 = vector.load %arg0[%c4_665, %c0_666, %c0_667] : memref<8x8x64xf32, #tpu.memory_space<vmem>>, vector<1x8x64xf32>
    %867 = vector.shape_cast %866 : vector<1x8x64xf32> to vector<8x64xf32>
    %c4_668 = arith.constant 4 : index
    %c15_669 = arith.constant 15 : index
    %868 = memref.load %arg1[%c4_668, %c15_669] : memref<8x24xf32, #tpu.memory_space<smem>>
    %869 = vector.broadcast %868 : f32 to vector<8x64xf32>
    %870 = arith.mulf %867, %869 : vector<8x64xf32>
    %871 = arith.addf %865, %870 : vector<8x64xf32>
    %c5_670 = arith.constant 5 : index
    %c0_671 = arith.constant 0 : index
    %c0_672 = arith.constant 0 : index
    %872 = vector.load %arg0[%c5_670, %c0_671, %c0_672] : memref<8x8x64xf32, #tpu.memory_space<vmem>>, vector<1x8x64xf32>
    %873 = vector.shape_cast %872 : vector<1x8x64xf32> to vector<8x64xf32>
    %c5_673 = arith.constant 5 : index
    %c15_674 = arith.constant 15 : index
    %874 = memref.load %arg1[%c5_673, %c15_674] : memref<8x24xf32, #tpu.memory_space<smem>>
    %875 = vector.broadcast %874 : f32 to vector<8x64xf32>
    %876 = arith.mulf %873, %875 : vector<8x64xf32>
    %877 = arith.addf %871, %876 : vector<8x64xf32>
    %c6_675 = arith.constant 6 : index
    %c0_676 = arith.constant 0 : index
    %c0_677 = arith.constant 0 : index
    %878 = vector.load %arg0[%c6_675, %c0_676, %c0_677] : memref<8x8x64xf32, #tpu.memory_space<vmem>>, vector<1x8x64xf32>
    %879 = vector.shape_cast %878 : vector<1x8x64xf32> to vector<8x64xf32>
    %c6_678 = arith.constant 6 : index
    %c15_679 = arith.constant 15 : index
    %880 = memref.load %arg1[%c6_678, %c15_679] : memref<8x24xf32, #tpu.memory_space<smem>>
    %881 = vector.broadcast %880 : f32 to vector<8x64xf32>
    %882 = arith.mulf %879, %881 : vector<8x64xf32>
    %883 = arith.addf %877, %882 : vector<8x64xf32>
    %c7_680 = arith.constant 7 : index
    %c0_681 = arith.constant 0 : index
    %c0_682 = arith.constant 0 : index
    %884 = vector.load %arg0[%c7_680, %c0_681, %c0_682] : memref<8x8x64xf32, #tpu.memory_space<vmem>>, vector<1x8x64xf32>
    %885 = vector.shape_cast %884 : vector<1x8x64xf32> to vector<8x64xf32>
    %c7_683 = arith.constant 7 : index
    %c15_684 = arith.constant 15 : index
    %886 = memref.load %arg1[%c7_683, %c15_684] : memref<8x24xf32, #tpu.memory_space<smem>>
    %887 = vector.broadcast %886 : f32 to vector<8x64xf32>
    %888 = arith.mulf %885, %887 : vector<8x64xf32>
    %889 = arith.addf %883, %888 : vector<8x64xf32>
    %cst_685 = arith.constant 0.000000e+00 : f32
    %890 = vector.broadcast %cst_685 : f32 to vector<8x64xf32>
    %891 = arith.cmpf oge, %889, %890 : vector<8x64xf32>
    %cst_686 = arith.constant 0.00999999977 : f32
    %892 = vector.broadcast %cst_686 : f32 to vector<8x64xf32>
    %893 = arith.mulf %892, %889 : vector<8x64xf32>
    %894 = arith.select %891, %889, %893 : vector<8x64xi1>, vector<8x64xf32>
    %c0_687 = arith.constant 0 : index
    %c960 = arith.constant 960 : index
    %895 = vector.load %arg10[%c0_687, %c960] : memref<8x1536xf32, #tpu.memory_space<vmem>>, vector<8x64xf32>
    tpu.vector_store %arg10[%c0_687, %c960], %894 {strides = array<i32>} : memref<8x1536xf32, #tpu.memory_space<vmem>>, vector<8x64xf32>,
    %c0_688 = arith.constant 0 : index
    %c0_689 = arith.constant 0 : index
    %c0_690 = arith.constant 0 : index
    %896 = vector.load %arg0[%c0_688, %c0_689, %c0_690] : memref<8x8x64xf32, #tpu.memory_space<vmem>>, vector<1x8x64xf32>
    %897 = vector.shape_cast %896 : vector<1x8x64xf32> to vector<8x64xf32>
    %c0_691 = arith.constant 0 : index
    %c16 = arith.constant 16 : index
    %898 = memref.load %arg1[%c0_691, %c16] : memref<8x24xf32, #tpu.memory_space<smem>>
    %899 = vector.broadcast %898 : f32 to vector<8x64xf32>
    %900 = arith.mulf %897, %899 : vector<8x64xf32>
    %c16_692 = arith.constant 16 : index
    %901 = memref.load %arg2[%c16_692] : memref<24xf32, #tpu.memory_space<smem>>
    %902 = vector.broadcast %901 : f32 to vector<8x64xf32>
    %903 = arith.addf %900, %902 : vector<8x64xf32>
    %c1_693 = arith.constant 1 : index
    %c0_694 = arith.constant 0 : index
    %c0_695 = arith.constant 0 : index
    %904 = vector.load %arg0[%c1_693, %c0_694, %c0_695] : memref<8x8x64xf32, #tpu.memory_space<vmem>>, vector<1x8x64xf32>
    %905 = vector.shape_cast %904 : vector<1x8x64xf32> to vector<8x64xf32>
    %c1_696 = arith.constant 1 : index
    %c16_697 = arith.constant 16 : index
    %906 = memref.load %arg1[%c1_696, %c16_697] : memref<8x24xf32, #tpu.memory_space<smem>>
    %907 = vector.broadcast %906 : f32 to vector<8x64xf32>
    %908 = arith.mulf %905, %907 : vector<8x64xf32>
    %909 = arith.addf %903, %908 : vector<8x64xf32>
    %c2_698 = arith.constant 2 : index
    %c0_699 = arith.constant 0 : index
    %c0_700 = arith.constant 0 : index
    %910 = vector.load %arg0[%c2_698, %c0_699, %c0_700] : memref<8x8x64xf32, #tpu.memory_space<vmem>>, vector<1x8x64xf32>
    %911 = vector.shape_cast %910 : vector<1x8x64xf32> to vector<8x64xf32>
    %c2_701 = arith.constant 2 : index
    %c16_702 = arith.constant 16 : index
    %912 = memref.load %arg1[%c2_701, %c16_702] : memref<8x24xf32, #tpu.memory_space<smem>>
    %913 = vector.broadcast %912 : f32 to vector<8x64xf32>
    %914 = arith.mulf %911, %913 : vector<8x64xf32>
    %915 = arith.addf %909, %914 : vector<8x64xf32>
    %c3_703 = arith.constant 3 : index
    %c0_704 = arith.constant 0 : index
    %c0_705 = arith.constant 0 : index
    %916 = vector.load %arg0[%c3_703, %c0_704, %c0_705] : memref<8x8x64xf32, #tpu.memory_space<vmem>>, vector<1x8x64xf32>
    %917 = vector.shape_cast %916 : vector<1x8x64xf32> to vector<8x64xf32>
    %c3_706 = arith.constant 3 : index
    %c16_707 = arith.constant 16 : index
    %918 = memref.load %arg1[%c3_706, %c16_707] : memref<8x24xf32, #tpu.memory_space<smem>>
    %919 = vector.broadcast %918 : f32 to vector<8x64xf32>
    %920 = arith.mulf %917, %919 : vector<8x64xf32>
    %921 = arith.addf %915, %920 : vector<8x64xf32>
    %c4_708 = arith.constant 4 : index
    %c0_709 = arith.constant 0 : index
    %c0_710 = arith.constant 0 : index
    %922 = vector.load %arg0[%c4_708, %c0_709, %c0_710] : memref<8x8x64xf32, #tpu.memory_space<vmem>>, vector<1x8x64xf32>
    %923 = vector.shape_cast %922 : vector<1x8x64xf32> to vector<8x64xf32>
    %c4_711 = arith.constant 4 : index
    %c16_712 = arith.constant 16 : index
    %924 = memref.load %arg1[%c4_711, %c16_712] : memref<8x24xf32, #tpu.memory_space<smem>>
    %925 = vector.broadcast %924 : f32 to vector<8x64xf32>
    %926 = arith.mulf %923, %925 : vector<8x64xf32>
    %927 = arith.addf %921, %926 : vector<8x64xf32>
    %c5_713 = arith.constant 5 : index
    %c0_714 = arith.constant 0 : index
    %c0_715 = arith.constant 0 : index
    %928 = vector.load %arg0[%c5_713, %c0_714, %c0_715] : memref<8x8x64xf32, #tpu.memory_space<vmem>>, vector<1x8x64xf32>
    %929 = vector.shape_cast %928 : vector<1x8x64xf32> to vector<8x64xf32>
    %c5_716 = arith.constant 5 : index
    %c16_717 = arith.constant 16 : index
    %930 = memref.load %arg1[%c5_716, %c16_717] : memref<8x24xf32, #tpu.memory_space<smem>>
    %931 = vector.broadcast %930 : f32 to vector<8x64xf32>
    %932 = arith.mulf %929, %931 : vector<8x64xf32>
    %933 = arith.addf %927, %932 : vector<8x64xf32>
    %c6_718 = arith.constant 6 : index
    %c0_719 = arith.constant 0 : index
    %c0_720 = arith.constant 0 : index
    %934 = vector.load %arg0[%c6_718, %c0_719, %c0_720] : memref<8x8x64xf32, #tpu.memory_space<vmem>>, vector<1x8x64xf32>
    %935 = vector.shape_cast %934 : vector<1x8x64xf32> to vector<8x64xf32>
    %c6_721 = arith.constant 6 : index
    %c16_722 = arith.constant 16 : index
    %936 = memref.load %arg1[%c6_721, %c16_722] : memref<8x24xf32, #tpu.memory_space<smem>>
    %937 = vector.broadcast %936 : f32 to vector<8x64xf32>
    %938 = arith.mulf %935, %937 : vector<8x64xf32>
    %939 = arith.addf %933, %938 : vector<8x64xf32>
    %c7_723 = arith.constant 7 : index
    %c0_724 = arith.constant 0 : index
    %c0_725 = arith.constant 0 : index
    %940 = vector.load %arg0[%c7_723, %c0_724, %c0_725] : memref<8x8x64xf32, #tpu.memory_space<vmem>>, vector<1x8x64xf32>
    %941 = vector.shape_cast %940 : vector<1x8x64xf32> to vector<8x64xf32>
    %c7_726 = arith.constant 7 : index
    %c16_727 = arith.constant 16 : index
    %942 = memref.load %arg1[%c7_726, %c16_727] : memref<8x24xf32, #tpu.memory_space<smem>>
    %943 = vector.broadcast %942 : f32 to vector<8x64xf32>
    %944 = arith.mulf %941, %943 : vector<8x64xf32>
    %945 = arith.addf %939, %944 : vector<8x64xf32>
    %cst_728 = arith.constant 0.000000e+00 : f32
    %946 = vector.broadcast %cst_728 : f32 to vector<8x64xf32>
    %947 = arith.cmpf oge, %945, %946 : vector<8x64xf32>
    %cst_729 = arith.constant 0.00999999977 : f32
    %948 = vector.broadcast %cst_729 : f32 to vector<8x64xf32>
    %949 = arith.mulf %948, %945 : vector<8x64xf32>
    %950 = arith.select %947, %945, %949 : vector<8x64xi1>, vector<8x64xf32>
    %c0_730 = arith.constant 0 : index
    %c1024 = arith.constant 1024 : index
    %951 = vector.load %arg10[%c0_730, %c1024] : memref<8x1536xf32, #tpu.memory_space<vmem>>, vector<8x64xf32>
    tpu.vector_store %arg10[%c0_730, %c1024], %950 {strides = array<i32>} : memref<8x1536xf32, #tpu.memory_space<vmem>>, vector<8x64xf32>,
    %c0_731 = arith.constant 0 : index
    %c0_732 = arith.constant 0 : index
    %c0_733 = arith.constant 0 : index
    %952 = vector.load %arg0[%c0_731, %c0_732, %c0_733] : memref<8x8x64xf32, #tpu.memory_space<vmem>>, vector<1x8x64xf32>
    %953 = vector.shape_cast %952 : vector<1x8x64xf32> to vector<8x64xf32>
    %c0_734 = arith.constant 0 : index
    %c17 = arith.constant 17 : index
    %954 = memref.load %arg1[%c0_734, %c17] : memref<8x24xf32, #tpu.memory_space<smem>>
    %955 = vector.broadcast %954 : f32 to vector<8x64xf32>
    %956 = arith.mulf %953, %955 : vector<8x64xf32>
    %c17_735 = arith.constant 17 : index
    %957 = memref.load %arg2[%c17_735] : memref<24xf32, #tpu.memory_space<smem>>
    %958 = vector.broadcast %957 : f32 to vector<8x64xf32>
    %959 = arith.addf %956, %958 : vector<8x64xf32>
    %c1_736 = arith.constant 1 : index
    %c0_737 = arith.constant 0 : index
    %c0_738 = arith.constant 0 : index
    %960 = vector.load %arg0[%c1_736, %c0_737, %c0_738] : memref<8x8x64xf32, #tpu.memory_space<vmem>>, vector<1x8x64xf32>
    %961 = vector.shape_cast %960 : vector<1x8x64xf32> to vector<8x64xf32>
    %c1_739 = arith.constant 1 : index
    %c17_740 = arith.constant 17 : index
    %962 = memref.load %arg1[%c1_739, %c17_740] : memref<8x24xf32, #tpu.memory_space<smem>>
    %963 = vector.broadcast %962 : f32 to vector<8x64xf32>
    %964 = arith.mulf %961, %963 : vector<8x64xf32>
    %965 = arith.addf %959, %964 : vector<8x64xf32>
    %c2_741 = arith.constant 2 : index
    %c0_742 = arith.constant 0 : index
    %c0_743 = arith.constant 0 : index
    %966 = vector.load %arg0[%c2_741, %c0_742, %c0_743] : memref<8x8x64xf32, #tpu.memory_space<vmem>>, vector<1x8x64xf32>
    %967 = vector.shape_cast %966 : vector<1x8x64xf32> to vector<8x64xf32>
    %c2_744 = arith.constant 2 : index
    %c17_745 = arith.constant 17 : index
    %968 = memref.load %arg1[%c2_744, %c17_745] : memref<8x24xf32, #tpu.memory_space<smem>>
    %969 = vector.broadcast %968 : f32 to vector<8x64xf32>
    %970 = arith.mulf %967, %969 : vector<8x64xf32>
    %971 = arith.addf %965, %970 : vector<8x64xf32>
    %c3_746 = arith.constant 3 : index
    %c0_747 = arith.constant 0 : index
    %c0_748 = arith.constant 0 : index
    %972 = vector.load %arg0[%c3_746, %c0_747, %c0_748] : memref<8x8x64xf32, #tpu.memory_space<vmem>>, vector<1x8x64xf32>
    %973 = vector.shape_cast %972 : vector<1x8x64xf32> to vector<8x64xf32>
    %c3_749 = arith.constant 3 : index
    %c17_750 = arith.constant 17 : index
    %974 = memref.load %arg1[%c3_749, %c17_750] : memref<8x24xf32, #tpu.memory_space<smem>>
    %975 = vector.broadcast %974 : f32 to vector<8x64xf32>
    %976 = arith.mulf %973, %975 : vector<8x64xf32>
    %977 = arith.addf %971, %976 : vector<8x64xf32>
    %c4_751 = arith.constant 4 : index
    %c0_752 = arith.constant 0 : index
    %c0_753 = arith.constant 0 : index
    %978 = vector.load %arg0[%c4_751, %c0_752, %c0_753] : memref<8x8x64xf32, #tpu.memory_space<vmem>>, vector<1x8x64xf32>
    %979 = vector.shape_cast %978 : vector<1x8x64xf32> to vector<8x64xf32>
    %c4_754 = arith.constant 4 : index
    %c17_755 = arith.constant 17 : index
    %980 = memref.load %arg1[%c4_754, %c17_755] : memref<8x24xf32, #tpu.memory_space<smem>>
    %981 = vector.broadcast %980 : f32 to vector<8x64xf32>
    %982 = arith.mulf %979, %981 : vector<8x64xf32>
    %983 = arith.addf %977, %982 : vector<8x64xf32>
    %c5_756 = arith.constant 5 : index
    %c0_757 = arith.constant 0 : index
    %c0_758 = arith.constant 0 : index
    %984 = vector.load %arg0[%c5_756, %c0_757, %c0_758] : memref<8x8x64xf32, #tpu.memory_space<vmem>>, vector<1x8x64xf32>
    %985 = vector.shape_cast %984 : vector<1x8x64xf32> to vector<8x64xf32>
    %c5_759 = arith.constant 5 : index
    %c17_760 = arith.constant 17 : index
    %986 = memref.load %arg1[%c5_759, %c17_760] : memref<8x24xf32, #tpu.memory_space<smem>>
    %987 = vector.broadcast %986 : f32 to vector<8x64xf32>
    %988 = arith.mulf %985, %987 : vector<8x64xf32>
    %989 = arith.addf %983, %988 : vector<8x64xf32>
    %c6_761 = arith.constant 6 : index
    %c0_762 = arith.constant 0 : index
    %c0_763 = arith.constant 0 : index
    %990 = vector.load %arg0[%c6_761, %c0_762, %c0_763] : memref<8x8x64xf32, #tpu.memory_space<vmem>>, vector<1x8x64xf32>
    %991 = vector.shape_cast %990 : vector<1x8x64xf32> to vector<8x64xf32>
    %c6_764 = arith.constant 6 : index
    %c17_765 = arith.constant 17 : index
    %992 = memref.load %arg1[%c6_764, %c17_765] : memref<8x24xf32, #tpu.memory_space<smem>>
    %993 = vector.broadcast %992 : f32 to vector<8x64xf32>
    %994 = arith.mulf %991, %993 : vector<8x64xf32>
    %995 = arith.addf %989, %994 : vector<8x64xf32>
    %c7_766 = arith.constant 7 : index
    %c0_767 = arith.constant 0 : index
    %c0_768 = arith.constant 0 : index
    %996 = vector.load %arg0[%c7_766, %c0_767, %c0_768] : memref<8x8x64xf32, #tpu.memory_space<vmem>>, vector<1x8x64xf32>
    %997 = vector.shape_cast %996 : vector<1x8x64xf32> to vector<8x64xf32>
    %c7_769 = arith.constant 7 : index
    %c17_770 = arith.constant 17 : index
    %998 = memref.load %arg1[%c7_769, %c17_770] : memref<8x24xf32, #tpu.memory_space<smem>>
    %999 = vector.broadcast %998 : f32 to vector<8x64xf32>
    %1000 = arith.mulf %997, %999 : vector<8x64xf32>
    %1001 = arith.addf %995, %1000 : vector<8x64xf32>
    %cst_771 = arith.constant 0.000000e+00 : f32
    %1002 = vector.broadcast %cst_771 : f32 to vector<8x64xf32>
    %1003 = arith.cmpf oge, %1001, %1002 : vector<8x64xf32>
    %cst_772 = arith.constant 0.00999999977 : f32
    %1004 = vector.broadcast %cst_772 : f32 to vector<8x64xf32>
    %1005 = arith.mulf %1004, %1001 : vector<8x64xf32>
    %1006 = arith.select %1003, %1001, %1005 : vector<8x64xi1>, vector<8x64xf32>
    %c0_773 = arith.constant 0 : index
    %c1088 = arith.constant 1088 : index
    %1007 = vector.load %arg10[%c0_773, %c1088] : memref<8x1536xf32, #tpu.memory_space<vmem>>, vector<8x64xf32>
    tpu.vector_store %arg10[%c0_773, %c1088], %1006 {strides = array<i32>} : memref<8x1536xf32, #tpu.memory_space<vmem>>, vector<8x64xf32>,
    %c0_774 = arith.constant 0 : index
    %c0_775 = arith.constant 0 : index
    %c0_776 = arith.constant 0 : index
    %1008 = vector.load %arg0[%c0_774, %c0_775, %c0_776] : memref<8x8x64xf32, #tpu.memory_space<vmem>>, vector<1x8x64xf32>
    %1009 = vector.shape_cast %1008 : vector<1x8x64xf32> to vector<8x64xf32>
    %c0_777 = arith.constant 0 : index
    %c18 = arith.constant 18 : index
    %1010 = memref.load %arg1[%c0_777, %c18] : memref<8x24xf32, #tpu.memory_space<smem>>
    %1011 = vector.broadcast %1010 : f32 to vector<8x64xf32>
    %1012 = arith.mulf %1009, %1011 : vector<8x64xf32>
    %c18_778 = arith.constant 18 : index
    %1013 = memref.load %arg2[%c18_778] : memref<24xf32, #tpu.memory_space<smem>>
    %1014 = vector.broadcast %1013 : f32 to vector<8x64xf32>
    %1015 = arith.addf %1012, %1014 : vector<8x64xf32>
    %c1_779 = arith.constant 1 : index
    %c0_780 = arith.constant 0 : index
    %c0_781 = arith.constant 0 : index
    %1016 = vector.load %arg0[%c1_779, %c0_780, %c0_781] : memref<8x8x64xf32, #tpu.memory_space<vmem>>, vector<1x8x64xf32>
    %1017 = vector.shape_cast %1016 : vector<1x8x64xf32> to vector<8x64xf32>
    %c1_782 = arith.constant 1 : index
    %c18_783 = arith.constant 18 : index
    %1018 = memref.load %arg1[%c1_782, %c18_783] : memref<8x24xf32, #tpu.memory_space<smem>>
    %1019 = vector.broadcast %1018 : f32 to vector<8x64xf32>
    %1020 = arith.mulf %1017, %1019 : vector<8x64xf32>
    %1021 = arith.addf %1015, %1020 : vector<8x64xf32>
    %c2_784 = arith.constant 2 : index
    %c0_785 = arith.constant 0 : index
    %c0_786 = arith.constant 0 : index
    %1022 = vector.load %arg0[%c2_784, %c0_785, %c0_786] : memref<8x8x64xf32, #tpu.memory_space<vmem>>, vector<1x8x64xf32>
    %1023 = vector.shape_cast %1022 : vector<1x8x64xf32> to vector<8x64xf32>
    %c2_787 = arith.constant 2 : index
    %c18_788 = arith.constant 18 : index
    %1024 = memref.load %arg1[%c2_787, %c18_788] : memref<8x24xf32, #tpu.memory_space<smem>>
    %1025 = vector.broadcast %1024 : f32 to vector<8x64xf32>
    %1026 = arith.mulf %1023, %1025 : vector<8x64xf32>
    %1027 = arith.addf %1021, %1026 : vector<8x64xf32>
    %c3_789 = arith.constant 3 : index
    %c0_790 = arith.constant 0 : index
    %c0_791 = arith.constant 0 : index
    %1028 = vector.load %arg0[%c3_789, %c0_790, %c0_791] : memref<8x8x64xf32, #tpu.memory_space<vmem>>, vector<1x8x64xf32>
    %1029 = vector.shape_cast %1028 : vector<1x8x64xf32> to vector<8x64xf32>
    %c3_792 = arith.constant 3 : index
    %c18_793 = arith.constant 18 : index
    %1030 = memref.load %arg1[%c3_792, %c18_793] : memref<8x24xf32, #tpu.memory_space<smem>>
    %1031 = vector.broadcast %1030 : f32 to vector<8x64xf32>
    %1032 = arith.mulf %1029, %1031 : vector<8x64xf32>
    %1033 = arith.addf %1027, %1032 : vector<8x64xf32>
    %c4_794 = arith.constant 4 : index
    %c0_795 = arith.constant 0 : index
    %c0_796 = arith.constant 0 : index
    %1034 = vector.load %arg0[%c4_794, %c0_795, %c0_796] : memref<8x8x64xf32, #tpu.memory_space<vmem>>, vector<1x8x64xf32>
    %1035 = vector.shape_cast %1034 : vector<1x8x64xf32> to vector<8x64xf32>
    %c4_797 = arith.constant 4 : index
    %c18_798 = arith.constant 18 : index
    %1036 = memref.load %arg1[%c4_797, %c18_798] : memref<8x24xf32, #tpu.memory_space<smem>>
    %1037 = vector.broadcast %1036 : f32 to vector<8x64xf32>
    %1038 = arith.mulf %1035, %1037 : vector<8x64xf32>
    %1039 = arith.addf %1033, %1038 : vector<8x64xf32>
    %c5_799 = arith.constant 5 : index
    %c0_800 = arith.constant 0 : index
    %c0_801 = arith.constant 0 : index
    %1040 = vector.load %arg0[%c5_799, %c0_800, %c0_801] : memref<8x8x64xf32, #tpu.memory_space<vmem>>, vector<1x8x64xf32>
    %1041 = vector.shape_cast %1040 : vector<1x8x64xf32> to vector<8x64xf32>
    %c5_802 = arith.constant 5 : index
    %c18_803 = arith.constant 18 : index
    %1042 = memref.load %arg1[%c5_802, %c18_803] : memref<8x24xf32, #tpu.memory_space<smem>>
    %1043 = vector.broadcast %1042 : f32 to vector<8x64xf32>
    %1044 = arith.mulf %1041, %1043 : vector<8x64xf32>
    %1045 = arith.addf %1039, %1044 : vector<8x64xf32>
    %c6_804 = arith.constant 6 : index
    %c0_805 = arith.constant 0 : index
    %c0_806 = arith.constant 0 : index
    %1046 = vector.load %arg0[%c6_804, %c0_805, %c0_806] : memref<8x8x64xf32, #tpu.memory_space<vmem>>, vector<1x8x64xf32>
    %1047 = vector.shape_cast %1046 : vector<1x8x64xf32> to vector<8x64xf32>
    %c6_807 = arith.constant 6 : index
    %c18_808 = arith.constant 18 : index
    %1048 = memref.load %arg1[%c6_807, %c18_808] : memref<8x24xf32, #tpu.memory_space<smem>>
    %1049 = vector.broadcast %1048 : f32 to vector<8x64xf32>
    %1050 = arith.mulf %1047, %1049 : vector<8x64xf32>
    %1051 = arith.addf %1045, %1050 : vector<8x64xf32>
    %c7_809 = arith.constant 7 : index
    %c0_810 = arith.constant 0 : index
    %c0_811 = arith.constant 0 : index
    %1052 = vector.load %arg0[%c7_809, %c0_810, %c0_811] : memref<8x8x64xf32, #tpu.memory_space<vmem>>, vector<1x8x64xf32>
    %1053 = vector.shape_cast %1052 : vector<1x8x64xf32> to vector<8x64xf32>
    %c7_812 = arith.constant 7 : index
    %c18_813 = arith.constant 18 : index
    %1054 = memref.load %arg1[%c7_812, %c18_813] : memref<8x24xf32, #tpu.memory_space<smem>>
    %1055 = vector.broadcast %1054 : f32 to vector<8x64xf32>
    %1056 = arith.mulf %1053, %1055 : vector<8x64xf32>
    %1057 = arith.addf %1051, %1056 : vector<8x64xf32>
    %cst_814 = arith.constant 0.000000e+00 : f32
    %1058 = vector.broadcast %cst_814 : f32 to vector<8x64xf32>
    %1059 = arith.cmpf oge, %1057, %1058 : vector<8x64xf32>
    %cst_815 = arith.constant 0.00999999977 : f32
    %1060 = vector.broadcast %cst_815 : f32 to vector<8x64xf32>
    %1061 = arith.mulf %1060, %1057 : vector<8x64xf32>
    %1062 = arith.select %1059, %1057, %1061 : vector<8x64xi1>, vector<8x64xf32>
    %c0_816 = arith.constant 0 : index
    %c1152 = arith.constant 1152 : index
    %1063 = vector.load %arg10[%c0_816, %c1152] : memref<8x1536xf32, #tpu.memory_space<vmem>>, vector<8x64xf32>
    tpu.vector_store %arg10[%c0_816, %c1152], %1062 {strides = array<i32>} : memref<8x1536xf32, #tpu.memory_space<vmem>>, vector<8x64xf32>,
    %c0_817 = arith.constant 0 : index
    %c0_818 = arith.constant 0 : index
    %c0_819 = arith.constant 0 : index
    %1064 = vector.load %arg0[%c0_817, %c0_818, %c0_819] : memref<8x8x64xf32, #tpu.memory_space<vmem>>, vector<1x8x64xf32>
    %1065 = vector.shape_cast %1064 : vector<1x8x64xf32> to vector<8x64xf32>
    %c0_820 = arith.constant 0 : index
    %c19 = arith.constant 19 : index
    %1066 = memref.load %arg1[%c0_820, %c19] : memref<8x24xf32, #tpu.memory_space<smem>>
    %1067 = vector.broadcast %1066 : f32 to vector<8x64xf32>
    %1068 = arith.mulf %1065, %1067 : vector<8x64xf32>
    %c19_821 = arith.constant 19 : index
    %1069 = memref.load %arg2[%c19_821] : memref<24xf32, #tpu.memory_space<smem>>
    %1070 = vector.broadcast %1069 : f32 to vector<8x64xf32>
    %1071 = arith.addf %1068, %1070 : vector<8x64xf32>
    %c1_822 = arith.constant 1 : index
    %c0_823 = arith.constant 0 : index
    %c0_824 = arith.constant 0 : index
    %1072 = vector.load %arg0[%c1_822, %c0_823, %c0_824] : memref<8x8x64xf32, #tpu.memory_space<vmem>>, vector<1x8x64xf32>
    %1073 = vector.shape_cast %1072 : vector<1x8x64xf32> to vector<8x64xf32>
    %c1_825 = arith.constant 1 : index
    %c19_826 = arith.constant 19 : index
    %1074 = memref.load %arg1[%c1_825, %c19_826] : memref<8x24xf32, #tpu.memory_space<smem>>
    %1075 = vector.broadcast %1074 : f32 to vector<8x64xf32>
    %1076 = arith.mulf %1073, %1075 : vector<8x64xf32>
    %1077 = arith.addf %1071, %1076 : vector<8x64xf32>
    %c2_827 = arith.constant 2 : index
    %c0_828 = arith.constant 0 : index
    %c0_829 = arith.constant 0 : index
    %1078 = vector.load %arg0[%c2_827, %c0_828, %c0_829] : memref<8x8x64xf32, #tpu.memory_space<vmem>>, vector<1x8x64xf32>
    %1079 = vector.shape_cast %1078 : vector<1x8x64xf32> to vector<8x64xf32>
    %c2_830 = arith.constant 2 : index
    %c19_831 = arith.constant 19 : index
    %1080 = memref.load %arg1[%c2_830, %c19_831] : memref<8x24xf32, #tpu.memory_space<smem>>
    %1081 = vector.broadcast %1080 : f32 to vector<8x64xf32>
    %1082 = arith.mulf %1079, %1081 : vector<8x64xf32>
    %1083 = arith.addf %1077, %1082 : vector<8x64xf32>
    %c3_832 = arith.constant 3 : index
    %c0_833 = arith.constant 0 : index
    %c0_834 = arith.constant 0 : index
    %1084 = vector.load %arg0[%c3_832, %c0_833, %c0_834] : memref<8x8x64xf32, #tpu.memory_space<vmem>>, vector<1x8x64xf32>
    %1085 = vector.shape_cast %1084 : vector<1x8x64xf32> to vector<8x64xf32>
    %c3_835 = arith.constant 3 : index
    %c19_836 = arith.constant 19 : index
    %1086 = memref.load %arg1[%c3_835, %c19_836] : memref<8x24xf32, #tpu.memory_space<smem>>
    %1087 = vector.broadcast %1086 : f32 to vector<8x64xf32>
    %1088 = arith.mulf %1085, %1087 : vector<8x64xf32>
    %1089 = arith.addf %1083, %1088 : vector<8x64xf32>
    %c4_837 = arith.constant 4 : index
    %c0_838 = arith.constant 0 : index
    %c0_839 = arith.constant 0 : index
    %1090 = vector.load %arg0[%c4_837, %c0_838, %c0_839] : memref<8x8x64xf32, #tpu.memory_space<vmem>>, vector<1x8x64xf32>
    %1091 = vector.shape_cast %1090 : vector<1x8x64xf32> to vector<8x64xf32>
    %c4_840 = arith.constant 4 : index
    %c19_841 = arith.constant 19 : index
    %1092 = memref.load %arg1[%c4_840, %c19_841] : memref<8x24xf32, #tpu.memory_space<smem>>
    %1093 = vector.broadcast %1092 : f32 to vector<8x64xf32>
    %1094 = arith.mulf %1091, %1093 : vector<8x64xf32>
    %1095 = arith.addf %1089, %1094 : vector<8x64xf32>
    %c5_842 = arith.constant 5 : index
    %c0_843 = arith.constant 0 : index
    %c0_844 = arith.constant 0 : index
    %1096 = vector.load %arg0[%c5_842, %c0_843, %c0_844] : memref<8x8x64xf32, #tpu.memory_space<vmem>>, vector<1x8x64xf32>
    %1097 = vector.shape_cast %1096 : vector<1x8x64xf32> to vector<8x64xf32>
    %c5_845 = arith.constant 5 : index
    %c19_846 = arith.constant 19 : index
    %1098 = memref.load %arg1[%c5_845, %c19_846] : memref<8x24xf32, #tpu.memory_space<smem>>
    %1099 = vector.broadcast %1098 : f32 to vector<8x64xf32>
    %1100 = arith.mulf %1097, %1099 : vector<8x64xf32>
    %1101 = arith.addf %1095, %1100 : vector<8x64xf32>
    %c6_847 = arith.constant 6 : index
    %c0_848 = arith.constant 0 : index
    %c0_849 = arith.constant 0 : index
    %1102 = vector.load %arg0[%c6_847, %c0_848, %c0_849] : memref<8x8x64xf32, #tpu.memory_space<vmem>>, vector<1x8x64xf32>
    %1103 = vector.shape_cast %1102 : vector<1x8x64xf32> to vector<8x64xf32>
    %c6_850 = arith.constant 6 : index
    %c19_851 = arith.constant 19 : index
    %1104 = memref.load %arg1[%c6_850, %c19_851] : memref<8x24xf32, #tpu.memory_space<smem>>
    %1105 = vector.broadcast %1104 : f32 to vector<8x64xf32>
    %1106 = arith.mulf %1103, %1105 : vector<8x64xf32>
    %1107 = arith.addf %1101, %1106 : vector<8x64xf32>
    %c7_852 = arith.constant 7 : index
    %c0_853 = arith.constant 0 : index
    %c0_854 = arith.constant 0 : index
    %1108 = vector.load %arg0[%c7_852, %c0_853, %c0_854] : memref<8x8x64xf32, #tpu.memory_space<vmem>>, vector<1x8x64xf32>
    %1109 = vector.shape_cast %1108 : vector<1x8x64xf32> to vector<8x64xf32>
    %c7_855 = arith.constant 7 : index
    %c19_856 = arith.constant 19 : index
    %1110 = memref.load %arg1[%c7_855, %c19_856] : memref<8x24xf32, #tpu.memory_space<smem>>
    %1111 = vector.broadcast %1110 : f32 to vector<8x64xf32>
    %1112 = arith.mulf %1109, %1111 : vector<8x64xf32>
    %1113 = arith.addf %1107, %1112 : vector<8x64xf32>
    %cst_857 = arith.constant 0.000000e+00 : f32
    %1114 = vector.broadcast %cst_857 : f32 to vector<8x64xf32>
    %1115 = arith.cmpf oge, %1113, %1114 : vector<8x64xf32>
    %cst_858 = arith.constant 0.00999999977 : f32
    %1116 = vector.broadcast %cst_858 : f32 to vector<8x64xf32>
    %1117 = arith.mulf %1116, %1113 : vector<8x64xf32>
    %1118 = arith.select %1115, %1113, %1117 : vector<8x64xi1>, vector<8x64xf32>
    %c0_859 = arith.constant 0 : index
    %c1216 = arith.constant 1216 : index
    %1119 = vector.load %arg10[%c0_859, %c1216] : memref<8x1536xf32, #tpu.memory_space<vmem>>, vector<8x64xf32>
    tpu.vector_store %arg10[%c0_859, %c1216], %1118 {strides = array<i32>} : memref<8x1536xf32, #tpu.memory_space<vmem>>, vector<8x64xf32>,
    %c0_860 = arith.constant 0 : index
    %c0_861 = arith.constant 0 : index
    %c0_862 = arith.constant 0 : index
    %1120 = vector.load %arg0[%c0_860, %c0_861, %c0_862] : memref<8x8x64xf32, #tpu.memory_space<vmem>>, vector<1x8x64xf32>
    %1121 = vector.shape_cast %1120 : vector<1x8x64xf32> to vector<8x64xf32>
    %c0_863 = arith.constant 0 : index
    %c20 = arith.constant 20 : index
    %1122 = memref.load %arg1[%c0_863, %c20] : memref<8x24xf32, #tpu.memory_space<smem>>
    %1123 = vector.broadcast %1122 : f32 to vector<8x64xf32>
    %1124 = arith.mulf %1121, %1123 : vector<8x64xf32>
    %c20_864 = arith.constant 20 : index
    %1125 = memref.load %arg2[%c20_864] : memref<24xf32, #tpu.memory_space<smem>>
    %1126 = vector.broadcast %1125 : f32 to vector<8x64xf32>
    %1127 = arith.addf %1124, %1126 : vector<8x64xf32>
    %c1_865 = arith.constant 1 : index
    %c0_866 = arith.constant 0 : index
    %c0_867 = arith.constant 0 : index
    %1128 = vector.load %arg0[%c1_865, %c0_866, %c0_867] : memref<8x8x64xf32, #tpu.memory_space<vmem>>, vector<1x8x64xf32>
    %1129 = vector.shape_cast %1128 : vector<1x8x64xf32> to vector<8x64xf32>
    %c1_868 = arith.constant 1 : index
    %c20_869 = arith.constant 20 : index
    %1130 = memref.load %arg1[%c1_868, %c20_869] : memref<8x24xf32, #tpu.memory_space<smem>>
    %1131 = vector.broadcast %1130 : f32 to vector<8x64xf32>
    %1132 = arith.mulf %1129, %1131 : vector<8x64xf32>
    %1133 = arith.addf %1127, %1132 : vector<8x64xf32>
    %c2_870 = arith.constant 2 : index
    %c0_871 = arith.constant 0 : index
    %c0_872 = arith.constant 0 : index
    %1134 = vector.load %arg0[%c2_870, %c0_871, %c0_872] : memref<8x8x64xf32, #tpu.memory_space<vmem>>, vector<1x8x64xf32>
    %1135 = vector.shape_cast %1134 : vector<1x8x64xf32> to vector<8x64xf32>
    %c2_873 = arith.constant 2 : index
    %c20_874 = arith.constant 20 : index
    %1136 = memref.load %arg1[%c2_873, %c20_874] : memref<8x24xf32, #tpu.memory_space<smem>>
    %1137 = vector.broadcast %1136 : f32 to vector<8x64xf32>
    %1138 = arith.mulf %1135, %1137 : vector<8x64xf32>
    %1139 = arith.addf %1133, %1138 : vector<8x64xf32>
    %c3_875 = arith.constant 3 : index
    %c0_876 = arith.constant 0 : index
    %c0_877 = arith.constant 0 : index
    %1140 = vector.load %arg0[%c3_875, %c0_876, %c0_877] : memref<8x8x64xf32, #tpu.memory_space<vmem>>, vector<1x8x64xf32>
    %1141 = vector.shape_cast %1140 : vector<1x8x64xf32> to vector<8x64xf32>
    %c3_878 = arith.constant 3 : index
    %c20_879 = arith.constant 20 : index
    %1142 = memref.load %arg1[%c3_878, %c20_879] : memref<8x24xf32, #tpu.memory_space<smem>>
    %1143 = vector.broadcast %1142 : f32 to vector<8x64xf32>
    %1144 = arith.mulf %1141, %1143 : vector<8x64xf32>
    %1145 = arith.addf %1139, %1144 : vector<8x64xf32>
    %c4_880 = arith.constant 4 : index
    %c0_881 = arith.constant 0 : index
    %c0_882 = arith.constant 0 : index
    %1146 = vector.load %arg0[%c4_880, %c0_881, %c0_882] : memref<8x8x64xf32, #tpu.memory_space<vmem>>, vector<1x8x64xf32>
    %1147 = vector.shape_cast %1146 : vector<1x8x64xf32> to vector<8x64xf32>
    %c4_883 = arith.constant 4 : index
    %c20_884 = arith.constant 20 : index
    %1148 = memref.load %arg1[%c4_883, %c20_884] : memref<8x24xf32, #tpu.memory_space<smem>>
    %1149 = vector.broadcast %1148 : f32 to vector<8x64xf32>
    %1150 = arith.mulf %1147, %1149 : vector<8x64xf32>
    %1151 = arith.addf %1145, %1150 : vector<8x64xf32>
    %c5_885 = arith.constant 5 : index
    %c0_886 = arith.constant 0 : index
    %c0_887 = arith.constant 0 : index
    %1152 = vector.load %arg0[%c5_885, %c0_886, %c0_887] : memref<8x8x64xf32, #tpu.memory_space<vmem>>, vector<1x8x64xf32>
    %1153 = vector.shape_cast %1152 : vector<1x8x64xf32> to vector<8x64xf32>
    %c5_888 = arith.constant 5 : index
    %c20_889 = arith.constant 20 : index
    %1154 = memref.load %arg1[%c5_888, %c20_889] : memref<8x24xf32, #tpu.memory_space<smem>>
    %1155 = vector.broadcast %1154 : f32 to vector<8x64xf32>
    %1156 = arith.mulf %1153, %1155 : vector<8x64xf32>
    %1157 = arith.addf %1151, %1156 : vector<8x64xf32>
    %c6_890 = arith.constant 6 : index
    %c0_891 = arith.constant 0 : index
    %c0_892 = arith.constant 0 : index
    %1158 = vector.load %arg0[%c6_890, %c0_891, %c0_892] : memref<8x8x64xf32, #tpu.memory_space<vmem>>, vector<1x8x64xf32>
    %1159 = vector.shape_cast %1158 : vector<1x8x64xf32> to vector<8x64xf32>
    %c6_893 = arith.constant 6 : index
    %c20_894 = arith.constant 20 : index
    %1160 = memref.load %arg1[%c6_893, %c20_894] : memref<8x24xf32, #tpu.memory_space<smem>>
    %1161 = vector.broadcast %1160 : f32 to vector<8x64xf32>
    %1162 = arith.mulf %1159, %1161 : vector<8x64xf32>
    %1163 = arith.addf %1157, %1162 : vector<8x64xf32>
    %c7_895 = arith.constant 7 : index
    %c0_896 = arith.constant 0 : index
    %c0_897 = arith.constant 0 : index
    %1164 = vector.load %arg0[%c7_895, %c0_896, %c0_897] : memref<8x8x64xf32, #tpu.memory_space<vmem>>, vector<1x8x64xf32>
    %1165 = vector.shape_cast %1164 : vector<1x8x64xf32> to vector<8x64xf32>
    %c7_898 = arith.constant 7 : index
    %c20_899 = arith.constant 20 : index
    %1166 = memref.load %arg1[%c7_898, %c20_899] : memref<8x24xf32, #tpu.memory_space<smem>>
    %1167 = vector.broadcast %1166 : f32 to vector<8x64xf32>
    %1168 = arith.mulf %1165, %1167 : vector<8x64xf32>
    %1169 = arith.addf %1163, %1168 : vector<8x64xf32>
    %cst_900 = arith.constant 0.000000e+00 : f32
    %1170 = vector.broadcast %cst_900 : f32 to vector<8x64xf32>
    %1171 = arith.cmpf oge, %1169, %1170 : vector<8x64xf32>
    %cst_901 = arith.constant 0.00999999977 : f32
    %1172 = vector.broadcast %cst_901 : f32 to vector<8x64xf32>
    %1173 = arith.mulf %1172, %1169 : vector<8x64xf32>
    %1174 = arith.select %1171, %1169, %1173 : vector<8x64xi1>, vector<8x64xf32>
    %c0_902 = arith.constant 0 : index
    %c1280 = arith.constant 1280 : index
    %1175 = vector.load %arg10[%c0_902, %c1280] : memref<8x1536xf32, #tpu.memory_space<vmem>>, vector<8x64xf32>
    tpu.vector_store %arg10[%c0_902, %c1280], %1174 {strides = array<i32>} : memref<8x1536xf32, #tpu.memory_space<vmem>>, vector<8x64xf32>,
    %c0_903 = arith.constant 0 : index
    %c0_904 = arith.constant 0 : index
    %c0_905 = arith.constant 0 : index
    %1176 = vector.load %arg0[%c0_903, %c0_904, %c0_905] : memref<8x8x64xf32, #tpu.memory_space<vmem>>, vector<1x8x64xf32>
    %1177 = vector.shape_cast %1176 : vector<1x8x64xf32> to vector<8x64xf32>
    %c0_906 = arith.constant 0 : index
    %c21 = arith.constant 21 : index
    %1178 = memref.load %arg1[%c0_906, %c21] : memref<8x24xf32, #tpu.memory_space<smem>>
    %1179 = vector.broadcast %1178 : f32 to vector<8x64xf32>
    %1180 = arith.mulf %1177, %1179 : vector<8x64xf32>
    %c21_907 = arith.constant 21 : index
    %1181 = memref.load %arg2[%c21_907] : memref<24xf32, #tpu.memory_space<smem>>
    %1182 = vector.broadcast %1181 : f32 to vector<8x64xf32>
    %1183 = arith.addf %1180, %1182 : vector<8x64xf32>
    %c1_908 = arith.constant 1 : index
    %c0_909 = arith.constant 0 : index
    %c0_910 = arith.constant 0 : index
    %1184 = vector.load %arg0[%c1_908, %c0_909, %c0_910] : memref<8x8x64xf32, #tpu.memory_space<vmem>>, vector<1x8x64xf32>
    %1185 = vector.shape_cast %1184 : vector<1x8x64xf32> to vector<8x64xf32>
    %c1_911 = arith.constant 1 : index
    %c21_912 = arith.constant 21 : index
    %1186 = memref.load %arg1[%c1_911, %c21_912] : memref<8x24xf32, #tpu.memory_space<smem>>
    %1187 = vector.broadcast %1186 : f32 to vector<8x64xf32>
    %1188 = arith.mulf %1185, %1187 : vector<8x64xf32>
    %1189 = arith.addf %1183, %1188 : vector<8x64xf32>
    %c2_913 = arith.constant 2 : index
    %c0_914 = arith.constant 0 : index
    %c0_915 = arith.constant 0 : index
    %1190 = vector.load %arg0[%c2_913, %c0_914, %c0_915] : memref<8x8x64xf32, #tpu.memory_space<vmem>>, vector<1x8x64xf32>
    %1191 = vector.shape_cast %1190 : vector<1x8x64xf32> to vector<8x64xf32>
    %c2_916 = arith.constant 2 : index
    %c21_917 = arith.constant 21 : index
    %1192 = memref.load %arg1[%c2_916, %c21_917] : memref<8x24xf32, #tpu.memory_space<smem>>
    %1193 = vector.broadcast %1192 : f32 to vector<8x64xf32>
    %1194 = arith.mulf %1191, %1193 : vector<8x64xf32>
    %1195 = arith.addf %1189, %1194 : vector<8x64xf32>
    %c3_918 = arith.constant 3 : index
    %c0_919 = arith.constant 0 : index
    %c0_920 = arith.constant 0 : index
    %1196 = vector.load %arg0[%c3_918, %c0_919, %c0_920] : memref<8x8x64xf32, #tpu.memory_space<vmem>>, vector<1x8x64xf32>
    %1197 = vector.shape_cast %1196 : vector<1x8x64xf32> to vector<8x64xf32>
    %c3_921 = arith.constant 3 : index
    %c21_922 = arith.constant 21 : index
    %1198 = memref.load %arg1[%c3_921, %c21_922] : memref<8x24xf32, #tpu.memory_space<smem>>
    %1199 = vector.broadcast %1198 : f32 to vector<8x64xf32>
    %1200 = arith.mulf %1197, %1199 : vector<8x64xf32>
    %1201 = arith.addf %1195, %1200 : vector<8x64xf32>
    %c4_923 = arith.constant 4 : index
    %c0_924 = arith.constant 0 : index
    %c0_925 = arith.constant 0 : index
    %1202 = vector.load %arg0[%c4_923, %c0_924, %c0_925] : memref<8x8x64xf32, #tpu.memory_space<vmem>>, vector<1x8x64xf32>
    %1203 = vector.shape_cast %1202 : vector<1x8x64xf32> to vector<8x64xf32>
    %c4_926 = arith.constant 4 : index
    %c21_927 = arith.constant 21 : index
    %1204 = memref.load %arg1[%c4_926, %c21_927] : memref<8x24xf32, #tpu.memory_space<smem>>
    %1205 = vector.broadcast %1204 : f32 to vector<8x64xf32>
    %1206 = arith.mulf %1203, %1205 : vector<8x64xf32>
    %1207 = arith.addf %1201, %1206 : vector<8x64xf32>
    %c5_928 = arith.constant 5 : index
    %c0_929 = arith.constant 0 : index
    %c0_930 = arith.constant 0 : index
    %1208 = vector.load %arg0[%c5_928, %c0_929, %c0_930] : memref<8x8x64xf32, #tpu.memory_space<vmem>>, vector<1x8x64xf32>
    %1209 = vector.shape_cast %1208 : vector<1x8x64xf32> to vector<8x64xf32>
    %c5_931 = arith.constant 5 : index
    %c21_932 = arith.constant 21 : index
    %1210 = memref.load %arg1[%c5_931, %c21_932] : memref<8x24xf32, #tpu.memory_space<smem>>
    %1211 = vector.broadcast %1210 : f32 to vector<8x64xf32>
    %1212 = arith.mulf %1209, %1211 : vector<8x64xf32>
    %1213 = arith.addf %1207, %1212 : vector<8x64xf32>
    %c6_933 = arith.constant 6 : index
    %c0_934 = arith.constant 0 : index
    %c0_935 = arith.constant 0 : index
    %1214 = vector.load %arg0[%c6_933, %c0_934, %c0_935] : memref<8x8x64xf32, #tpu.memory_space<vmem>>, vector<1x8x64xf32>
    %1215 = vector.shape_cast %1214 : vector<1x8x64xf32> to vector<8x64xf32>
    %c6_936 = arith.constant 6 : index
    %c21_937 = arith.constant 21 : index
    %1216 = memref.load %arg1[%c6_936, %c21_937] : memref<8x24xf32, #tpu.memory_space<smem>>
    %1217 = vector.broadcast %1216 : f32 to vector<8x64xf32>
    %1218 = arith.mulf %1215, %1217 : vector<8x64xf32>
    %1219 = arith.addf %1213, %1218 : vector<8x64xf32>
    %c7_938 = arith.constant 7 : index
    %c0_939 = arith.constant 0 : index
    %c0_940 = arith.constant 0 : index
    %1220 = vector.load %arg0[%c7_938, %c0_939, %c0_940] : memref<8x8x64xf32, #tpu.memory_space<vmem>>, vector<1x8x64xf32>
    %1221 = vector.shape_cast %1220 : vector<1x8x64xf32> to vector<8x64xf32>
    %c7_941 = arith.constant 7 : index
    %c21_942 = arith.constant 21 : index
    %1222 = memref.load %arg1[%c7_941, %c21_942] : memref<8x24xf32, #tpu.memory_space<smem>>
    %1223 = vector.broadcast %1222 : f32 to vector<8x64xf32>
    %1224 = arith.mulf %1221, %1223 : vector<8x64xf32>
    %1225 = arith.addf %1219, %1224 : vector<8x64xf32>
    %cst_943 = arith.constant 0.000000e+00 : f32
    %1226 = vector.broadcast %cst_943 : f32 to vector<8x64xf32>
    %1227 = arith.cmpf oge, %1225, %1226 : vector<8x64xf32>
    %cst_944 = arith.constant 0.00999999977 : f32
    %1228 = vector.broadcast %cst_944 : f32 to vector<8x64xf32>
    %1229 = arith.mulf %1228, %1225 : vector<8x64xf32>
    %1230 = arith.select %1227, %1225, %1229 : vector<8x64xi1>, vector<8x64xf32>
    %c0_945 = arith.constant 0 : index
    %c1344 = arith.constant 1344 : index
    %1231 = vector.load %arg10[%c0_945, %c1344] : memref<8x1536xf32, #tpu.memory_space<vmem>>, vector<8x64xf32>
    tpu.vector_store %arg10[%c0_945, %c1344], %1230 {strides = array<i32>} : memref<8x1536xf32, #tpu.memory_space<vmem>>, vector<8x64xf32>,
    %c0_946 = arith.constant 0 : index
    %c0_947 = arith.constant 0 : index
    %c0_948 = arith.constant 0 : index
    %1232 = vector.load %arg0[%c0_946, %c0_947, %c0_948] : memref<8x8x64xf32, #tpu.memory_space<vmem>>, vector<1x8x64xf32>
    %1233 = vector.shape_cast %1232 : vector<1x8x64xf32> to vector<8x64xf32>
    %c0_949 = arith.constant 0 : index
    %c22 = arith.constant 22 : index
    %1234 = memref.load %arg1[%c0_949, %c22] : memref<8x24xf32, #tpu.memory_space<smem>>
    %1235 = vector.broadcast %1234 : f32 to vector<8x64xf32>
    %1236 = arith.mulf %1233, %1235 : vector<8x64xf32>
    %c22_950 = arith.constant 22 : index
    %1237 = memref.load %arg2[%c22_950] : memref<24xf32, #tpu.memory_space<smem>>
    %1238 = vector.broadcast %1237 : f32 to vector<8x64xf32>
    %1239 = arith.addf %1236, %1238 : vector<8x64xf32>
    %c1_951 = arith.constant 1 : index
    %c0_952 = arith.constant 0 : index
    %c0_953 = arith.constant 0 : index
    %1240 = vector.load %arg0[%c1_951, %c0_952, %c0_953] : memref<8x8x64xf32, #tpu.memory_space<vmem>>, vector<1x8x64xf32>
    %1241 = vector.shape_cast %1240 : vector<1x8x64xf32> to vector<8x64xf32>
    %c1_954 = arith.constant 1 : index
    %c22_955 = arith.constant 22 : index
    %1242 = memref.load %arg1[%c1_954, %c22_955] : memref<8x24xf32, #tpu.memory_space<smem>>
    %1243 = vector.broadcast %1242 : f32 to vector<8x64xf32>
    %1244 = arith.mulf %1241, %1243 : vector<8x64xf32>
    %1245 = arith.addf %1239, %1244 : vector<8x64xf32>
    %c2_956 = arith.constant 2 : index
    %c0_957 = arith.constant 0 : index
    %c0_958 = arith.constant 0 : index
    %1246 = vector.load %arg0[%c2_956, %c0_957, %c0_958] : memref<8x8x64xf32, #tpu.memory_space<vmem>>, vector<1x8x64xf32>
    %1247 = vector.shape_cast %1246 : vector<1x8x64xf32> to vector<8x64xf32>
    %c2_959 = arith.constant 2 : index
    %c22_960 = arith.constant 22 : index
    %1248 = memref.load %arg1[%c2_959, %c22_960] : memref<8x24xf32, #tpu.memory_space<smem>>
    %1249 = vector.broadcast %1248 : f32 to vector<8x64xf32>
    %1250 = arith.mulf %1247, %1249 : vector<8x64xf32>
    %1251 = arith.addf %1245, %1250 : vector<8x64xf32>
    %c3_961 = arith.constant 3 : index
    %c0_962 = arith.constant 0 : index
    %c0_963 = arith.constant 0 : index
    %1252 = vector.load %arg0[%c3_961, %c0_962, %c0_963] : memref<8x8x64xf32, #tpu.memory_space<vmem>>, vector<1x8x64xf32>
    %1253 = vector.shape_cast %1252 : vector<1x8x64xf32> to vector<8x64xf32>
    %c3_964 = arith.constant 3 : index
    %c22_965 = arith.constant 22 : index
    %1254 = memref.load %arg1[%c3_964, %c22_965] : memref<8x24xf32, #tpu.memory_space<smem>>
    %1255 = vector.broadcast %1254 : f32 to vector<8x64xf32>
    %1256 = arith.mulf %1253, %1255 : vector<8x64xf32>
    %1257 = arith.addf %1251, %1256 : vector<8x64xf32>
    %c4_966 = arith.constant 4 : index
    %c0_967 = arith.constant 0 : index
    %c0_968 = arith.constant 0 : index
    %1258 = vector.load %arg0[%c4_966, %c0_967, %c0_968] : memref<8x8x64xf32, #tpu.memory_space<vmem>>, vector<1x8x64xf32>
    %1259 = vector.shape_cast %1258 : vector<1x8x64xf32> to vector<8x64xf32>
    %c4_969 = arith.constant 4 : index
    %c22_970 = arith.constant 22 : index
    %1260 = memref.load %arg1[%c4_969, %c22_970] : memref<8x24xf32, #tpu.memory_space<smem>>
    %1261 = vector.broadcast %1260 : f32 to vector<8x64xf32>
    %1262 = arith.mulf %1259, %1261 : vector<8x64xf32>
    %1263 = arith.addf %1257, %1262 : vector<8x64xf32>
    %c5_971 = arith.constant 5 : index
    %c0_972 = arith.constant 0 : index
    %c0_973 = arith.constant 0 : index
    %1264 = vector.load %arg0[%c5_971, %c0_972, %c0_973] : memref<8x8x64xf32, #tpu.memory_space<vmem>>, vector<1x8x64xf32>
    %1265 = vector.shape_cast %1264 : vector<1x8x64xf32> to vector<8x64xf32>
    %c5_974 = arith.constant 5 : index
    %c22_975 = arith.constant 22 : index
    %1266 = memref.load %arg1[%c5_974, %c22_975] : memref<8x24xf32, #tpu.memory_space<smem>>
    %1267 = vector.broadcast %1266 : f32 to vector<8x64xf32>
    %1268 = arith.mulf %1265, %1267 : vector<8x64xf32>
    %1269 = arith.addf %1263, %1268 : vector<8x64xf32>
    %c6_976 = arith.constant 6 : index
    %c0_977 = arith.constant 0 : index
    %c0_978 = arith.constant 0 : index
    %1270 = vector.load %arg0[%c6_976, %c0_977, %c0_978] : memref<8x8x64xf32, #tpu.memory_space<vmem>>, vector<1x8x64xf32>
    %1271 = vector.shape_cast %1270 : vector<1x8x64xf32> to vector<8x64xf32>
    %c6_979 = arith.constant 6 : index
    %c22_980 = arith.constant 22 : index
    %1272 = memref.load %arg1[%c6_979, %c22_980] : memref<8x24xf32, #tpu.memory_space<smem>>
    %1273 = vector.broadcast %1272 : f32 to vector<8x64xf32>
    %1274 = arith.mulf %1271, %1273 : vector<8x64xf32>
    %1275 = arith.addf %1269, %1274 : vector<8x64xf32>
    %c7_981 = arith.constant 7 : index
    %c0_982 = arith.constant 0 : index
    %c0_983 = arith.constant 0 : index
    %1276 = vector.load %arg0[%c7_981, %c0_982, %c0_983] : memref<8x8x64xf32, #tpu.memory_space<vmem>>, vector<1x8x64xf32>
    %1277 = vector.shape_cast %1276 : vector<1x8x64xf32> to vector<8x64xf32>
    %c7_984 = arith.constant 7 : index
    %c22_985 = arith.constant 22 : index
    %1278 = memref.load %arg1[%c7_984, %c22_985] : memref<8x24xf32, #tpu.memory_space<smem>>
    %1279 = vector.broadcast %1278 : f32 to vector<8x64xf32>
    %1280 = arith.mulf %1277, %1279 : vector<8x64xf32>
    %1281 = arith.addf %1275, %1280 : vector<8x64xf32>
    %cst_986 = arith.constant 0.000000e+00 : f32
    %1282 = vector.broadcast %cst_986 : f32 to vector<8x64xf32>
    %1283 = arith.cmpf oge, %1281, %1282 : vector<8x64xf32>
    %cst_987 = arith.constant 0.00999999977 : f32
    %1284 = vector.broadcast %cst_987 : f32 to vector<8x64xf32>
    %1285 = arith.mulf %1284, %1281 : vector<8x64xf32>
    %1286 = arith.select %1283, %1281, %1285 : vector<8x64xi1>, vector<8x64xf32>
    %c0_988 = arith.constant 0 : index
    %c1408 = arith.constant 1408 : index
    %1287 = vector.load %arg10[%c0_988, %c1408] : memref<8x1536xf32, #tpu.memory_space<vmem>>, vector<8x64xf32>
    tpu.vector_store %arg10[%c0_988, %c1408], %1286 {strides = array<i32>} : memref<8x1536xf32, #tpu.memory_space<vmem>>, vector<8x64xf32>,
    %c0_989 = arith.constant 0 : index
    %c0_990 = arith.constant 0 : index
    %c0_991 = arith.constant 0 : index
    %1288 = vector.load %arg0[%c0_989, %c0_990, %c0_991] : memref<8x8x64xf32, #tpu.memory_space<vmem>>, vector<1x8x64xf32>
    %1289 = vector.shape_cast %1288 : vector<1x8x64xf32> to vector<8x64xf32>
    %c0_992 = arith.constant 0 : index
    %c23 = arith.constant 23 : index
    %1290 = memref.load %arg1[%c0_992, %c23] : memref<8x24xf32, #tpu.memory_space<smem>>
    %1291 = vector.broadcast %1290 : f32 to vector<8x64xf32>
    %1292 = arith.mulf %1289, %1291 : vector<8x64xf32>
    %c23_993 = arith.constant 23 : index
    %1293 = memref.load %arg2[%c23_993] : memref<24xf32, #tpu.memory_space<smem>>
    %1294 = vector.broadcast %1293 : f32 to vector<8x64xf32>
    %1295 = arith.addf %1292, %1294 : vector<8x64xf32>
    %c1_994 = arith.constant 1 : index
    %c0_995 = arith.constant 0 : index
    %c0_996 = arith.constant 0 : index
    %1296 = vector.load %arg0[%c1_994, %c0_995, %c0_996] : memref<8x8x64xf32, #tpu.memory_space<vmem>>, vector<1x8x64xf32>
    %1297 = vector.shape_cast %1296 : vector<1x8x64xf32> to vector<8x64xf32>
    %c1_997 = arith.constant 1 : index
    %c23_998 = arith.constant 23 : index
    %1298 = memref.load %arg1[%c1_997, %c23_998] : memref<8x24xf32, #tpu.memory_space<smem>>
    %1299 = vector.broadcast %1298 : f32 to vector<8x64xf32>
    %1300 = arith.mulf %1297, %1299 : vector<8x64xf32>
    %1301 = arith.addf %1295, %1300 : vector<8x64xf32>
    %c2_999 = arith.constant 2 : index
    %c0_1000 = arith.constant 0 : index
    %c0_1001 = arith.constant 0 : index
    %1302 = vector.load %arg0[%c2_999, %c0_1000, %c0_1001] : memref<8x8x64xf32, #tpu.memory_space<vmem>>, vector<1x8x64xf32>
    %1303 = vector.shape_cast %1302 : vector<1x8x64xf32> to vector<8x64xf32>
    %c2_1002 = arith.constant 2 : index
    %c23_1003 = arith.constant 23 : index
    %1304 = memref.load %arg1[%c2_1002, %c23_1003] : memref<8x24xf32, #tpu.memory_space<smem>>
    %1305 = vector.broadcast %1304 : f32 to vector<8x64xf32>
    %1306 = arith.mulf %1303, %1305 : vector<8x64xf32>
    %1307 = arith.addf %1301, %1306 : vector<8x64xf32>
    %c3_1004 = arith.constant 3 : index
    %c0_1005 = arith.constant 0 : index
    %c0_1006 = arith.constant 0 : index
    %1308 = vector.load %arg0[%c3_1004, %c0_1005, %c0_1006] : memref<8x8x64xf32, #tpu.memory_space<vmem>>, vector<1x8x64xf32>
    %1309 = vector.shape_cast %1308 : vector<1x8x64xf32> to vector<8x64xf32>
    %c3_1007 = arith.constant 3 : index
    %c23_1008 = arith.constant 23 : index
    %1310 = memref.load %arg1[%c3_1007, %c23_1008] : memref<8x24xf32, #tpu.memory_space<smem>>
    %1311 = vector.broadcast %1310 : f32 to vector<8x64xf32>
    %1312 = arith.mulf %1309, %1311 : vector<8x64xf32>
    %1313 = arith.addf %1307, %1312 : vector<8x64xf32>
    %c4_1009 = arith.constant 4 : index
    %c0_1010 = arith.constant 0 : index
    %c0_1011 = arith.constant 0 : index
    %1314 = vector.load %arg0[%c4_1009, %c0_1010, %c0_1011] : memref<8x8x64xf32, #tpu.memory_space<vmem>>, vector<1x8x64xf32>
    %1315 = vector.shape_cast %1314 : vector<1x8x64xf32> to vector<8x64xf32>
    %c4_1012 = arith.constant 4 : index
    %c23_1013 = arith.constant 23 : index
    %1316 = memref.load %arg1[%c4_1012, %c23_1013] : memref<8x24xf32, #tpu.memory_space<smem>>
    %1317 = vector.broadcast %1316 : f32 to vector<8x64xf32>
    %1318 = arith.mulf %1315, %1317 : vector<8x64xf32>
    %1319 = arith.addf %1313, %1318 : vector<8x64xf32>
    %c5_1014 = arith.constant 5 : index
    %c0_1015 = arith.constant 0 : index
    %c0_1016 = arith.constant 0 : index
    %1320 = vector.load %arg0[%c5_1014, %c0_1015, %c0_1016] : memref<8x8x64xf32, #tpu.memory_space<vmem>>, vector<1x8x64xf32>
    %1321 = vector.shape_cast %1320 : vector<1x8x64xf32> to vector<8x64xf32>
    %c5_1017 = arith.constant 5 : index
    %c23_1018 = arith.constant 23 : index
    %1322 = memref.load %arg1[%c5_1017, %c23_1018] : memref<8x24xf32, #tpu.memory_space<smem>>
    %1323 = vector.broadcast %1322 : f32 to vector<8x64xf32>
    %1324 = arith.mulf %1321, %1323 : vector<8x64xf32>
    %1325 = arith.addf %1319, %1324 : vector<8x64xf32>
    %c6_1019 = arith.constant 6 : index
    %c0_1020 = arith.constant 0 : index
    %c0_1021 = arith.constant 0 : index
    %1326 = vector.load %arg0[%c6_1019, %c0_1020, %c0_1021] : memref<8x8x64xf32, #tpu.memory_space<vmem>>, vector<1x8x64xf32>
    %1327 = vector.shape_cast %1326 : vector<1x8x64xf32> to vector<8x64xf32>
    %c6_1022 = arith.constant 6 : index
    %c23_1023 = arith.constant 23 : index
    %1328 = memref.load %arg1[%c6_1022, %c23_1023] : memref<8x24xf32, #tpu.memory_space<smem>>
    %1329 = vector.broadcast %1328 : f32 to vector<8x64xf32>
    %1330 = arith.mulf %1327, %1329 : vector<8x64xf32>
    %1331 = arith.addf %1325, %1330 : vector<8x64xf32>
    %c7_1024 = arith.constant 7 : index
    %c0_1025 = arith.constant 0 : index
    %c0_1026 = arith.constant 0 : index
    %1332 = vector.load %arg0[%c7_1024, %c0_1025, %c0_1026] : memref<8x8x64xf32, #tpu.memory_space<vmem>>, vector<1x8x64xf32>
    %1333 = vector.shape_cast %1332 : vector<1x8x64xf32> to vector<8x64xf32>
    %c7_1027 = arith.constant 7 : index
    %c23_1028 = arith.constant 23 : index
    %1334 = memref.load %arg1[%c7_1027, %c23_1028] : memref<8x24xf32, #tpu.memory_space<smem>>
    %1335 = vector.broadcast %1334 : f32 to vector<8x64xf32>
    %1336 = arith.mulf %1333, %1335 : vector<8x64xf32>
    %1337 = arith.addf %1331, %1336 : vector<8x64xf32>
    %cst_1029 = arith.constant 0.000000e+00 : f32
    %1338 = vector.broadcast %cst_1029 : f32 to vector<8x64xf32>
    %1339 = arith.cmpf oge, %1337, %1338 : vector<8x64xf32>
    %cst_1030 = arith.constant 0.00999999977 : f32
    %1340 = vector.broadcast %cst_1030 : f32 to vector<8x64xf32>
    %1341 = arith.mulf %1340, %1337 : vector<8x64xf32>
    %1342 = arith.select %1339, %1337, %1341 : vector<8x64xi1>, vector<8x64xf32>
    %c0_1031 = arith.constant 0 : index
    %c1472 = arith.constant 1472 : index
    %1343 = vector.load %arg10[%c0_1031, %c1472] : memref<8x1536xf32, #tpu.memory_space<vmem>>, vector<8x64xf32>
    tpu.vector_store %arg10[%c0_1031, %c1472], %1342 {strides = array<i32>} : memref<8x1536xf32, #tpu.memory_space<vmem>>, vector<8x64xf32>,
    %c0_1032 = arith.constant 0 : index
    %c0_1033 = arith.constant 0 : index
    %1344 = vector.load %arg10[%c0_1032, %c0_1033] : memref<8x1536xf32, #tpu.memory_space<vmem>>, vector<8x1536xf32>
    %1345 = arith.truncf %1344 : vector<8x1536xf32> to vector<8x1536xbf16>
    %c0_1034 = arith.constant 0 : index
    %c0_1035 = arith.constant 0 : index
    %1346 = vector.load %arg3[%c0_1034, %c0_1035] : memref<1536x256xbf16, #tpu.memory_space<vmem>>, vector<1536x256xbf16>
    %cst_1036 = arith.constant dense<0.000000e+00> : vector<8x256xf32>
    %1347 = tpu.matmul %1345, %1346, %cst_1036 {dimension_numbers = #tpu.dot_dimension_numbers<[1], [0], [0], [1], [0, 0, 1, 1], [], []>} : vector<8x1536xbf16>, vector<1536x256xbf16>, vector<8x256xf32> -> vector<8x256xf32>
    %c0_1037 = arith.constant 0 : index
    %c0_1038 = arith.constant 0 : index
    %1348 = vector.load %arg4[%c0_1037, %c0_1038] : memref<1x256xf32, #tpu.memory_space<vmem>>, vector<1x256xf32>
    %1349 = vector.broadcast %1348 : vector<1x256xf32> to vector<8x256xf32>
    %1350 = arith.addf %1347, %1349 : vector<8x256xf32>
    %cst_1039 = arith.constant 0.000000e+00 : f32
    %1351 = vector.broadcast %cst_1039 : f32 to vector<8x256xf32>
    %1352 = arith.cmpf oge, %1350, %1351 : vector<8x256xf32>
    %cst_1040 = arith.constant 0.00999999977 : f32
    %1353 = vector.broadcast %cst_1040 : f32 to vector<8x256xf32>
    %1354 = arith.mulf %1353, %1350 : vector<8x256xf32>
    %1355 = arith.select %1352, %1350, %1354 : vector<8x256xi1>, vector<8x256xf32>
    %1356 = arith.truncf %1355 : vector<8x256xf32> to vector<8x256xbf16>
    %c0_1041 = arith.constant 0 : index
    %c0_1042 = arith.constant 0 : index
    %1357 = vector.load %arg5[%c0_1041, %c0_1042] : memref<256x128xbf16, #tpu.memory_space<vmem>>, vector<256x128xbf16>
    %cst_1043 = arith.constant dense<0.000000e+00> : vector<8x128xf32>
    %1358 = tpu.matmul %1356, %1357, %cst_1043 {dimension_numbers = #tpu.dot_dimension_numbers<[1], [0], [0], [1], [0, 0, 1, 1], [], []>} : vector<8x256xbf16>, vector<256x128xbf16>, vector<8x128xf32> -> vector<8x128xf32>
    %c0_1044 = arith.constant 0 : index
    %c0_1045 = arith.constant 0 : index
    %1359 = vector.load %arg6[%c0_1044, %c0_1045] : memref<1x128xf32, #tpu.memory_space<vmem>>, vector<1x128xf32>
    %1360 = vector.broadcast %1359 : vector<1x128xf32> to vector<8x128xf32>
    %1361 = arith.addf %1358, %1360 : vector<8x128xf32>
    %cst_1046 = arith.constant 0.000000e+00 : f32
    %1362 = vector.broadcast %cst_1046 : f32 to vector<8x128xf32>
    %1363 = arith.cmpf oge, %1361, %1362 : vector<8x128xf32>
    %cst_1047 = arith.constant 0.00999999977 : f32
    %1364 = vector.broadcast %cst_1047 : f32 to vector<8x128xf32>
    %1365 = arith.mulf %1364, %1361 : vector<8x128xf32>
    %1366 = arith.select %1363, %1361, %1365 : vector<8x128xi1>, vector<8x128xf32>
    %1367 = arith.truncf %1366 : vector<8x128xf32> to vector<8x128xbf16>
    %c0_1048 = arith.constant 0 : index
    %c0_1049 = arith.constant 0 : index
    %1368 = vector.load %arg7[%c0_1048, %c0_1049] : memref<128x128xbf16, #tpu.memory_space<vmem>>, vector<128x128xbf16>
    %cst_1050 = arith.constant dense<0.000000e+00> : vector<8x128xf32>
    %1369 = tpu.matmul %1367, %1368, %cst_1050 {dimension_numbers = #tpu.dot_dimension_numbers<[1], [0], [0], [1], [0, 0, 1, 1], [], []>} : vector<8x128xbf16>, vector<128x128xbf16>, vector<8x128xf32> -> vector<8x128xf32>
    %c0_1051 = arith.constant 0 : index
    %c0_1052 = arith.constant 0 : index
    %1370 = vector.load %arg8[%c0_1051, %c0_1052] : memref<1x128xf32, #tpu.memory_space<vmem>>, vector<1x128xf32>
    %1371 = vector.broadcast %1370 : vector<1x128xf32> to vector<8x128xf32>
    %1372 = arith.addf %1369, %1371 : vector<8x128xf32>
    %c0_1053 = arith.constant 0 : index
    %c0_1054 = arith.constant 0 : index
    %1373 = vector.load %arg9[%c0_1053, %c0_1054] : memref<8x128xf32, #tpu.memory_space<vmem>>, vector<8x128xf32>
    tpu.vector_store %arg9[%c0_1053, %c0_1054], %1372 {strides = array<i32>} : memref<8x128xf32, #tpu.memory_space<vmem>>, vector<8x128xf32>,
    return
  }
}

</mosaic_0001>

<llo_original>
// kernel: network_forward.1
$region0: #{network_forward.1}
  #allocation0 [shape = 'u32[]', space=smem, size = 0x4, offset = 0x4, fixed_abs, tag = 'smem constant byte address 0x4 - core index']
  #allocation1 [shape = 'u32[144,128]{1,0:T(1,128)}', space=vmem, size = 0x12000, scoped, tag = 'internal scratch']
  #allocation2 [shape = 'f32[8,1536]{1,0:T(8,128)}', space=vmem, size = 0xc000, scoped, tag = 'scratch operand']
  %s0 = inlined_call_operand.vmem [shape: f32[8,8,64], index: 0, kind: input, shape index: {}]
  %s1 = inlined_call_operand.vmem [shape: f32[8,24], index: 1, kind: input, shape index: {}]
  %s2 = inlined_call_operand.vmem [shape: f32[24], index: 2, kind: input, shape index: {}]
  %s3 = inlined_call_operand.hbm [shape: bf16[1536,256], index: 3, kind: input, shape index: {}]
  %s4 = inlined_call_operand.vmem [shape: f32[1,256], index: 4, kind: input, shape index: {}]
  %s5 = inlined_call_operand.vmem [shape: bf16[256,128], index: 5, kind: input, shape index: {}]
  %s6 = inlined_call_operand.vmem [shape: f32[1,128], index: 6, kind: input, shape index: {}]
  %s7 = inlined_call_operand.vmem [shape: bf16[128,128], index: 7, kind: input, shape index: {}]
  %s8 = inlined_call_operand.vmem [shape: f32[1,128], index: 8, kind: input, shape index: {}]
  %s9 = inlined_call_operand.vmem [shape: f32[8,128], index: 9, kind: output, shape index: {}]
  %s10 = sld [smem:[#allocation0]]
  $region58: #{network_forward.1} parent=0
    _
  %s12 = ssub.s32 1, %s10
  %s13 = scalar_select 0, %s12, %s10
  $region1: #{network_forward.1} parent=0
    #allocation3 [shape = 'u8[4096]{0}', space=smem, size = 0x1000, scoped, tag = 'input window, operand 1, single buffered']
    #allocation4 [shape = 's32[1]{0}', space=sflag, size = 0x4, scoped, tag = 'scoped memory for network_forward.1']
    #allocation5 [shape = 's32[1]{0}', space=sflag, size = 0x4, scoped, tag = 'scoped memory for network_forward.1']
    #allocation6 [shape = 'u8[512]{0}', space=smem, size = 0x200, scoped, tag = 'input window, operand 2, single buffered']
    #allocation7 [shape = 's32[1]{0}', space=sflag, size = 0x4, scoped, tag = 'scoped memory for network_forward.1']
    #allocation8 [shape = 'u8[786432]{0}', space=vmem, size = 0xc0000, scoped, tag = 'input window, operand 3, single buffered']
    %14 = vsyncpa [#allocation5], 0
    %15 = vsyncpa [#allocation7], 0
    %16 = vsyncpa [#allocation4], 0
    // Predicated region
    $region2: #{network_forward.1} parent=1 // pred_check
      _
    $region3: #{network_forward.1} parent=1 // pred_check_branch
      %18 = sbr.rel (0) target = $region5
    $region4: #{network_forward.1} parent=1 // pred_region
      _
    $region5: #{network_forward.1} parent=1 // pred_fallthru
      _
    // Predicated region
    $region6: #{network_forward.1} parent=1 // pred_check
      _
    $region7: #{network_forward.1} parent=1 // pred_check_branch
      %20 = sbr.rel (0) target = $region9
    $region8: #{network_forward.1} parent=1 // pred_region
      %s22 = ssub.s32 128, 128
      %23 = vsyncadd [#allocation5], %s22
      %s25 = sshll.u32 %s1, 4
      %s26 = int_to_ptr.vmem [resolvable:$true] %s25
      %28 = dma.vmem_to_smem %s26, 128, [#allocation3], [#allocation5]
    $region9: #{network_forward.1} parent=1 // pred_fallthru
      _
    // Predicated region
    $region10: #{network_forward.1} parent=1 // pred_check
      _
    $region11: #{network_forward.1} parent=1 // pred_check_branch
      %30 = sbr.rel (0) target = $region13
    $region12: #{network_forward.1} parent=1 // pred_region
      %s32 = ssub.s32 16, 16
      %33 = vsyncadd [#allocation7], %s32
      %s35 = sshll.u32 %s2, 4
      %s36 = int_to_ptr.vmem [resolvable:$true] %s35
      %38 = dma.vmem_to_smem %s36, 16, [#allocation6], [#allocation7]
    $region13: #{network_forward.1} parent=1 // pred_fallthru
      _
    // Predicated region
    $region14: #{network_forward.1} parent=1 // pred_check
      _
    $region15: #{network_forward.1} parent=1 // pred_check_branch
      %40 = sbr.rel (0) target = $region17
    $region16: #{network_forward.1} parent=1 // pred_region
      %s42 = ssub.s32 24576, 24576
      %43 = vsyncadd [#allocation4], %s42
      %s44 = sshll.u32 [#allocation8], 4
      %s45 = int_to_ptr.vmem [resolvable:$true] %s44
      %50 = dma.hbm_to_vmem [thread:$0]  %s3, 24576, %s45, [#allocation4], 128, 128, 8
    $region17: #{network_forward.1} parent=1 // pred_fallthru
      _
    // Predicated region
    $region18: #{network_forward.1} parent=1 // pred_check
      _
    $region19: #{network_forward.1} parent=1 // pred_check_branch
      %52 = sbr.rel (0) target = $region21
    $region20: #{network_forward.1} parent=1 // pred_region
      _
    $region21: #{network_forward.1} parent=1 // pred_fallthru
      _
    // Predicated region
    $region22: #{network_forward.1} parent=1 // pred_check
      _
    $region23: #{network_forward.1} parent=1 // pred_check_branch
      %54 = sbr.rel (0) target = $region25
    $region24: #{network_forward.1} parent=1 // pred_region
      _
    $region25: #{network_forward.1} parent=1 // pred_fallthru
      _
    // Predicated region
    $region26: #{network_forward.1} parent=1 // pred_check
      _
    $region27: #{network_forward.1} parent=1 // pred_check_branch
      %56 = sbr.rel (0) target = $region29
    $region28: #{network_forward.1} parent=1 // pred_region
      _
    $region29: #{network_forward.1} parent=1 // pred_fallthru
      _
    // Predicated region
    $region30: #{network_forward.1} parent=1 // pred_check
      _
    $region31: #{network_forward.1} parent=1 // pred_check_branch
      %58 = sbr.rel (0) target = $region33
    $region32: #{network_forward.1} parent=1 // pred_region
      _
    $region33: #{network_forward.1} parent=1 // pred_fallthru
      _
    // Predicated region
    $region34: #{network_forward.1} parent=1 // pred_check
      _
    $region35: #{network_forward.1} parent=1 // pred_check_branch
      %60 = sbr.rel (0) target = $region37
    $region36: #{network_forward.1} parent=1 // pred_region
      _
    $region37: #{network_forward.1} parent=1 // pred_fallthru
      _
    // Predicated region
    $region38: #{network_forward.1} parent=1 // pred_check
      _
    $region39: #{network_forward.1} parent=1 // pred_check_branch
      %62 = sbr.rel (0) target = $region41
    $region40: #{network_forward.1} parent=1 // pred_region
      %63 = dma.done [#allocation5], 128
    $region41: #{network_forward.1} parent=1 // pred_fallthru
      _
    // Predicated region
    $region42: #{network_forward.1} parent=1 // pred_check
      _
    $region43: #{network_forward.1} parent=1 // pred_check_branch
      %65 = sbr.rel (0) target = $region45
    $region44: #{network_forward.1} parent=1 // pred_region
      %66 = dma.done [#allocation7], 16
    $region45: #{network_forward.1} parent=1 // pred_fallthru
      _
    // Predicated region
    $region46: #{network_forward.1} parent=1 // pred_check
      _
    $region47: #{network_forward.1} parent=1 // pred_check_branch
      %68 = sbr.rel (0) target = $region49
    $region48: #{network_forward.1} parent=1 // pred_region
      %69 = dma.done [#allocation4], 24576
    $region49: #{network_forward.1} parent=1 // pred_fallthru
      _
    %70 = sfence
    %v72 = vld [vmem:[%s0] sm:$0xff]
    %s73 = sld [smem:[#allocation3]]
    %v74 = vstv %s73
    %v75 = vmul.f32 %v72, %v74
    %s76 = sld [smem:[#allocation6]]
    %v77 = vstv %s76
    %v78 = vadd.f32 %v75, %v77
    %s79 = scalar_lea.vmem %s0, 8
    %v80 = vld [vmem:[%s79] sm:$0xff]
    %s81 = sld [smem:[#allocation3 + $0x80]]
    %v82 = vstv %s81
    %v83 = vmul.f32 %v80, %v82
    %v84 = vadd.f32 %v78, %v83
    %s85 = scalar_lea.vmem %s0, 16
    %v86 = vld [vmem:[%s85] sm:$0xff]
    %s87 = sld [smem:[#allocation3 + $0x100]]
    %v88 = vstv %s87
    %v89 = vmul.f32 %v86, %v88
    %v90 = vadd.f32 %v84, %v89
    %s91 = scalar_lea.vmem %s0, 24
    %v92 = vld [vmem:[%s91] sm:$0xff]
    %s93 = sld [smem:[#allocation3 + $0x180]]
    %v94 = vstv %s93
    %v95 = vmul.f32 %v92, %v94
    %v96 = vadd.f32 %v90, %v95
    %s97 = scalar_lea.vmem %s0, 32
    %v98 = vld [vmem:[%s97] sm:$0xff]
    %s99 = sld [smem:[#allocation3 + $0x200]]
    %v100 = vstv %s99
    %v101 = vmul.f32 %v98, %v100
    %v102 = vadd.f32 %v96, %v101
    %s103 = scalar_lea.vmem %s0, 40
    %v104 = vld [vmem:[%s103] sm:$0xff]
    %s105 = sld [smem:[#allocation3 + $0x280]]
    %v106 = vstv %s105
    %v107 = vmul.f32 %v104, %v106
    %v108 = vadd.f32 %v102, %v107
    %s109 = scalar_lea.vmem %s0, 48
    %v110 = vld [vmem:[%s109] sm:$0xff]
    %s111 = sld [smem:[#allocation3 + $0x300]]
    %v112 = vstv %s111
    %v113 = vmul.f32 %v110, %v112
    %v114 = vadd.f32 %v108, %v113
    %s115 = scalar_lea.vmem %s0, 56
    %v116 = vld [vmem:[%s115] sm:$0xff]
    %s117 = sld [smem:[#allocation3 + $0x380]]
    %v118 = vstv %s117
    %v119 = vmul.f32 %v116, %v118
    %v120 = vadd.f32 %v114, %v119
    %vm121 = vcmp.ge.f32.partialorder %v120, 0.0
    %v122 = vmul.f32 %v120, 0.01
    %v123 = vsel %vm121, %v120, %v122
    %vm124 = vcmask 523264
    %125 = vst.msk [vmem:[#allocation2] sm:$0xff] %vm124, %v123
    %v126 = vld [vmem:[%s0] sm:$0xff]
    %s127 = sld [smem:[#allocation3 + $0x1]]
    %v128 = vstv %s127
    %v129 = vmul.f32 %v126, %v128
    %s130 = sld [smem:[#allocation6 + $0x1]]
    %v131 = vstv %s130
    %v132 = vadd.f32 %v129, %v131
    %v133 = vld [vmem:[%s79] sm:$0xff]
    %s134 = sld [smem:[#allocation3 + $0x81]]
    %v135 = vstv %s134
    %v136 = vmul.f32 %v133, %v135
    %v137 = vadd.f32 %v132, %v136
    %v138 = vld [vmem:[%s85] sm:$0xff]
    %s139 = sld [smem:[#allocation3 + $0x101]]
    %v140 = vstv %s139
    %v141 = vmul.f32 %v138, %v140
    %v142 = vadd.f32 %v137, %v141
    %v143 = vld [vmem:[%s91] sm:$0xff]
    %s144 = sld [smem:[#allocation3 + $0x181]]
    %v145 = vstv %s144
    %v146 = vmul.f32 %v143, %v145
    %v147 = vadd.f32 %v142, %v146
    %v148 = vld [vmem:[%s97] sm:$0xff]
    %s149 = sld [smem:[#allocation3 + $0x201]]
    %v150 = vstv %s149
    %v151 = vmul.f32 %v148, %v150
    %v152 = vadd.f32 %v147, %v151
    %v153 = vld [vmem:[%s103] sm:$0xff]
    %s154 = sld [smem:[#allocation3 + $0x281]]
    %v155 = vstv %s154
    %v156 = vmul.f32 %v153, %v155
    %v157 = vadd.f32 %v152, %v156
    %v158 = vld [vmem:[%s109] sm:$0xff]
    %s159 = sld [smem:[#allocation3 + $0x301]]
    %v160 = vstv %s159
    %v161 = vmul.f32 %v158, %v160
    %v162 = vadd.f32 %v157, %v161
    %v163 = vld [vmem:[%s115] sm:$0xff]
    %s164 = sld [smem:[#allocation3 + $0x381]]
    %v165 = vstv %s164
    %v166 = vmul.f32 %v163, %v165
    %v167 = vadd.f32 %v162, %v166
    %vm168 = vcmp.ge.f32.partialorder %v167, 0.0
    %v169 = vmul.f32 %v167, 0.01
    %v170 = vsel %vm168, %v167, %v169
    %172 = vrot.lane.b32.xlu0 %v170, 64
    %v173 = vpop.permute.xlu0 %172
    %vm175 = vcmask 1048064
    %176 = vst.msk [vmem:[#allocation2] sm:$0xff] %vm175, %v173
    %v177 = vld [vmem:[%s0] sm:$0xff]
    %s178 = sld [smem:[#allocation3 + $0x2]]
    %v179 = vstv %s178
    %v180 = vmul.f32 %v177, %v179
    %s181 = sld [smem:[#allocation6 + $0x2]]
    %v182 = vstv %s181
    %v183 = vadd.f32 %v180, %v182
    %v184 = vld [vmem:[%s79] sm:$0xff]
    %s185 = sld [smem:[#allocation3 + $0x82]]
    %v186 = vstv %s185
    %v187 = vmul.f32 %v184, %v186
    %v188 = vadd.f32 %v183, %v187
    %v189 = vld [vmem:[%s85] sm:$0xff]
    %s190 = sld [smem:[#allocation3 + $0x102]]
    %v191 = vstv %s190
    %v192 = vmul.f32 %v189, %v191
    %v193 = vadd.f32 %v188, %v192
    %v194 = vld [vmem:[%s91] sm:$0xff]
    %s195 = sld [smem:[#allocation3 + $0x182]]
    %v196 = vstv %s195
    %v197 = vmul.f32 %v194, %v196
    %v198 = vadd.f32 %v193, %v197
    %v199 = vld [vmem:[%s97] sm:$0xff]
    %s200 = sld [smem:[#allocation3 + $0x202]]
    %v201 = vstv %s200
    %v202 = vmul.f32 %v199, %v201
    %v203 = vadd.f32 %v198, %v202
    %v204 = vld [vmem:[%s103] sm:$0xff]
    %s205 = sld [smem:[#allocation3 + $0x282]]
    %v206 = vstv %s205
    %v207 = vmul.f32 %v204, %v206
    %v208 = vadd.f32 %v203, %v207
    %v209 = vld [vmem:[%s109] sm:$0xff]
    %s210 = sld [smem:[#allocation3 + $0x302]]
    %v211 = vstv %s210
    %v212 = vmul.f32 %v209, %v211
    %v213 = vadd.f32 %v208, %v212
    %v214 = vld [vmem:[%s115] sm:$0xff]
    %s215 = sld [smem:[#allocation3 + $0x382]]
    %v216 = vstv %s215
    %v217 = vmul.f32 %v214, %v216
    %v218 = vadd.f32 %v213, %v217
    %vm219 = vcmp.ge.f32.partialorder %v218, 0.0
    %v220 = vmul.f32 %v218, 0.01
    %v221 = vsel %vm219, %v218, %v220
    %222 = vst.msk [vmem:[#allocation2 + $0x8] sm:$0xff] %vm124, %v221
    %v223 = vld [vmem:[%s0] sm:$0xff]
    %s224 = sld [smem:[#allocation3 + $0x3]]
    %v225 = vstv %s224
    %v226 = vmul.f32 %v223, %v225
    %s227 = sld [smem:[#allocation6 + $0x3]]
    %v228 = vstv %s227
    %v229 = vadd.f32 %v226, %v228
    %v230 = vld [vmem:[%s79] sm:$0xff]
    %s231 = sld [smem:[#allocation3 + $0x83]]
    %v232 = vstv %s231
    %v233 = vmul.f32 %v230, %v232
    %v234 = vadd.f32 %v229, %v233
    %v235 = vld [vmem:[%s85] sm:$0xff]
    %s236 = sld [smem:[#allocation3 + $0x103]]
    %v237 = vstv %s236
    %v238 = vmul.f32 %v235, %v237
    %v239 = vadd.f32 %v234, %v238
    %v240 = vld [vmem:[%s91] sm:$0xff]
    %s241 = sld [smem:[#allocation3 + $0x183]]
    %v242 = vstv %s241
    %v243 = vmul.f32 %v240, %v242
    %v244 = vadd.f32 %v239, %v243
    %v245 = vld [vmem:[%s97] sm:$0xff]
    %s246 = sld [smem:[#allocation3 + $0x203]]
    %v247 = vstv %s246
    %v248 = vmul.f32 %v245, %v247
    %v249 = vadd.f32 %v244, %v248
    %v250 = vld [vmem:[%s103] sm:$0xff]
    %s251 = sld [smem:[#allocation3 + $0x283]]
    %v252 = vstv %s251
    %v253 = vmul.f32 %v250, %v252
    %v254 = vadd.f32 %v249, %v253
    %v255 = vld [vmem:[%s109] sm:$0xff]
    %s256 = sld [smem:[#allocation3 + $0x303]]
    %v257 = vstv %s256
    %v258 = vmul.f32 %v255, %v257
    %v259 = vadd.f32 %v254, %v258
    %v260 = vld [vmem:[%s115] sm:$0xff]
    %s261 = sld [smem:[#allocation3 + $0x383]]
    %v262 = vstv %s261
    %v263 = vmul.f32 %v260, %v262
    %v264 = vadd.f32 %v259, %v263
    %vm265 = vcmp.ge.f32.partialorder %v264, 0.0
    %v266 = vmul.f32 %v264, 0.01
    %v267 = vsel %vm265, %v264, %v266
    %269 = vrot.lane.b32.xlu0 %v267, 64
    %v270 = vpop.permute.xlu0 %269
    %272 = vst.msk [vmem:[#allocation2 + $0x8] sm:$0xff] %vm175, %v270
    %v273 = vld [vmem:[%s0] sm:$0xff]
    %s274 = sld [smem:[#allocation3 + $0x4]]
    %v275 = vstv %s274
    %v276 = vmul.f32 %v273, %v275
    %s277 = sld [smem:[#allocation6 + $0x4]]
    %v278 = vstv %s277
    %v279 = vadd.f32 %v276, %v278
    %v280 = vld [vmem:[%s79] sm:$0xff]
    %s281 = sld [smem:[#allocation3 + $0x84]]
    %v282 = vstv %s281
    %v283 = vmul.f32 %v280, %v282
    %v284 = vadd.f32 %v279, %v283
    %v285 = vld [vmem:[%s85] sm:$0xff]
    %s286 = sld [smem:[#allocation3 + $0x104]]
    %v287 = vstv %s286
    %v288 = vmul.f32 %v285, %v287
    %v289 = vadd.f32 %v284, %v288
    %v290 = vld [vmem:[%s91] sm:$0xff]
    %s291 = sld [smem:[#allocation3 + $0x184]]
    %v292 = vstv %s291
    %v293 = vmul.f32 %v290, %v292
    %v294 = vadd.f32 %v289, %v293
    %v295 = vld [vmem:[%s97] sm:$0xff]
    %s296 = sld [smem:[#allocation3 + $0x204]]
    %v297 = vstv %s296
    %v298 = vmul.f32 %v295, %v297
    %v299 = vadd.f32 %v294, %v298
    %v300 = vld [vmem:[%s103] sm:$0xff]
    %s301 = sld [smem:[#allocation3 + $0x284]]
    %v302 = vstv %s301
    %v303 = vmul.f32 %v300, %v302
    %v304 = vadd.f32 %v299, %v303
    %v305 = vld [vmem:[%s109] sm:$0xff]
    %s306 = sld [smem:[#allocation3 + $0x304]]
    %v307 = vstv %s306
    %v308 = vmul.f32 %v305, %v307
    %v309 = vadd.f32 %v304, %v308
    %v310 = vld [vmem:[%s115] sm:$0xff]
    %s311 = sld [smem:[#allocation3 + $0x384]]
    %v312 = vstv %s311
    %v313 = vmul.f32 %v310, %v312
    %v314 = vadd.f32 %v309, %v313
    %vm315 = vcmp.ge.f32.partialorder %v314, 0.0
    %v316 = vmul.f32 %v314, 0.01
    %v317 = vsel %vm315, %v314, %v316
    %318 = vst.msk [vmem:[#allocation2 + $0x10] sm:$0xff] %vm124, %v317
    %v319 = vld [vmem:[%s0] sm:$0xff]
    %s320 = sld [smem:[#allocation3 + $0x5]]
    %v321 = vstv %s320
    %v322 = vmul.f32 %v319, %v321
    %s323 = sld [smem:[#allocation6 + $0x5]]
    %v324 = vstv %s323
    %v325 = vadd.f32 %v322, %v324
    %v326 = vld [vmem:[%s79] sm:$0xff]
    %s327 = sld [smem:[#allocation3 + $0x85]]
    %v328 = vstv %s327
    %v329 = vmul.f32 %v326, %v328
    %v330 = vadd.f32 %v325, %v329
    %v331 = vld [vmem:[%s85] sm:$0xff]
    %s332 = sld [smem:[#allocation3 + $0x105]]
    %v333 = vstv %s332
    %v334 = vmul.f32 %v331, %v333
    %v335 = vadd.f32 %v330, %v334
    %v336 = vld [vmem:[%s91] sm:$0xff]
    %s337 = sld [smem:[#allocation3 + $0x185]]
    %v338 = vstv %s337
    %v339 = vmul.f32 %v336, %v338
    %v340 = vadd.f32 %v335, %v339
    %v341 = vld [vmem:[%s97] sm:$0xff]
    %s342 = sld [smem:[#allocation3 + $0x205]]
    %v343 = vstv %s342
    %v344 = vmul.f32 %v341, %v343
    %v345 = vadd.f32 %v340, %v344
    %v346 = vld [vmem:[%s103] sm:$0xff]
    %s347 = sld [smem:[#allocation3 + $0x285]]
    %v348 = vstv %s347
    %v349 = vmul.f32 %v346, %v348
    %v350 = vadd.f32 %v345, %v349
    %v351 = vld [vmem:[%s109] sm:$0xff]
    %s352 = sld [smem:[#allocation3 + $0x305]]
    %v353 = vstv %s352
    %v354 = vmul.f32 %v351, %v353
    %v355 = vadd.f32 %v350, %v354
    %v356 = vld [vmem:[%s115] sm:$0xff]
    %s357 = sld [smem:[#allocation3 + $0x385]]
    %v358 = vstv %s357
    %v359 = vmul.f32 %v356, %v358
    %v360 = vadd.f32 %v355, %v359
    %vm361 = vcmp.ge.f32.partialorder %v360, 0.0
    %v362 = vmul.f32 %v360, 0.01
    %v363 = vsel %vm361, %v360, %v362
    %365 = vrot.lane.b32.xlu0 %v363, 64
    %v366 = vpop.permute.xlu0 %365
    %368 = vst.msk [vmem:[#allocation2 + $0x10] sm:$0xff] %vm175, %v366
    %v369 = vld [vmem:[%s0] sm:$0xff]
    %s370 = sld [smem:[#allocation3 + $0x6]]
    %v371 = vstv %s370
    %v372 = vmul.f32 %v369, %v371
    %s373 = sld [smem:[#allocation6 + $0x6]]
    %v374 = vstv %s373
    %v375 = vadd.f32 %v372, %v374
    %v376 = vld [vmem:[%s79] sm:$0xff]
    %s377 = sld [smem:[#allocation3 + $0x86]]
    %v378 = vstv %s377
    %v379 = vmul.f32 %v376, %v378
    %v380 = vadd.f32 %v375, %v379
    %v381 = vld [vmem:[%s85] sm:$0xff]
    %s382 = sld [smem:[#allocation3 + $0x106]]
    %v383 = vstv %s382
    %v384 = vmul.f32 %v381, %v383
    %v385 = vadd.f32 %v380, %v384
    %v386 = vld [vmem:[%s91] sm:$0xff]
    %s387 = sld [smem:[#allocation3 + $0x186]]
    %v388 = vstv %s387
    %v389 = vmul.f32 %v386, %v388
    %v390 = vadd.f32 %v385, %v389
    %v391 = vld [vmem:[%s97] sm:$0xff]
    %s392 = sld [smem:[#allocation3 + $0x206]]
    %v393 = vstv %s392
    %v394 = vmul.f32 %v391, %v393
    %v395 = vadd.f32 %v390, %v394
    %v396 = vld [vmem:[%s103] sm:$0xff]
    %s397 = sld [smem:[#allocation3 + $0x286]]
    %v398 = vstv %s397
    %v399 = vmul.f32 %v396, %v398
    %v400 = vadd.f32 %v395, %v399
    %v401 = vld [vmem:[%s109] sm:$0xff]
    %s402 = sld [smem:[#allocation3 + $0x306]]
    %v403 = vstv %s402
    %v404 = vmul.f32 %v401, %v403
    %v405 = vadd.f32 %v400, %v404
    %v406 = vld [vmem:[%s115] sm:$0xff]
    %s407 = sld [smem:[#allocation3 + $0x386]]
    %v408 = vstv %s407
    %v409 = vmul.f32 %v406, %v408
    %v410 = vadd.f32 %v405, %v409
    %vm411 = vcmp.ge.f32.partialorder %v410, 0.0
    %v412 = vmul.f32 %v410, 0.01
    %v413 = vsel %vm411, %v410, %v412
    %414 = vst.msk [vmem:[#allocation2 + $0x18] sm:$0xff] %vm124, %v413
    %v415 = vld [vmem:[%s0] sm:$0xff]
    %s416 = sld [smem:[#allocation3 + $0x7]]
    %v417 = vstv %s416
    %v418 = vmul.f32 %v415, %v417
    %s419 = sld [smem:[#allocation6 + $0x7]]
    %v420 = vstv %s419
    %v421 = vadd.f32 %v418, %v420
    %v422 = vld [vmem:[%s79] sm:$0xff]
    %s423 = sld [smem:[#allocation3 + $0x87]]
    %v424 = vstv %s423
    %v425 = vmul.f32 %v422, %v424
    %v426 = vadd.f32 %v421, %v425
    %v427 = vld [vmem:[%s85] sm:$0xff]
    %s428 = sld [smem:[#allocation3 + $0x107]]
    %v429 = vstv %s428
    %v430 = vmul.f32 %v427, %v429
    %v431 = vadd.f32 %v426, %v430
    %v432 = vld [vmem:[%s91] sm:$0xff]
    %s433 = sld [smem:[#allocation3 + $0x187]]
    %v434 = vstv %s433
    %v435 = vmul.f32 %v432, %v434
    %v436 = vadd.f32 %v431, %v435
    %v437 = vld [vmem:[%s97] sm:$0xff]
    %s438 = sld [smem:[#allocation3 + $0x207]]
    %v439 = vstv %s438
    %v440 = vmul.f32 %v437, %v439
    %v441 = vadd.f32 %v436, %v440
    %v442 = vld [vmem:[%s103] sm:$0xff]
    %s443 = sld [smem:[#allocation3 + $0x287]]
    %v444 = vstv %s443
    %v445 = vmul.f32 %v442, %v444
    %v446 = vadd.f32 %v441, %v445
    %v447 = vld [vmem:[%s109] sm:$0xff]
    %s448 = sld [smem:[#allocation3 + $0x307]]
    %v449 = vstv %s448
    %v450 = vmul.f32 %v447, %v449
    %v451 = vadd.f32 %v446, %v450
    %v452 = vld [vmem:[%s115] sm:$0xff]
    %s453 = sld [smem:[#allocation3 + $0x387]]
    %v454 = vstv %s453
    %v455 = vmul.f32 %v452, %v454
    %v456 = vadd.f32 %v451, %v455
    %vm457 = vcmp.ge.f32.partialorder %v456, 0.0
    %v458 = vmul.f32 %v456, 0.01
    %v459 = vsel %vm457, %v456, %v458
    %461 = vrot.lane.b32.xlu0 %v459, 64
    %v462 = vpop.permute.xlu0 %461
    %464 = vst.msk [vmem:[#allocation2 + $0x18] sm:$0xff] %vm175, %v462
    %v465 = vld [vmem:[%s0] sm:$0xff]
    %s466 = sld [smem:[#allocation3 + $0x8]]
    %v467 = vstv %s466
    %v468 = vmul.f32 %v465, %v467
    %s469 = sld [smem:[#allocation6 + $0x8]]
    %v470 = vstv %s469
    %v471 = vadd.f32 %v468, %v470
    %v472 = vld [vmem:[%s79] sm:$0xff]
    %s473 = sld [smem:[#allocation3 + $0x88]]
    %v474 = vstv %s473
    %v475 = vmul.f32 %v472, %v474
    %v476 = vadd.f32 %v471, %v475
    %v477 = vld [vmem:[%s85] sm:$0xff]
    %s478 = sld [smem:[#allocation3 + $0x108]]
    %v479 = vstv %s478
    %v480 = vmul.f32 %v477, %v479
    %v481 = vadd.f32 %v476, %v480
    %v482 = vld [vmem:[%s91] sm:$0xff]
    %s483 = sld [smem:[#allocation3 + $0x188]]
    %v484 = vstv %s483
    %v485 = vmul.f32 %v482, %v484
    %v486 = vadd.f32 %v481, %v485
    %v487 = vld [vmem:[%s97] sm:$0xff]
    %s488 = sld [smem:[#allocation3 + $0x208]]
    %v489 = vstv %s488
    %v490 = vmul.f32 %v487, %v489
    %v491 = vadd.f32 %v486, %v490
    %v492 = vld [vmem:[%s103] sm:$0xff]
    %s493 = sld [smem:[#allocation3 + $0x288]]
    %v494 = vstv %s493
    %v495 = vmul.f32 %v492, %v494
    %v496 = vadd.f32 %v491, %v495
    %v497 = vld [vmem:[%s109] sm:$0xff]
    %s498 = sld [smem:[#allocation3 + $0x308]]
    %v499 = vstv %s498
    %v500 = vmul.f32 %v497, %v499
    %v501 = vadd.f32 %v496, %v500
    %v502 = vld [vmem:[%s115] sm:$0xff]
    %s503 = sld [smem:[#allocation3 + $0x388]]
    %v504 = vstv %s503
    %v505 = vmul.f32 %v502, %v504
    %v506 = vadd.f32 %v501, %v505
    %vm507 = vcmp.ge.f32.partialorder %v506, 0.0
    %v508 = vmul.f32 %v506, 0.01
    %v509 = vsel %vm507, %v506, %v508
    %510 = vst.msk [vmem:[#allocation2 + $0x20] sm:$0xff] %vm124, %v509
    %v511 = vld [vmem:[%s0] sm:$0xff]
    %s512 = sld [smem:[#allocation3 + $0x9]]
    %v513 = vstv %s512
    %v514 = vmul.f32 %v511, %v513
    %s515 = sld [smem:[#allocation6 + $0x9]]
    %v516 = vstv %s515
    %v517 = vadd.f32 %v514, %v516
    %v518 = vld [vmem:[%s79] sm:$0xff]
    %s519 = sld [smem:[#allocation3 + $0x89]]
    %v520 = vstv %s519
    %v521 = vmul.f32 %v518, %v520
    %v522 = vadd.f32 %v517, %v521
    %v523 = vld [vmem:[%s85] sm:$0xff]
    %s524 = sld [smem:[#allocation3 + $0x109]]
    %v525 = vstv %s524
    %v526 = vmul.f32 %v523, %v525
    %v527 = vadd.f32 %v522, %v526
    %v528 = vld [vmem:[%s91] sm:$0xff]
    %s529 = sld [smem:[#allocation3 + $0x189]]
    %v530 = vstv %s529
    %v531 = vmul.f32 %v528, %v530
    %v532 = vadd.f32 %v527, %v531
    %v533 = vld [vmem:[%s97] sm:$0xff]
    %s534 = sld [smem:[#allocation3 + $0x209]]
    %v535 = vstv %s534
    %v536 = vmul.f32 %v533, %v535
    %v537 = vadd.f32 %v532, %v536
    %v538 = vld [vmem:[%s103] sm:$0xff]
    %s539 = sld [smem:[#allocation3 + $0x289]]
    %v540 = vstv %s539
    %v541 = vmul.f32 %v538, %v540
    %v542 = vadd.f32 %v537, %v541
    %v543 = vld [vmem:[%s109] sm:$0xff]
    %s544 = sld [smem:[#allocation3 + $0x309]]
    %v545 = vstv %s544
    %v546 = vmul.f32 %v543, %v545
    %v547 = vadd.f32 %v542, %v546
    %v548 = vld [vmem:[%s115] sm:$0xff]
    %s549 = sld [smem:[#allocation3 + $0x389]]
    %v550 = vstv %s549
    %v551 = vmul.f32 %v548, %v550
    %v552 = vadd.f32 %v547, %v551
    %vm553 = vcmp.ge.f32.partialorder %v552, 0.0
    %v554 = vmul.f32 %v552, 0.01
    %v555 = vsel %vm553, %v552, %v554
    %557 = vrot.lane.b32.xlu0 %v555, 64
    %v558 = vpop.permute.xlu0 %557
    %560 = vst.msk [vmem:[#allocation2 + $0x20] sm:$0xff] %vm175, %v558
    %v561 = vld [vmem:[%s0] sm:$0xff]
    %s562 = sld [smem:[#allocation3 + $0xa]]
    %v563 = vstv %s562
    %v564 = vmul.f32 %v561, %v563
    %s565 = sld [smem:[#allocation6 + $0xa]]
    %v566 = vstv %s565
    %v567 = vadd.f32 %v564, %v566
    %v568 = vld [vmem:[%s79] sm:$0xff]
    %s569 = sld [smem:[#allocation3 + $0x8a]]
    %v570 = vstv %s569
    %v571 = vmul.f32 %v568, %v570
    %v572 = vadd.f32 %v567, %v571
    %v573 = vld [vmem:[%s85] sm:$0xff]
    %s574 = sld [smem:[#allocation3 + $0x10a]]
    %v575 = vstv %s574
    %v576 = vmul.f32 %v573, %v575
    %v577 = vadd.f32 %v572, %v576
    %v578 = vld [vmem:[%s91] sm:$0xff]
    %s579 = sld [smem:[#allocation3 + $0x18a]]
    %v580 = vstv %s579
    %v581 = vmul.f32 %v578, %v580
    %v582 = vadd.f32 %v577, %v581
    %v583 = vld [vmem:[%s97] sm:$0xff]
    %s584 = sld [smem:[#allocation3 + $0x20a]]
    %v585 = vstv %s584
    %v586 = vmul.f32 %v583, %v585
    %v587 = vadd.f32 %v582, %v586
    %v588 = vld [vmem:[%s103] sm:$0xff]
    %s589 = sld [smem:[#allocation3 + $0x28a]]
    %v590 = vstv %s589
    %v591 = vmul.f32 %v588, %v590
    %v592 = vadd.f32 %v587, %v591
    %v593 = vld [vmem:[%s109] sm:$0xff]
    %s594 = sld [smem:[#allocation3 + $0x30a]]
    %v595 = vstv %s594
    %v596 = vmul.f32 %v593, %v595
    %v597 = vadd.f32 %v592, %v596
    %v598 = vld [vmem:[%s115] sm:$0xff]
    %s599 = sld [smem:[#allocation3 + $0x38a]]
    %v600 = vstv %s599
    %v601 = vmul.f32 %v598, %v600
    %v602 = vadd.f32 %v597, %v601
    %vm603 = vcmp.ge.f32.partialorder %v602, 0.0
    %v604 = vmul.f32 %v602, 0.01
    %v605 = vsel %vm603, %v602, %v604
    %606 = vst.msk [vmem:[#allocation2 + $0x28] sm:$0xff] %vm124, %v605
    %v607 = vld [vmem:[%s0] sm:$0xff]
    %s608 = sld [smem:[#allocation3 + $0xb]]
    %v609 = vstv %s608
    %v610 = vmul.f32 %v607, %v609
    %s611 = sld [smem:[#allocation6 + $0xb]]
    %v612 = vstv %s611
    %v613 = vadd.f32 %v610, %v612
    %v614 = vld [vmem:[%s79] sm:$0xff]
    %s615 = sld [smem:[#allocation3 + $0x8b]]
    %v616 = vstv %s615
    %v617 = vmul.f32 %v614, %v616
    %v618 = vadd.f32 %v613, %v617
    %v619 = vld [vmem:[%s85] sm:$0xff]
    %s620 = sld [smem:[#allocation3 + $0x10b]]
    %v621 = vstv %s620
    %v622 = vmul.f32 %v619, %v621
    %v623 = vadd.f32 %v618, %v622
    %v624 = vld [vmem:[%s91] sm:$0xff]
    %s625 = sld [smem:[#allocation3 + $0x18b]]
    %v626 = vstv %s625
    %v627 = vmul.f32 %v624, %v626
    %v628 = vadd.f32 %v623, %v627
    %v629 = vld [vmem:[%s97] sm:$0xff]
    %s630 = sld [smem:[#allocation3 + $0x20b]]
    %v631 = vstv %s630
    %v632 = vmul.f32 %v629, %v631
    %v633 = vadd.f32 %v628, %v632
    %v634 = vld [vmem:[%s103] sm:$0xff]
    %s635 = sld [smem:[#allocation3 + $0x28b]]
    %v636 = vstv %s635
    %v637 = vmul.f32 %v634, %v636
    %v638 = vadd.f32 %v633, %v637
    %v639 = vld [vmem:[%s109] sm:$0xff]
    %s640 = sld [smem:[#allocation3 + $0x30b]]
    %v641 = vstv %s640
    %v642 = vmul.f32 %v639, %v641
    %v643 = vadd.f32 %v638, %v642
    %v644 = vld [vmem:[%s115] sm:$0xff]
    %s645 = sld [smem:[#allocation3 + $0x38b]]
    %v646 = vstv %s645
    %v647 = vmul.f32 %v644, %v646
    %v648 = vadd.f32 %v643, %v647
    %vm649 = vcmp.ge.f32.partialorder %v648, 0.0
    %v650 = vmul.f32 %v648, 0.01
    %v651 = vsel %vm649, %v648, %v650
    %653 = vrot.lane.b32.xlu0 %v651, 64
    %v654 = vpop.permute.xlu0 %653
    %656 = vst.msk [vmem:[#allocation2 + $0x28] sm:$0xff] %vm175, %v654
    %v657 = vld [vmem:[%s0] sm:$0xff]
    %s658 = sld [smem:[#allocation3 + $0xc]]
    %v659 = vstv %s658
    %v660 = vmul.f32 %v657, %v659
    %s661 = sld [smem:[#allocation6 + $0xc]]
    %v662 = vstv %s661
    %v663 = vadd.f32 %v660, %v662
    %v664 = vld [vmem:[%s79] sm:$0xff]
    %s665 = sld [smem:[#allocation3 + $0x8c]]
    %v666 = vstv %s665
    %v667 = vmul.f32 %v664, %v666
    %v668 = vadd.f32 %v663, %v667
    %v669 = vld [vmem:[%s85] sm:$0xff]
    %s670 = sld [smem:[#allocation3 + $0x10c]]
    %v671 = vstv %s670
    %v672 = vmul.f32 %v669, %v671
    %v673 = vadd.f32 %v668, %v672
    %v674 = vld [vmem:[%s91] sm:$0xff]
    %s675 = sld [smem:[#allocation3 + $0x18c]]
    %v676 = vstv %s675
    %v677 = vmul.f32 %v674, %v676
    %v678 = vadd.f32 %v673, %v677
    %v679 = vld [vmem:[%s97] sm:$0xff]
    %s680 = sld [smem:[#allocation3 + $0x20c]]
    %v681 = vstv %s680
    %v682 = vmul.f32 %v679, %v681
    %v683 = vadd.f32 %v678, %v682
    %v684 = vld [vmem:[%s103] sm:$0xff]
    %s685 = sld [smem:[#allocation3 + $0x28c]]
    %v686 = vstv %s685
    %v687 = vmul.f32 %v684, %v686
    %v688 = vadd.f32 %v683, %v687
    %v689 = vld [vmem:[%s109] sm:$0xff]
    %s690 = sld [smem:[#allocation3 + $0x30c]]
    %v691 = vstv %s690
    %v692 = vmul.f32 %v689, %v691
    %v693 = vadd.f32 %v688, %v692
    %v694 = vld [vmem:[%s115] sm:$0xff]
    %s695 = sld [smem:[#allocation3 + $0x38c]]
    %v696 = vstv %s695
    %v697 = vmul.f32 %v694, %v696
    %v698 = vadd.f32 %v693, %v697
    %vm699 = vcmp.ge.f32.partialorder %v698, 0.0
    %v700 = vmul.f32 %v698, 0.01
    %v701 = vsel %vm699, %v698, %v700
    %702 = vst.msk [vmem:[#allocation2 + $0x30] sm:$0xff] %vm124, %v701
    %v703 = vld [vmem:[%s0] sm:$0xff]
    %s704 = sld [smem:[#allocation3 + $0xd]]
    %v705 = vstv %s704
    %v706 = vmul.f32 %v703, %v705
    %s707 = sld [smem:[#allocation6 + $0xd]]
    %v708 = vstv %s707
    %v709 = vadd.f32 %v706, %v708
    %v710 = vld [vmem:[%s79] sm:$0xff]
    %s711 = sld [smem:[#allocation3 + $0x8d]]
    %v712 = vstv %s711
    %v713 = vmul.f32 %v710, %v712
    %v714 = vadd.f32 %v709, %v713
    %v715 = vld [vmem:[%s85] sm:$0xff]
    %s716 = sld [smem:[#allocation3 + $0x10d]]
    %v717 = vstv %s716
    %v718 = vmul.f32 %v715, %v717
    %v719 = vadd.f32 %v714, %v718
    %v720 = vld [vmem:[%s91] sm:$0xff]
    %s721 = sld [smem:[#allocation3 + $0x18d]]
    %v722 = vstv %s721
    %v723 = vmul.f32 %v720, %v722
    %v724 = vadd.f32 %v719, %v723
    %v725 = vld [vmem:[%s97] sm:$0xff]
    %s726 = sld [smem:[#allocation3 + $0x20d]]
    %v727 = vstv %s726
    %v728 = vmul.f32 %v725, %v727
    %v729 = vadd.f32 %v724, %v728
    %v730 = vld [vmem:[%s103] sm:$0xff]
    %s731 = sld [smem:[#allocation3 + $0x28d]]
    %v732 = vstv %s731
    %v733 = vmul.f32 %v730, %v732
    %v734 = vadd.f32 %v729, %v733
    %v735 = vld [vmem:[%s109] sm:$0xff]
    %s736 = sld [smem:[#allocation3 + $0x30d]]
    %v737 = vstv %s736
    %v738 = vmul.f32 %v735, %v737
    %v739 = vadd.f32 %v734, %v738
    %v740 = vld [vmem:[%s115] sm:$0xff]
    %s741 = sld [smem:[#allocation3 + $0x38d]]
    %v742 = vstv %s741
    %v743 = vmul.f32 %v740, %v742
    %v744 = vadd.f32 %v739, %v743
    %vm745 = vcmp.ge.f32.partialorder %v744, 0.0
    %v746 = vmul.f32 %v744, 0.01
    %v747 = vsel %vm745, %v744, %v746
    %749 = vrot.lane.b32.xlu0 %v747, 64
    %v750 = vpop.permute.xlu0 %749
    %752 = vst.msk [vmem:[#allocation2 + $0x30] sm:$0xff] %vm175, %v750
    %v753 = vld [vmem:[%s0] sm:$0xff]
    %s754 = sld [smem:[#allocation3 + $0xe]]
    %v755 = vstv %s754
    %v756 = vmul.f32 %v753, %v755
    %s757 = sld [smem:[#allocation6 + $0xe]]
    %v758 = vstv %s757
    %v759 = vadd.f32 %v756, %v758
    %v760 = vld [vmem:[%s79] sm:$0xff]
    %s761 = sld [smem:[#allocation3 + $0x8e]]
    %v762 = vstv %s761
    %v763 = vmul.f32 %v760, %v762
    %v764 = vadd.f32 %v759, %v763
    %v765 = vld [vmem:[%s85] sm:$0xff]
    %s766 = sld [smem:[#allocation3 + $0x10e]]
    %v767 = vstv %s766
    %v768 = vmul.f32 %v765, %v767
    %v769 = vadd.f32 %v764, %v768
    %v770 = vld [vmem:[%s91] sm:$0xff]
    %s771 = sld [smem:[#allocation3 + $0x18e]]
    %v772 = vstv %s771
    %v773 = vmul.f32 %v770, %v772
    %v774 = vadd.f32 %v769, %v773
    %v775 = vld [vmem:[%s97] sm:$0xff]
    %s776 = sld [smem:[#allocation3 + $0x20e]]
    %v777 = vstv %s776
    %v778 = vmul.f32 %v775, %v777
    %v779 = vadd.f32 %v774, %v778
    %v780 = vld [vmem:[%s103] sm:$0xff]
    %s781 = sld [smem:[#allocation3 + $0x28e]]
    %v782 = vstv %s781
    %v783 = vmul.f32 %v780, %v782
    %v784 = vadd.f32 %v779, %v783
    %v785 = vld [vmem:[%s109] sm:$0xff]
    %s786 = sld [smem:[#allocation3 + $0x30e]]
    %v787 = vstv %s786
    %v788 = vmul.f32 %v785, %v787
    %v789 = vadd.f32 %v784, %v788
    %v790 = vld [vmem:[%s115] sm:$0xff]
    %s791 = sld [smem:[#allocation3 + $0x38e]]
    %v792 = vstv %s791
    %v793 = vmul.f32 %v790, %v792
    %v794 = vadd.f32 %v789, %v793
    %vm795 = vcmp.ge.f32.partialorder %v794, 0.0
    %v796 = vmul.f32 %v794, 0.01
    %v797 = vsel %vm795, %v794, %v796
    %798 = vst.msk [vmem:[#allocation2 + $0x38] sm:$0xff] %vm124, %v797
    %v799 = vld [vmem:[%s0] sm:$0xff]
    %s800 = sld [smem:[#allocation3 + $0xf]]
    %v801 = vstv %s800
    %v802 = vmul.f32 %v799, %v801
    %s803 = sld [smem:[#allocation6 + $0xf]]
    %v804 = vstv %s803
    %v805 = vadd.f32 %v802, %v804
    %v806 = vld [vmem:[%s79] sm:$0xff]
    %s807 = sld [smem:[#allocation3 + $0x8f]]
    %v808 = vstv %s807
    %v809 = vmul.f32 %v806, %v808
    %v810 = vadd.f32 %v805, %v809
    %v811 = vld [vmem:[%s85] sm:$0xff]
    %s812 = sld [smem:[#allocation3 + $0x10f]]
    %v813 = vstv %s812
    %v814 = vmul.f32 %v811, %v813
    %v815 = vadd.f32 %v810, %v814
    %v816 = vld [vmem:[%s91] sm:$0xff]
    %s817 = sld [smem:[#allocation3 + $0x18f]]
    %v818 = vstv %s817
    %v819 = vmul.f32 %v816, %v818
    %v820 = vadd.f32 %v815, %v819
    %v821 = vld [vmem:[%s97] sm:$0xff]
    %s822 = sld [smem:[#allocation3 + $0x20f]]
    %v823 = vstv %s822
    %v824 = vmul.f32 %v821, %v823
    %v825 = vadd.f32 %v820, %v824
    %v826 = vld [vmem:[%s103] sm:$0xff]
    %s827 = sld [smem:[#allocation3 + $0x28f]]
    %v828 = vstv %s827
    %v829 = vmul.f32 %v826, %v828
    %v830 = vadd.f32 %v825, %v829
    %v831 = vld [vmem:[%s109] sm:$0xff]
    %s832 = sld [smem:[#allocation3 + $0x30f]]
    %v833 = vstv %s832
    %v834 = vmul.f32 %v831, %v833
    %v835 = vadd.f32 %v830, %v834
    %v836 = vld [vmem:[%s115] sm:$0xff]
    %s837 = sld [smem:[#allocation3 + $0x38f]]
    %v838 = vstv %s837
    %v839 = vmul.f32 %v836, %v838
    %v840 = vadd.f32 %v835, %v839
    %vm841 = vcmp.ge.f32.partialorder %v840, 0.0
    %v842 = vmul.f32 %v840, 0.01
    %v843 = vsel %vm841, %v840, %v842
    %845 = vrot.lane.b32.xlu0 %v843, 64
    %v846 = vpop.permute.xlu0 %845
    %848 = vst.msk [vmem:[#allocation2 + $0x38] sm:$0xff] %vm175, %v846
    %v849 = vld [vmem:[%s0] sm:$0xff]
    %s850 = sld [smem:[#allocation3 + $0x10]]
    %v851 = vstv %s850
    %v852 = vmul.f32 %v849, %v851
    %s853 = sld [smem:[#allocation6 + $0x10]]
    %v854 = vstv %s853
    %v855 = vadd.f32 %v852, %v854
    %v856 = vld [vmem:[%s79] sm:$0xff]
    %s857 = sld [smem:[#allocation3 + $0x90]]
    %v858 = vstv %s857
    %v859 = vmul.f32 %v856, %v858
    %v860 = vadd.f32 %v855, %v859
    %v861 = vld [vmem:[%s85] sm:$0xff]
    %s862 = sld [smem:[#allocation3 + $0x110]]
    %v863 = vstv %s862
    %v864 = vmul.f32 %v861, %v863
    %v865 = vadd.f32 %v860, %v864
    %v866 = vld [vmem:[%s91] sm:$0xff]
    %s867 = sld [smem:[#allocation3 + $0x190]]
    %v868 = vstv %s867
    %v869 = vmul.f32 %v866, %v868
    %v870 = vadd.f32 %v865, %v869
    %v871 = vld [vmem:[%s97] sm:$0xff]
    %s872 = sld [smem:[#allocation3 + $0x210]]
    %v873 = vstv %s872
    %v874 = vmul.f32 %v871, %v873
    %v875 = vadd.f32 %v870, %v874
    %v876 = vld [vmem:[%s103] sm:$0xff]
    %s877 = sld [smem:[#allocation3 + $0x290]]
    %v878 = vstv %s877
    %v879 = vmul.f32 %v876, %v878
    %v880 = vadd.f32 %v875, %v879
    %v881 = vld [vmem:[%s109] sm:$0xff]
    %s882 = sld [smem:[#allocation3 + $0x310]]
    %v883 = vstv %s882
    %v884 = vmul.f32 %v881, %v883
    %v885 = vadd.f32 %v880, %v884
    %v886 = vld [vmem:[%s115] sm:$0xff]
    %s887 = sld [smem:[#allocation3 + $0x390]]
    %v888 = vstv %s887
    %v889 = vmul.f32 %v886, %v888
    %v890 = vadd.f32 %v885, %v889
    %vm891 = vcmp.ge.f32.partialorder %v890, 0.0
    %v892 = vmul.f32 %v890, 0.01
    %v893 = vsel %vm891, %v890, %v892
    %894 = vst.msk [vmem:[#allocation2 + $0x40] sm:$0xff] %vm124, %v893
    %v895 = vld [vmem:[%s0] sm:$0xff]
    %s896 = sld [smem:[#allocation3 + $0x11]]
    %v897 = vstv %s896
    %v898 = vmul.f32 %v895, %v897
    %s899 = sld [smem:[#allocation6 + $0x11]]
    %v900 = vstv %s899
    %v901 = vadd.f32 %v898, %v900
    %v902 = vld [vmem:[%s79] sm:$0xff]
    %s903 = sld [smem:[#allocation3 + $0x91]]
    %v904 = vstv %s903
    %v905 = vmul.f32 %v902, %v904
    %v906 = vadd.f32 %v901, %v905
    %v907 = vld [vmem:[%s85] sm:$0xff]
    %s908 = sld [smem:[#allocation3 + $0x111]]
    %v909 = vstv %s908
    %v910 = vmul.f32 %v907, %v909
    %v911 = vadd.f32 %v906, %v910
    %v912 = vld [vmem:[%s91] sm:$0xff]
    %s913 = sld [smem:[#allocation3 + $0x191]]
    %v914 = vstv %s913
    %v915 = vmul.f32 %v912, %v914
    %v916 = vadd.f32 %v911, %v915
    %v917 = vld [vmem:[%s97] sm:$0xff]
    %s918 = sld [smem:[#allocation3 + $0x211]]
    %v919 = vstv %s918
    %v920 = vmul.f32 %v917, %v919
    %v921 = vadd.f32 %v916, %v920
    %v922 = vld [vmem:[%s103] sm:$0xff]
    %s923 = sld [smem:[#allocation3 + $0x291]]
    %v924 = vstv %s923
    %v925 = vmul.f32 %v922, %v924
    %v926 = vadd.f32 %v921, %v925
    %v927 = vld [vmem:[%s109] sm:$0xff]
    %s928 = sld [smem:[#allocation3 + $0x311]]
    %v929 = vstv %s928
    %v930 = vmul.f32 %v927, %v929
    %v931 = vadd.f32 %v926, %v930
    %v932 = vld [vmem:[%s115] sm:$0xff]
    %s933 = sld [smem:[#allocation3 + $0x391]]
    %v934 = vstv %s933
    %v935 = vmul.f32 %v932, %v934
    %v936 = vadd.f32 %v931, %v935
    %vm937 = vcmp.ge.f32.partialorder %v936, 0.0
    %v938 = vmul.f32 %v936, 0.01
    %v939 = vsel %vm937, %v936, %v938
    %941 = vrot.lane.b32.xlu0 %v939, 64
    %v942 = vpop.permute.xlu0 %941
    %944 = vst.msk [vmem:[#allocation2 + $0x40] sm:$0xff] %vm175, %v942
    %v945 = vld [vmem:[%s0] sm:$0xff]
    %s946 = sld [smem:[#allocation3 + $0x12]]
    %v947 = vstv %s946
    %v948 = vmul.f32 %v945, %v947
    %s949 = sld [smem:[#allocation6 + $0x12]]
    %v950 = vstv %s949
    %v951 = vadd.f32 %v948, %v950
    %v952 = vld [vmem:[%s79] sm:$0xff]
    %s953 = sld [smem:[#allocation3 + $0x92]]
    %v954 = vstv %s953
    %v955 = vmul.f32 %v952, %v954
    %v956 = vadd.f32 %v951, %v955
    %v957 = vld [vmem:[%s85] sm:$0xff]
    %s958 = sld [smem:[#allocation3 + $0x112]]
    %v959 = vstv %s958
    %v960 = vmul.f32 %v957, %v959
    %v961 = vadd.f32 %v956, %v960
    %v962 = vld [vmem:[%s91] sm:$0xff]
    %s963 = sld [smem:[#allocation3 + $0x192]]
    %v964 = vstv %s963
    %v965 = vmul.f32 %v962, %v964
    %v966 = vadd.f32 %v961, %v965
    %v967 = vld [vmem:[%s97] sm:$0xff]
    %s968 = sld [smem:[#allocation3 + $0x212]]
    %v969 = vstv %s968
    %v970 = vmul.f32 %v967, %v969
    %v971 = vadd.f32 %v966, %v970
    %v972 = vld [vmem:[%s103] sm:$0xff]
    %s973 = sld [smem:[#allocation3 + $0x292]]
    %v974 = vstv %s973
    %v975 = vmul.f32 %v972, %v974
    %v976 = vadd.f32 %v971, %v975
    %v977 = vld [vmem:[%s109] sm:$0xff]
    %s978 = sld [smem:[#allocation3 + $0x312]]
    %v979 = vstv %s978
    %v980 = vmul.f32 %v977, %v979
    %v981 = vadd.f32 %v976, %v980
    %v982 = vld [vmem:[%s115] sm:$0xff]
    %s983 = sld [smem:[#allocation3 + $0x392]]
    %v984 = vstv %s983
    %v985 = vmul.f32 %v982, %v984
    %v986 = vadd.f32 %v981, %v985
    %vm987 = vcmp.ge.f32.partialorder %v986, 0.0
    %v988 = vmul.f32 %v986, 0.01
    %v989 = vsel %vm987, %v986, %v988
    %990 = vst.msk [vmem:[#allocation2 + $0x48] sm:$0xff] %vm124, %v989
    %v991 = vld [vmem:[%s0] sm:$0xff]
    %s992 = sld [smem:[#allocation3 + $0x13]]
    %v993 = vstv %s992
    %v994 = vmul.f32 %v991, %v993
    %s995 = sld [smem:[#allocation6 + $0x13]]
    %v996 = vstv %s995
    %v997 = vadd.f32 %v994, %v996
    %v998 = vld [vmem:[%s79] sm:$0xff]
    %s999 = sld [smem:[#allocation3 + $0x93]]
    %v1000 = vstv %s999
    %v1001 = vmul.f32 %v998, %v1000
    %v1002 = vadd.f32 %v997, %v1001
    %v1003 = vld [vmem:[%s85] sm:$0xff]
    %s1004 = sld [smem:[#allocation3 + $0x113]]
    %v1005 = vstv %s1004
    %v1006 = vmul.f32 %v1003, %v1005
    %v1007 = vadd.f32 %v1002, %v1006
    %v1008 = vld [vmem:[%s91] sm:$0xff]
    %s1009 = sld [smem:[#allocation3 + $0x193]]
    %v1010 = vstv %s1009
    %v1011 = vmul.f32 %v1008, %v1010
    %v1012 = vadd.f32 %v1007, %v1011
    %v1013 = vld [vmem:[%s97] sm:$0xff]
    %s1014 = sld [smem:[#allocation3 + $0x213]]
    %v1015 = vstv %s1014
    %v1016 = vmul.f32 %v1013, %v1015
    %v1017 = vadd.f32 %v1012, %v1016
    %v1018 = vld [vmem:[%s103] sm:$0xff]
    %s1019 = sld [smem:[#allocation3 + $0x293]]
    %v1020 = vstv %s1019
    %v1021 = vmul.f32 %v1018, %v1020
    %v1022 = vadd.f32 %v1017, %v1021
    %v1023 = vld [vmem:[%s109] sm:$0xff]
    %s1024 = sld [smem:[#allocation3 + $0x313]]
    %v1025 = vstv %s1024
    %v1026 = vmul.f32 %v1023, %v1025
    %v1027 = vadd.f32 %v1022, %v1026
    %v1028 = vld [vmem:[%s115] sm:$0xff]
    %s1029 = sld [smem:[#allocation3 + $0x393]]
    %v1030 = vstv %s1029
    %v1031 = vmul.f32 %v1028, %v1030
    %v1032 = vadd.f32 %v1027, %v1031
    %vm1033 = vcmp.ge.f32.partialorder %v1032, 0.0
    %v1034 = vmul.f32 %v1032, 0.01
    %v1035 = vsel %vm1033, %v1032, %v1034
    %1037 = vrot.lane.b32.xlu0 %v1035, 64
    %v1038 = vpop.permute.xlu0 %1037
    %1040 = vst.msk [vmem:[#allocation2 + $0x48] sm:$0xff] %vm175, %v1038
    %v1041 = vld [vmem:[%s0] sm:$0xff]
    %s1042 = sld [smem:[#allocation3 + $0x14]]
    %v1043 = vstv %s1042
    %v1044 = vmul.f32 %v1041, %v1043
    %s1045 = sld [smem:[#allocation6 + $0x14]]
    %v1046 = vstv %s1045
    %v1047 = vadd.f32 %v1044, %v1046
    %v1048 = vld [vmem:[%s79] sm:$0xff]
    %s1049 = sld [smem:[#allocation3 + $0x94]]
    %v1050 = vstv %s1049
    %v1051 = vmul.f32 %v1048, %v1050
    %v1052 = vadd.f32 %v1047, %v1051
    %v1053 = vld [vmem:[%s85] sm:$0xff]
    %s1054 = sld [smem:[#allocation3 + $0x114]]
    %v1055 = vstv %s1054
    %v1056 = vmul.f32 %v1053, %v1055
    %v1057 = vadd.f32 %v1052, %v1056
    %v1058 = vld [vmem:[%s91] sm:$0xff]
    %s1059 = sld [smem:[#allocation3 + $0x194]]
    %v1060 = vstv %s1059
    %v1061 = vmul.f32 %v1058, %v1060
    %v1062 = vadd.f32 %v1057, %v1061
    %v1063 = vld [vmem:[%s97] sm:$0xff]
    %s1064 = sld [smem:[#allocation3 + $0x214]]
    %v1065 = vstv %s1064
    %v1066 = vmul.f32 %v1063, %v1065
    %v1067 = vadd.f32 %v1062, %v1066
    %v1068 = vld [vmem:[%s103] sm:$0xff]
    %s1069 = sld [smem:[#allocation3 + $0x294]]
    %v1070 = vstv %s1069
    %v1071 = vmul.f32 %v1068, %v1070
    %v1072 = vadd.f32 %v1067, %v1071
    %v1073 = vld [vmem:[%s109] sm:$0xff]
    %s1074 = sld [smem:[#allocation3 + $0x314]]
    %v1075 = vstv %s1074
    %v1076 = vmul.f32 %v1073, %v1075
    %v1077 = vadd.f32 %v1072, %v1076
    %v1078 = vld [vmem:[%s115] sm:$0xff]
    %s1079 = sld [smem:[#allocation3 + $0x394]]
    %v1080 = vstv %s1079
    %v1081 = vmul.f32 %v1078, %v1080
    %v1082 = vadd.f32 %v1077, %v1081
    %vm1083 = vcmp.ge.f32.partialorder %v1082, 0.0
    %v1084 = vmul.f32 %v1082, 0.01
    %v1085 = vsel %vm1083, %v1082, %v1084
    %1086 = vst.msk [vmem:[#allocation2 + $0x50] sm:$0xff] %vm124, %v1085
    %v1087 = vld [vmem:[%s0] sm:$0xff]
    %s1088 = sld [smem:[#allocation3 + $0x15]]
    %v1089 = vstv %s1088
    %v1090 = vmul.f32 %v1087, %v1089
    %s1091 = sld [smem:[#allocation6 + $0x15]]
    %v1092 = vstv %s1091
    %v1093 = vadd.f32 %v1090, %v1092
    %v1094 = vld [vmem:[%s79] sm:$0xff]
    %s1095 = sld [smem:[#allocation3 + $0x95]]
    %v1096 = vstv %s1095
    %v1097 = vmul.f32 %v1094, %v1096
    %v1098 = vadd.f32 %v1093, %v1097
    %v1099 = vld [vmem:[%s85] sm:$0xff]
    %s1100 = sld [smem:[#allocation3 + $0x115]]
    %v1101 = vstv %s1100
    %v1102 = vmul.f32 %v1099, %v1101
    %v1103 = vadd.f32 %v1098, %v1102
    %v1104 = vld [vmem:[%s91] sm:$0xff]
    %s1105 = sld [smem:[#allocation3 + $0x195]]
    %v1106 = vstv %s1105
    %v1107 = vmul.f32 %v1104, %v1106
    %v1108 = vadd.f32 %v1103, %v1107
    %v1109 = vld [vmem:[%s97] sm:$0xff]
    %s1110 = sld [smem:[#allocation3 + $0x215]]
    %v1111 = vstv %s1110
    %v1112 = vmul.f32 %v1109, %v1111
    %v1113 = vadd.f32 %v1108, %v1112
    %v1114 = vld [vmem:[%s103] sm:$0xff]
    %s1115 = sld [smem:[#allocation3 + $0x295]]
    %v1116 = vstv %s1115
    %v1117 = vmul.f32 %v1114, %v1116
    %v1118 = vadd.f32 %v1113, %v1117
    %v1119 = vld [vmem:[%s109] sm:$0xff]
    %s1120 = sld [smem:[#allocation3 + $0x315]]
    %v1121 = vstv %s1120
    %v1122 = vmul.f32 %v1119, %v1121
    %v1123 = vadd.f32 %v1118, %v1122
    %v1124 = vld [vmem:[%s115] sm:$0xff]
    %s1125 = sld [smem:[#allocation3 + $0x395]]
    %v1126 = vstv %s1125
    %v1127 = vmul.f32 %v1124, %v1126
    %v1128 = vadd.f32 %v1123, %v1127
    %vm1129 = vcmp.ge.f32.partialorder %v1128, 0.0
    %v1130 = vmul.f32 %v1128, 0.01
    %v1131 = vsel %vm1129, %v1128, %v1130
    %1133 = vrot.lane.b32.xlu0 %v1131, 64
    %v1134 = vpop.permute.xlu0 %1133
    %1136 = vst.msk [vmem:[#allocation2 + $0x50] sm:$0xff] %vm175, %v1134
    %v1137 = vld [vmem:[%s0] sm:$0xff]
    %s1138 = sld [smem:[#allocation3 + $0x16]]
    %v1139 = vstv %s1138
    %v1140 = vmul.f32 %v1137, %v1139
    %s1141 = sld [smem:[#allocation6 + $0x16]]
    %v1142 = vstv %s1141
    %v1143 = vadd.f32 %v1140, %v1142
    %v1144 = vld [vmem:[%s79] sm:$0xff]
    %s1145 = sld [smem:[#allocation3 + $0x96]]
    %v1146 = vstv %s1145
    %v1147 = vmul.f32 %v1144, %v1146
    %v1148 = vadd.f32 %v1143, %v1147
    %v1149 = vld [vmem:[%s85] sm:$0xff]
    %s1150 = sld [smem:[#allocation3 + $0x116]]
    %v1151 = vstv %s1150
    %v1152 = vmul.f32 %v1149, %v1151
    %v1153 = vadd.f32 %v1148, %v1152
    %v1154 = vld [vmem:[%s91] sm:$0xff]
    %s1155 = sld [smem:[#allocation3 + $0x196]]
    %v1156 = vstv %s1155
    %v1157 = vmul.f32 %v1154, %v1156
    %v1158 = vadd.f32 %v1153, %v1157
    %v1159 = vld [vmem:[%s97] sm:$0xff]
    %s1160 = sld [smem:[#allocation3 + $0x216]]
    %v1161 = vstv %s1160
    %v1162 = vmul.f32 %v1159, %v1161
    %v1163 = vadd.f32 %v1158, %v1162
    %v1164 = vld [vmem:[%s103] sm:$0xff]
    %s1165 = sld [smem:[#allocation3 + $0x296]]
    %v1166 = vstv %s1165
    %v1167 = vmul.f32 %v1164, %v1166
    %v1168 = vadd.f32 %v1163, %v1167
    %v1169 = vld [vmem:[%s109] sm:$0xff]
    %s1170 = sld [smem:[#allocation3 + $0x316]]
    %v1171 = vstv %s1170
    %v1172 = vmul.f32 %v1169, %v1171
    %v1173 = vadd.f32 %v1168, %v1172
    %v1174 = vld [vmem:[%s115] sm:$0xff]
    %s1175 = sld [smem:[#allocation3 + $0x396]]
    %v1176 = vstv %s1175
    %v1177 = vmul.f32 %v1174, %v1176
    %v1178 = vadd.f32 %v1173, %v1177
    %vm1179 = vcmp.ge.f32.partialorder %v1178, 0.0
    %v1180 = vmul.f32 %v1178, 0.01
    %v1181 = vsel %vm1179, %v1178, %v1180
    %1182 = vst.msk [vmem:[#allocation2 + $0x58] sm:$0xff] %vm124, %v1181
    %v1183 = vld [vmem:[%s0] sm:$0xff]
    %s1184 = sld [smem:[#allocation3 + $0x17]]
    %v1185 = vstv %s1184
    %v1186 = vmul.f32 %v1183, %v1185
    %s1187 = sld [smem:[#allocation6 + $0x17]]
    %v1188 = vstv %s1187
    %v1189 = vadd.f32 %v1186, %v1188
    %v1190 = vld [vmem:[%s79] sm:$0xff]
    %s1191 = sld [smem:[#allocation3 + $0x97]]
    %v1192 = vstv %s1191
    %v1193 = vmul.f32 %v1190, %v1192
    %v1194 = vadd.f32 %v1189, %v1193
    %v1195 = vld [vmem:[%s85] sm:$0xff]
    %s1196 = sld [smem:[#allocation3 + $0x117]]
    %v1197 = vstv %s1196
    %v1198 = vmul.f32 %v1195, %v1197
    %v1199 = vadd.f32 %v1194, %v1198
    %v1200 = vld [vmem:[%s91] sm:$0xff]
    %s1201 = sld [smem:[#allocation3 + $0x197]]
    %v1202 = vstv %s1201
    %v1203 = vmul.f32 %v1200, %v1202
    %v1204 = vadd.f32 %v1199, %v1203
    %v1205 = vld [vmem:[%s97] sm:$0xff]
    %s1206 = sld [smem:[#allocation3 + $0x217]]
    %v1207 = vstv %s1206
    %v1208 = vmul.f32 %v1205, %v1207
    %v1209 = vadd.f32 %v1204, %v1208
    %v1210 = vld [vmem:[%s103] sm:$0xff]
    %s1211 = sld [smem:[#allocation3 + $0x297]]
    %v1212 = vstv %s1211
    %v1213 = vmul.f32 %v1210, %v1212
    %v1214 = vadd.f32 %v1209, %v1213
    %v1215 = vld [vmem:[%s109] sm:$0xff]
    %s1216 = sld [smem:[#allocation3 + $0x317]]
    %v1217 = vstv %s1216
    %v1218 = vmul.f32 %v1215, %v1217
    %v1219 = vadd.f32 %v1214, %v1218
    %v1220 = vld [vmem:[%s115] sm:$0xff]
    %s1221 = sld [smem:[#allocation3 + $0x397]]
    %v1222 = vstv %s1221
    %v1223 = vmul.f32 %v1220, %v1222
    %v1224 = vadd.f32 %v1219, %v1223
    %vm1225 = vcmp.ge.f32.partialorder %v1224, 0.0
    %v1226 = vmul.f32 %v1224, 0.01
    %v1227 = vsel %vm1225, %v1224, %v1226
    %1229 = vrot.lane.b32.xlu0 %v1227, 64
    %v1230 = vpop.permute.xlu0 %1229
    %1232 = vst.msk [vmem:[#allocation2 + $0x58] sm:$0xff] %vm175, %v1230
    %v1233 = vld [vmem:[#allocation2] sm:$0xff]
    %v1234 = vld [vmem:[#allocation2 + $0x8] sm:$0xff]
    %v1235 = vld [vmem:[#allocation2 + $0x10] sm:$0xff]
    %v1236 = vld [vmem:[#allocation2 + $0x18] sm:$0xff]
    %v1237 = vld [vmem:[#allocation2 + $0x20] sm:$0xff]
    %v1238 = vld [vmem:[#allocation2 + $0x28] sm:$0xff]
    %v1239 = vld [vmem:[#allocation2 + $0x30] sm:$0xff]
    %v1240 = vld [vmem:[#allocation2 + $0x38] sm:$0xff]
    %v1241 = vld [vmem:[#allocation2 + $0x40] sm:$0xff]
    %v1242 = vld [vmem:[#allocation2 + $0x48] sm:$0xff]
    %v1243 = vld [vmem:[#allocation2 + $0x50] sm:$0xff]
    %v1244 = vld [vmem:[#allocation2 + $0x58] sm:$0xff]
    %v1245 = vpack.c.bf16 %v1233, %v1233
    %v1246 = vpack.c.bf16 %v1234, %v1234
    %v1247 = vpack.c.bf16 %v1235, %v1235
    %v1248 = vpack.c.bf16 %v1236, %v1236
    %v1249 = vpack.c.bf16 %v1237, %v1237
    %v1250 = vpack.c.bf16 %v1238, %v1238
    %v1251 = vpack.c.bf16 %v1239, %v1239
    %v1252 = vpack.c.bf16 %v1240, %v1240
    %v1253 = vpack.c.bf16 %v1241, %v1241
    %v1254 = vpack.c.bf16 %v1242, %v1242
    %v1255 = vpack.c.bf16 %v1243, %v1243
    %v1256 = vpack.c.bf16 %v1244, %v1244
    %v1257 = vld [vmem:[#allocation8] sm:$0xff]
    %v1258 = vld [vmem:[#allocation8 + $0x8] sm:$0xff]
    %v1259 = vld [vmem:[#allocation8 + $0x10] sm:$0xff]
    %v1260 = vld [vmem:[#allocation8 + $0x18] sm:$0xff]
    %v1261 = vld [vmem:[#allocation8 + $0x20] sm:$0xff]
    %v1262 = vld [vmem:[#allocation8 + $0x28] sm:$0xff]
    %v1263 = vld [vmem:[#allocation8 + $0x30] sm:$0xff]
    %v1264 = vld [vmem:[#allocation8 + $0x38] sm:$0xff]
    %v1265 = vld [vmem:[#allocation8 + $0x40] sm:$0xff]
    %v1266 = vld [vmem:[#allocation8 + $0x48] sm:$0xff]
    %v1267 = vld [vmem:[#allocation8 + $0x50] sm:$0xff]
    %v1268 = vld [vmem:[#allocation8 + $0x58] sm:$0xff]
    %v1269 = vld [vmem:[#allocation8 + $0x60] sm:$0xff]
    %v1270 = vld [vmem:[#allocation8 + $0x68] sm:$0xff]
    %v1271 = vld [vmem:[#allocation8 + $0x70] sm:$0xff]
    %v1272 = vld [vmem:[#allocation8 + $0x78] sm:$0xff]
    %v1273 = vld [vmem:[#allocation8 + $0x80] sm:$0xff]
    %v1274 = vld [vmem:[#allocation8 + $0x88] sm:$0xff]
    %v1275 = vld [vmem:[#allocation8 + $0x90] sm:$0xff]
    %v1276 = vld [vmem:[#allocation8 + $0x98] sm:$0xff]
    %v1277 = vld [vmem:[#allocation8 + $0xa0] sm:$0xff]
    %v1278 = vld [vmem:[#allocation8 + $0xa8] sm:$0xff]
    %v1279 = vld [vmem:[#allocation8 + $0xb0] sm:$0xff]
    %v1280 = vld [vmem:[#allocation8 + $0xb8] sm:$0xff]
    %v1281 = vld [vmem:[#allocation8 + $0xc0] sm:$0xff]
    %v1282 = vld [vmem:[#allocation8 + $0xc8] sm:$0xff]
    %v1283 = vld [vmem:[#allocation8 + $0xd0] sm:$0xff]
    %v1284 = vld [vmem:[#allocation8 + $0xd8] sm:$0xff]
    %v1285 = vld [vmem:[#allocation8 + $0xe0] sm:$0xff]
    %v1286 = vld [vmem:[#allocation8 + $0xe8] sm:$0xff]
    %v1287 = vld [vmem:[#allocation8 + $0xf0] sm:$0xff]
    %v1288 = vld [vmem:[#allocation8 + $0xf8] sm:$0xff]
    %v1289 = vld [vmem:[#allocation8 + $0x100] sm:$0xff]
    %v1290 = vld [vmem:[#allocation8 + $0x108] sm:$0xff]
    %v1291 = vld [vmem:[#allocation8 + $0x110] sm:$0xff]
    %v1292 = vld [vmem:[#allocation8 + $0x118] sm:$0xff]
    %v1293 = vld [vmem:[#allocation8 + $0x120] sm:$0xff]
    %v1294 = vld [vmem:[#allocation8 + $0x128] sm:$0xff]
    %v1295 = vld [vmem:[#allocation8 + $0x130] sm:$0xff]
    %v1296 = vld [vmem:[#allocation8 + $0x138] sm:$0xff]
    %v1297 = vld [vmem:[#allocation8 + $0x140] sm:$0xff]
    %v1298 = vld [vmem:[#allocation8 + $0x148] sm:$0xff]
    %v1299 = vld [vmem:[#allocation8 + $0x150] sm:$0xff]
    %v1300 = vld [vmem:[#allocation8 + $0x158] sm:$0xff]
    %v1301 = vld [vmem:[#allocation8 + $0x160] sm:$0xff]
    %v1302 = vld [vmem:[#allocation8 + $0x168] sm:$0xff]
    %v1303 = vld [vmem:[#allocation8 + $0x170] sm:$0xff]
    %v1304 = vld [vmem:[#allocation8 + $0x178] sm:$0xff]
    %v1305 = vld [vmem:[#allocation8 + $0x180] sm:$0xff]
    %v1306 = vld [vmem:[#allocation8 + $0x188] sm:$0xff]
    %v1307 = vld [vmem:[#allocation8 + $0x190] sm:$0xff]
    %v1308 = vld [vmem:[#allocation8 + $0x198] sm:$0xff]
    %v1309 = vld [vmem:[#allocation8 + $0x1a0] sm:$0xff]
    %v1310 = vld [vmem:[#allocation8 + $0x1a8] sm:$0xff]
    %v1311 = vld [vmem:[#allocation8 + $0x1b0] sm:$0xff]
    %v1312 = vld [vmem:[#allocation8 + $0x1b8] sm:$0xff]
    %v1313 = vld [vmem:[#allocation8 + $0x1c0] sm:$0xff]
    %v1314 = vld [vmem:[#allocation8 + $0x1c8] sm:$0xff]
    %v1315 = vld [vmem:[#allocation8 + $0x1d0] sm:$0xff]
    %v1316 = vld [vmem:[#allocation8 + $0x1d8] sm:$0xff]
    %v1317 = vld [vmem:[#allocation8 + $0x1e0] sm:$0xff]
    %v1318 = vld [vmem:[#allocation8 + $0x1e8] sm:$0xff]
    %v1319 = vld [vmem:[#allocation8 + $0x1f0] sm:$0xff]
    %v1320 = vld [vmem:[#allocation8 + $0x1f8] sm:$0xff]
    %v1321 = vld [vmem:[#allocation8 + $0x200] sm:$0xff]
    %v1322 = vld [vmem:[#allocation8 + $0x208] sm:$0xff]
    %v1323 = vld [vmem:[#allocation8 + $0x210] sm:$0xff]
    %v1324 = vld [vmem:[#allocation8 + $0x218] sm:$0xff]
    %v1325 = vld [vmem:[#allocation8 + $0x220] sm:$0xff]
    %v1326 = vld [vmem:[#allocation8 + $0x228] sm:$0xff]
    %v1327 = vld [vmem:[#allocation8 + $0x230] sm:$0xff]
    %v1328 = vld [vmem:[#allocation8 + $0x238] sm:$0xff]
    %v1329 = vld [vmem:[#allocation8 + $0x240] sm:$0xff]
    %v1330 = vld [vmem:[#allocation8 + $0x248] sm:$0xff]
    %v1331 = vld [vmem:[#allocation8 + $0x250] sm:$0xff]
    %v1332 = vld [vmem:[#allocation8 + $0x258] sm:$0xff]
    %v1333 = vld [vmem:[#allocation8 + $0x260] sm:$0xff]
    %v1334 = vld [vmem:[#allocation8 + $0x268] sm:$0xff]
    %v1335 = vld [vmem:[#allocation8 + $0x270] sm:$0xff]
    %v1336 = vld [vmem:[#allocation8 + $0x278] sm:$0xff]
    %v1337 = vld [vmem:[#allocation8 + $0x280] sm:$0xff]
    %v1338 = vld [vmem:[#allocation8 + $0x288] sm:$0xff]
    %v1339 = vld [vmem:[#allocation8 + $0x290] sm:$0xff]
    %v1340 = vld [vmem:[#allocation8 + $0x298] sm:$0xff]
    %v1341 = vld [vmem:[#allocation8 + $0x2a0] sm:$0xff]
    %v1342 = vld [vmem:[#allocation8 + $0x2a8] sm:$0xff]
    %v1343 = vld [vmem:[#allocation8 + $0x2b0] sm:$0xff]
    %v1344 = vld [vmem:[#allocation8 + $0x2b8] sm:$0xff]
    %v1345 = vld [vmem:[#allocation8 + $0x2c0] sm:$0xff]
    %v1346 = vld [vmem:[#allocation8 + $0x2c8] sm:$0xff]
    %v1347 = vld [vmem:[#allocation8 + $0x2d0] sm:$0xff]
    %v1348 = vld [vmem:[#allocation8 + $0x2d8] sm:$0xff]
    %v1349 = vld [vmem:[#allocation8 + $0x2e0] sm:$0xff]
    %v1350 = vld [vmem:[#allocation8 + $0x2e8] sm:$0xff]
    %v1351 = vld [vmem:[#allocation8 + $0x2f0] sm:$0xff]
    %v1352 = vld [vmem:[#allocation8 + $0x2f8] sm:$0xff]
    %v1353 = vld [vmem:[#allocation8 + $0x300] sm:$0xff]
    %v1354 = vld [vmem:[#allocation8 + $0x308] sm:$0xff]
    %v1355 = vld [vmem:[#allocation8 + $0x310] sm:$0xff]
    %v1356 = vld [vmem:[#allocation8 + $0x318] sm:$0xff]
    %v1357 = vld [vmem:[#allocation8 + $0x320] sm:$0xff]
    %v1358 = vld [vmem:[#allocation8 + $0x328] sm:$0xff]
    %v1359 = vld [vmem:[#allocation8 + $0x330] sm:$0xff]
    %v1360 = vld [vmem:[#allocation8 + $0x338] sm:$0xff]
    %v1361 = vld [vmem:[#allocation8 + $0x340] sm:$0xff]
    %v1362 = vld [vmem:[#allocation8 + $0x348] sm:$0xff]
    %v1363 = vld [vmem:[#allocation8 + $0x350] sm:$0xff]
    %v1364 = vld [vmem:[#allocation8 + $0x358] sm:$0xff]
    %v1365 = vld [vmem:[#allocation8 + $0x360] sm:$0xff]
    %v1366 = vld [vmem:[#allocation8 + $0x368] sm:$0xff]
    %v1367 = vld [vmem:[#allocation8 + $0x370] sm:$0xff]
    %v1368 = vld [vmem:[#allocation8 + $0x378] sm:$0xff]
    %v1369 = vld [vmem:[#allocation8 + $0x380] sm:$0xff]
    %v1370 = vld [vmem:[#allocation8 + $0x388] sm:$0xff]
    %v1371 = vld [vmem:[#allocation8 + $0x390] sm:$0xff]
    %v1372 = vld [vmem:[#allocation8 + $0x398] sm:$0xff]
    %v1373 = vld [vmem:[#allocation8 + $0x3a0] sm:$0xff]
    %v1374 = vld [vmem:[#allocation8 + $0x3a8] sm:$0xff]
    %v1375 = vld [vmem:[#allocation8 + $0x3b0] sm:$0xff]
    %v1376 = vld [vmem:[#allocation8 + $0x3b8] sm:$0xff]
    %v1377 = vld [vmem:[#allocation8 + $0x3c0] sm:$0xff]
    %v1378 = vld [vmem:[#allocation8 + $0x3c8] sm:$0xff]
    %v1379 = vld [vmem:[#allocation8 + $0x3d0] sm:$0xff]
    %v1380 = vld [vmem:[#allocation8 + $0x3d8] sm:$0xff]
    %v1381 = vld [vmem:[#allocation8 + $0x3e0] sm:$0xff]
    %v1382 = vld [vmem:[#allocation8 + $0x3e8] sm:$0xff]
    %v1383 = vld [vmem:[#allocation8 + $0x3f0] sm:$0xff]
    %v1384 = vld [vmem:[#allocation8 + $0x3f8] sm:$0xff]
    %v1385 = vld [vmem:[#allocation8 + $0x400] sm:$0xff]
    %v1386 = vld [vmem:[#allocation8 + $0x408] sm:$0xff]
    %v1387 = vld [vmem:[#allocation8 + $0x410] sm:$0xff]
    %v1388 = vld [vmem:[#allocation8 + $0x418] sm:$0xff]
    %v1389 = vld [vmem:[#allocation8 + $0x420] sm:$0xff]
    %v1390 = vld [vmem:[#allocation8 + $0x428] sm:$0xff]
    %v1391 = vld [vmem:[#allocation8 + $0x430] sm:$0xff]
    %v1392 = vld [vmem:[#allocation8 + $0x438] sm:$0xff]
    %v1393 = vld [vmem:[#allocation8 + $0x440] sm:$0xff]
    %v1394 = vld [vmem:[#allocation8 + $0x448] sm:$0xff]
    %v1395 = vld [vmem:[#allocation8 + $0x450] sm:$0xff]
    %v1396 = vld [vmem:[#allocation8 + $0x458] sm:$0xff]
    %v1397 = vld [vmem:[#allocation8 + $0x460] sm:$0xff]
    %v1398 = vld [vmem:[#allocation8 + $0x468] sm:$0xff]
    %v1399 = vld [vmem:[#allocation8 + $0x470] sm:$0xff]
    %v1400 = vld [vmem:[#allocation8 + $0x478] sm:$0xff]
    %v1401 = vld [vmem:[#allocation8 + $0x480] sm:$0xff]
    %v1402 = vld [vmem:[#allocation8 + $0x488] sm:$0xff]
    %v1403 = vld [vmem:[#allocation8 + $0x490] sm:$0xff]
    %v1404 = vld [vmem:[#allocation8 + $0x498] sm:$0xff]
    %v1405 = vld [vmem:[#allocation8 + $0x4a0] sm:$0xff]
    %v1406 = vld [vmem:[#allocation8 + $0x4a8] sm:$0xff]
    %v1407 = vld [vmem:[#allocation8 + $0x4b0] sm:$0xff]
    %v1408 = vld [vmem:[#allocation8 + $0x4b8] sm:$0xff]
    %v1409 = vld [vmem:[#allocation8 + $0x4c0] sm:$0xff]
    %v1410 = vld [vmem:[#allocation8 + $0x4c8] sm:$0xff]
    %v1411 = vld [vmem:[#allocation8 + $0x4d0] sm:$0xff]
    %v1412 = vld [vmem:[#allocation8 + $0x4d8] sm:$0xff]
    %v1413 = vld [vmem:[#allocation8 + $0x4e0] sm:$0xff]
    %v1414 = vld [vmem:[#allocation8 + $0x4e8] sm:$0xff]
    %v1415 = vld [vmem:[#allocation8 + $0x4f0] sm:$0xff]
    %v1416 = vld [vmem:[#allocation8 + $0x4f8] sm:$0xff]
    %v1417 = vld [vmem:[#allocation8 + $0x500] sm:$0xff]
    %v1418 = vld [vmem:[#allocation8 + $0x508] sm:$0xff]
    %v1419 = vld [vmem:[#allocation8 + $0x510] sm:$0xff]
    %v1420 = vld [vmem:[#allocation8 + $0x518] sm:$0xff]
    %v1421 = vld [vmem:[#allocation8 + $0x520] sm:$0xff]
    %v1422 = vld [vmem:[#allocation8 + $0x528] sm:$0xff]
    %v1423 = vld [vmem:[#allocation8 + $0x530] sm:$0xff]
    %v1424 = vld [vmem:[#allocation8 + $0x538] sm:$0xff]
    %v1425 = vld [vmem:[#allocation8 + $0x540] sm:$0xff]
    %v1426 = vld [vmem:[#allocation8 + $0x548] sm:$0xff]
    %v1427 = vld [vmem:[#allocation8 + $0x550] sm:$0xff]
    %v1428 = vld [vmem:[#allocation8 + $0x558] sm:$0xff]
    %v1429 = vld [vmem:[#allocation8 + $0x560] sm:$0xff]
    %v1430 = vld [vmem:[#allocation8 + $0x568] sm:$0xff]
    %v1431 = vld [vmem:[#allocation8 + $0x570] sm:$0xff]
    %v1432 = vld [vmem:[#allocation8 + $0x578] sm:$0xff]
    %v1433 = vld [vmem:[#allocation8 + $0x580] sm:$0xff]
    %v1434 = vld [vmem:[#allocation8 + $0x588] sm:$0xff]
    %v1435 = vld [vmem:[#allocation8 + $0x590] sm:$0xff]
    %v1436 = vld [vmem:[#allocation8 + $0x598] sm:$0xff]
    %v1437 = vld [vmem:[#allocation8 + $0x5a0] sm:$0xff]
    %v1438 = vld [vmem:[#allocation8 + $0x5a8] sm:$0xff]
    %v1439 = vld [vmem:[#allocation8 + $0x5b0] sm:$0xff]
    %v1440 = vld [vmem:[#allocation8 + $0x5b8] sm:$0xff]
    %v1441 = vld [vmem:[#allocation8 + $0x5c0] sm:$0xff]
    %v1442 = vld [vmem:[#allocation8 + $0x5c8] sm:$0xff]
    %v1443 = vld [vmem:[#allocation8 + $0x5d0] sm:$0xff]
    %v1444 = vld [vmem:[#allocation8 + $0x5d8] sm:$0xff]
    %v1445 = vld [vmem:[#allocation8 + $0x5e0] sm:$0xff]
    %v1446 = vld [vmem:[#allocation8 + $0x5e8] sm:$0xff]
    %v1447 = vld [vmem:[#allocation8 + $0x5f0] sm:$0xff]
    %v1448 = vld [vmem:[#allocation8 + $0x5f8] sm:$0xff]
    %v1449 = vld [vmem:[%s4] sm:$0x3]
    %v1451 = vlaneseq
    %v1452 = vshrl.u32 %v1451, 7
    %v1453 = vsub.s32 0, %v1452
    %v1454 = vrot.slane %v1449, %v1453
    %v1455 = vlaneseq
    %v1456 = vshrl.u32 %v1455, 7
    %v1457 = vsub.s32 1, %v1456
    %v1458 = vrot.slane %v1449, %v1457
    %v1653 = vunpack.c.l.b16 %v1257
    %v1654 = vunpack.c.h.b16 %v1257
    %v1655 = vunpack.c.l.b16 %v1258
    %v1656 = vunpack.c.h.b16 %v1258
    %v1657 = vunpack.c.l.b16 %v1259
    %v1658 = vunpack.c.h.b16 %v1259
    %v1659 = vunpack.c.l.b16 %v1260
    %v1660 = vunpack.c.h.b16 %v1260
    %v1661 = vunpack.c.l.b16 %v1261
    %v1662 = vunpack.c.h.b16 %v1261
    %v1663 = vunpack.c.l.b16 %v1262
    %v1664 = vunpack.c.h.b16 %v1262
    %v1665 = vunpack.c.l.b16 %v1263
    %v1666 = vunpack.c.h.b16 %v1263
    %v1667 = vunpack.c.l.b16 %v1264
    %v1668 = vunpack.c.h.b16 %v1264
    %v1669 = vunpack.c.l.b16 %v1265
    %v1670 = vunpack.c.h.b16 %v1265
    %v1671 = vunpack.c.l.b16 %v1266
    %v1672 = vunpack.c.h.b16 %v1266
    %v1673 = vunpack.c.l.b16 %v1267
    %v1674 = vunpack.c.h.b16 %v1267
    %v1675 = vunpack.c.l.b16 %v1268
    %v1676 = vunpack.c.h.b16 %v1268
    %v1677 = vunpack.c.l.b16 %v1269
    %v1678 = vunpack.c.h.b16 %v1269
    %v1679 = vunpack.c.l.b16 %v1270
    %v1680 = vunpack.c.h.b16 %v1270
    %v1681 = vunpack.c.l.b16 %v1271
    %v1682 = vunpack.c.h.b16 %v1271
    %v1683 = vunpack.c.l.b16 %v1272
    %v1684 = vunpack.c.h.b16 %v1272
    %v1685 = vunpack.c.l.b16 %v1273
    %v1686 = vunpack.c.h.b16 %v1273
    %v1687 = vunpack.c.l.b16 %v1274
    %v1688 = vunpack.c.h.b16 %v1274
    %v1689 = vunpack.c.l.b16 %v1275
    %v1690 = vunpack.c.h.b16 %v1275
    %v1691 = vunpack.c.l.b16 %v1276
    %v1692 = vunpack.c.h.b16 %v1276
    %v1693 = vunpack.c.l.b16 %v1277
    %v1694 = vunpack.c.h.b16 %v1277
    %v1695 = vunpack.c.l.b16 %v1278
    %v1696 = vunpack.c.h.b16 %v1278
    %v1697 = vunpack.c.l.b16 %v1279
    %v1698 = vunpack.c.h.b16 %v1279
    %v1699 = vunpack.c.l.b16 %v1280
    %v1700 = vunpack.c.h.b16 %v1280
    %v1701 = vunpack.c.l.b16 %v1281
    %v1702 = vunpack.c.h.b16 %v1281
    %v1703 = vunpack.c.l.b16 %v1282
    %v1704 = vunpack.c.h.b16 %v1282
    %v1705 = vunpack.c.l.b16 %v1283
    %v1706 = vunpack.c.h.b16 %v1283
    %v1707 = vunpack.c.l.b16 %v1284
    %v1708 = vunpack.c.h.b16 %v1284
    %v1709 = vunpack.c.l.b16 %v1285
    %v1710 = vunpack.c.h.b16 %v1285
    %v1711 = vunpack.c.l.b16 %v1286
    %v1712 = vunpack.c.h.b16 %v1286
    %v1713 = vunpack.c.l.b16 %v1287
    %v1714 = vunpack.c.h.b16 %v1287
    %v1715 = vunpack.c.l.b16 %v1288
    %v1716 = vunpack.c.h.b16 %v1288
    %v1717 = vunpack.c.l.b16 %v1289
    %v1718 = vunpack.c.h.b16 %v1289
    %v1719 = vunpack.c.l.b16 %v1290
    %v1720 = vunpack.c.h.b16 %v1290
    %v1721 = vunpack.c.l.b16 %v1291
    %v1722 = vunpack.c.h.b16 %v1291
    %v1723 = vunpack.c.l.b16 %v1292
    %v1724 = vunpack.c.h.b16 %v1292
    %v1725 = vunpack.c.l.b16 %v1293
    %v1726 = vunpack.c.h.b16 %v1293
    %v1727 = vunpack.c.l.b16 %v1294
    %v1728 = vunpack.c.h.b16 %v1294
    %v1729 = vunpack.c.l.b16 %v1295
    %v1730 = vunpack.c.h.b16 %v1295
    %v1731 = vunpack.c.l.b16 %v1296
    %v1732 = vunpack.c.h.b16 %v1296
    %v1733 = vunpack.c.l.b16 %v1297
    %v1734 = vunpack.c.h.b16 %v1297
    %v1735 = vunpack.c.l.b16 %v1298
    %v1736 = vunpack.c.h.b16 %v1298
    %v1737 = vunpack.c.l.b16 %v1299
    %v1738 = vunpack.c.h.b16 %v1299
    %v1739 = vunpack.c.l.b16 %v1300
    %v1740 = vunpack.c.h.b16 %v1300
    %v1741 = vunpack.c.l.b16 %v1301
    %v1742 = vunpack.c.h.b16 %v1301
    %v1743 = vunpack.c.l.b16 %v1302
    %v1744 = vunpack.c.h.b16 %v1302
    %v1745 = vunpack.c.l.b16 %v1303
    %v1746 = vunpack.c.h.b16 %v1303
    %v1747 = vunpack.c.l.b16 %v1304
    %v1748 = vunpack.c.h.b16 %v1304
    %v1749 = vunpack.c.l.b16 %v1305
    %v1750 = vunpack.c.h.b16 %v1305
    %v1751 = vunpack.c.l.b16 %v1306
    %v1752 = vunpack.c.h.b16 %v1306
    %v1753 = vunpack.c.l.b16 %v1307
    %v1754 = vunpack.c.h.b16 %v1307
    %v1755 = vunpack.c.l.b16 %v1308
    %v1756 = vunpack.c.h.b16 %v1308
    %v1757 = vunpack.c.l.b16 %v1309
    %v1758 = vunpack.c.h.b16 %v1309
    %v1759 = vunpack.c.l.b16 %v1310
    %v1760 = vunpack.c.h.b16 %v1310
    %v1761 = vunpack.c.l.b16 %v1311
    %v1762 = vunpack.c.h.b16 %v1311
    %v1763 = vunpack.c.l.b16 %v1312
    %v1764 = vunpack.c.h.b16 %v1312
    %v1765 = vunpack.c.l.b16 %v1313
    %v1766 = vunpack.c.h.b16 %v1313
    %v1767 = vunpack.c.l.b16 %v1314
    %v1768 = vunpack.c.h.b16 %v1314
    %v1769 = vunpack.c.l.b16 %v1315
    %v1770 = vunpack.c.h.b16 %v1315
    %v1771 = vunpack.c.l.b16 %v1316
    %v1772 = vunpack.c.h.b16 %v1316
    %v1773 = vunpack.c.l.b16 %v1317
    %v1774 = vunpack.c.h.b16 %v1317
    %v1775 = vunpack.c.l.b16 %v1318
    %v1776 = vunpack.c.h.b16 %v1318
    %v1777 = vunpack.c.l.b16 %v1319
    %v1778 = vunpack.c.h.b16 %v1319
    %v1779 = vunpack.c.l.b16 %v1320
    %v1780 = vunpack.c.h.b16 %v1320
    %v1781 = vunpack.c.l.b16 %v1321
    %v1782 = vunpack.c.h.b16 %v1321
    %v1783 = vunpack.c.l.b16 %v1322
    %v1784 = vunpack.c.h.b16 %v1322
    %v1785 = vunpack.c.l.b16 %v1323
    %v1786 = vunpack.c.h.b16 %v1323
    %v1787 = vunpack.c.l.b16 %v1324
    %v1788 = vunpack.c.h.b16 %v1324
    %v1789 = vunpack.c.l.b16 %v1325
    %v1790 = vunpack.c.h.b16 %v1325
    %v1791 = vunpack.c.l.b16 %v1326
    %v1792 = vunpack.c.h.b16 %v1326
    %v1793 = vunpack.c.l.b16 %v1327
    %v1794 = vunpack.c.h.b16 %v1327
    %v1795 = vunpack.c.l.b16 %v1328
    %v1796 = vunpack.c.h.b16 %v1328
    %v1797 = vunpack.c.l.b16 %v1329
    %v1798 = vunpack.c.h.b16 %v1329
    %v1799 = vunpack.c.l.b16 %v1330
    %v1800 = vunpack.c.h.b16 %v1330
    %v1801 = vunpack.c.l.b16 %v1331
    %v1802 = vunpack.c.h.b16 %v1331
    %v1803 = vunpack.c.l.b16 %v1332
    %v1804 = vunpack.c.h.b16 %v1332
    %v1805 = vunpack.c.l.b16 %v1333
    %v1806 = vunpack.c.h.b16 %v1333
    %v1807 = vunpack.c.l.b16 %v1334
    %v1808 = vunpack.c.h.b16 %v1334
    %v1809 = vunpack.c.l.b16 %v1335
    %v1810 = vunpack.c.h.b16 %v1335
    %v1811 = vunpack.c.l.b16 %v1336
    %v1812 = vunpack.c.h.b16 %v1336
    %v1813 = vunpack.c.l.b16 %v1337
    %v1814 = vunpack.c.h.b16 %v1337
    %v1815 = vunpack.c.l.b16 %v1338
    %v1816 = vunpack.c.h.b16 %v1338
    %v1817 = vunpack.c.l.b16 %v1339
    %v1818 = vunpack.c.h.b16 %v1339
    %v1819 = vunpack.c.l.b16 %v1340
    %v1820 = vunpack.c.h.b16 %v1340
    %v1821 = vunpack.c.l.b16 %v1341
    %v1822 = vunpack.c.h.b16 %v1341
    %v1823 = vunpack.c.l.b16 %v1342
    %v1824 = vunpack.c.h.b16 %v1342
    %v1825 = vunpack.c.l.b16 %v1343
    %v1826 = vunpack.c.h.b16 %v1343
    %v1827 = vunpack.c.l.b16 %v1344
    %v1828 = vunpack.c.h.b16 %v1344
    %v1829 = vunpack.c.l.b16 %v1345
    %v1830 = vunpack.c.h.b16 %v1345
    %v1831 = vunpack.c.l.b16 %v1346
    %v1832 = vunpack.c.h.b16 %v1346
    %v1833 = vunpack.c.l.b16 %v1347
    %v1834 = vunpack.c.h.b16 %v1347
    %v1835 = vunpack.c.l.b16 %v1348
    %v1836 = vunpack.c.h.b16 %v1348
    %v1837 = vunpack.c.l.b16 %v1349
    %v1838 = vunpack.c.h.b16 %v1349
    %v1839 = vunpack.c.l.b16 %v1350
    %v1840 = vunpack.c.h.b16 %v1350
    %v1841 = vunpack.c.l.b16 %v1351
    %v1842 = vunpack.c.h.b16 %v1351
    %v1843 = vunpack.c.l.b16 %v1352
    %v1844 = vunpack.c.h.b16 %v1352
    %v1845 = vunpack.c.l.b16 %v1353
    %v1846 = vunpack.c.h.b16 %v1353
    %v1847 = vunpack.c.l.b16 %v1354
    %v1848 = vunpack.c.h.b16 %v1354
    %v1849 = vunpack.c.l.b16 %v1355
    %v1850 = vunpack.c.h.b16 %v1355
    %v1851 = vunpack.c.l.b16 %v1356
    %v1852 = vunpack.c.h.b16 %v1356
    %v1853 = vunpack.c.l.b16 %v1357
    %v1854 = vunpack.c.h.b16 %v1357
    %v1855 = vunpack.c.l.b16 %v1358
    %v1856 = vunpack.c.h.b16 %v1358
    %v1857 = vunpack.c.l.b16 %v1359
    %v1858 = vunpack.c.h.b16 %v1359
    %v1859 = vunpack.c.l.b16 %v1360
    %v1860 = vunpack.c.h.b16 %v1360
    %v1861 = vunpack.c.l.b16 %v1361
    %v1862 = vunpack.c.h.b16 %v1361
    %v1863 = vunpack.c.l.b16 %v1362
    %v1864 = vunpack.c.h.b16 %v1362
    %v1865 = vunpack.c.l.b16 %v1363
    %v1866 = vunpack.c.h.b16 %v1363
    %v1867 = vunpack.c.l.b16 %v1364
    %v1868 = vunpack.c.h.b16 %v1364
    %v1869 = vunpack.c.l.b16 %v1365
    %v1870 = vunpack.c.h.b16 %v1365
    %v1871 = vunpack.c.l.b16 %v1366
    %v1872 = vunpack.c.h.b16 %v1366
    %v1873 = vunpack.c.l.b16 %v1367
    %v1874 = vunpack.c.h.b16 %v1367
    %v1875 = vunpack.c.l.b16 %v1368
    %v1876 = vunpack.c.h.b16 %v1368
    %v1877 = vunpack.c.l.b16 %v1369
    %v1878 = vunpack.c.h.b16 %v1369
    %v1879 = vunpack.c.l.b16 %v1370
    %v1880 = vunpack.c.h.b16 %v1370
    %v1881 = vunpack.c.l.b16 %v1371
    %v1882 = vunpack.c.h.b16 %v1371
    %v1883 = vunpack.c.l.b16 %v1372
    %v1884 = vunpack.c.h.b16 %v1372
    %v1885 = vunpack.c.l.b16 %v1373
    %v1886 = vunpack.c.h.b16 %v1373
    %v1887 = vunpack.c.l.b16 %v1374
    %v1888 = vunpack.c.h.b16 %v1374
    %v1889 = vunpack.c.l.b16 %v1375
    %v1890 = vunpack.c.h.b16 %v1375
    %v1891 = vunpack.c.l.b16 %v1376
    %v1892 = vunpack.c.h.b16 %v1376
    %v1893 = vunpack.c.l.b16 %v1377
    %v1894 = vunpack.c.h.b16 %v1377
    %v1895 = vunpack.c.l.b16 %v1378
    %v1896 = vunpack.c.h.b16 %v1378
    %v1897 = vunpack.c.l.b16 %v1379
    %v1898 = vunpack.c.h.b16 %v1379
    %v1899 = vunpack.c.l.b16 %v1380
    %v1900 = vunpack.c.h.b16 %v1380
    %v1901 = vunpack.c.l.b16 %v1381
    %v1902 = vunpack.c.h.b16 %v1381
    %v1903 = vunpack.c.l.b16 %v1382
    %v1904 = vunpack.c.h.b16 %v1382
    %v1905 = vunpack.c.l.b16 %v1383
    %v1906 = vunpack.c.h.b16 %v1383
    %v1907 = vunpack.c.l.b16 %v1384
    %v1908 = vunpack.c.h.b16 %v1384
    %v1909 = vunpack.c.l.b16 %v1385
    %v1910 = vunpack.c.h.b16 %v1385
    %v1911 = vunpack.c.l.b16 %v1386
    %v1912 = vunpack.c.h.b16 %v1386
    %v1913 = vunpack.c.l.b16 %v1387
    %v1914 = vunpack.c.h.b16 %v1387
    %v1915 = vunpack.c.l.b16 %v1388
    %v1916 = vunpack.c.h.b16 %v1388
    %v1917 = vunpack.c.l.b16 %v1389
    %v1918 = vunpack.c.h.b16 %v1389
    %v1919 = vunpack.c.l.b16 %v1390
    %v1920 = vunpack.c.h.b16 %v1390
    %v1921 = vunpack.c.l.b16 %v1391
    %v1922 = vunpack.c.h.b16 %v1391
    %v1923 = vunpack.c.l.b16 %v1392
    %v1924 = vunpack.c.h.b16 %v1392
    %v1925 = vunpack.c.l.b16 %v1393
    %v1926 = vunpack.c.h.b16 %v1393
    %v1927 = vunpack.c.l.b16 %v1394
    %v1928 = vunpack.c.h.b16 %v1394
    %v1929 = vunpack.c.l.b16 %v1395
    %v1930 = vunpack.c.h.b16 %v1395
    %v1931 = vunpack.c.l.b16 %v1396
    %v1932 = vunpack.c.h.b16 %v1396
    %v1933 = vunpack.c.l.b16 %v1397
    %v1934 = vunpack.c.h.b16 %v1397
    %v1935 = vunpack.c.l.b16 %v1398
    %v1936 = vunpack.c.h.b16 %v1398
    %v1937 = vunpack.c.l.b16 %v1399
    %v1938 = vunpack.c.h.b16 %v1399
    %v1939 = vunpack.c.l.b16 %v1400
    %v1940 = vunpack.c.h.b16 %v1400
    %v1941 = vunpack.c.l.b16 %v1401
    %v1942 = vunpack.c.h.b16 %v1401
    %v1943 = vunpack.c.l.b16 %v1402
    %v1944 = vunpack.c.h.b16 %v1402
    %v1945 = vunpack.c.l.b16 %v1403
    %v1946 = vunpack.c.h.b16 %v1403
    %v1947 = vunpack.c.l.b16 %v1404
    %v1948 = vunpack.c.h.b16 %v1404
    %v1949 = vunpack.c.l.b16 %v1405
    %v1950 = vunpack.c.h.b16 %v1405
    %v1951 = vunpack.c.l.b16 %v1406
    %v1952 = vunpack.c.h.b16 %v1406
    %v1953 = vunpack.c.l.b16 %v1407
    %v1954 = vunpack.c.h.b16 %v1407
    %v1955 = vunpack.c.l.b16 %v1408
    %v1956 = vunpack.c.h.b16 %v1408
    %v1957 = vunpack.c.l.b16 %v1409
    %v1958 = vunpack.c.h.b16 %v1409
    %v1959 = vunpack.c.l.b16 %v1410
    %v1960 = vunpack.c.h.b16 %v1410
    %v1961 = vunpack.c.l.b16 %v1411
    %v1962 = vunpack.c.h.b16 %v1411
    %v1963 = vunpack.c.l.b16 %v1412
    %v1964 = vunpack.c.h.b16 %v1412
    %v1965 = vunpack.c.l.b16 %v1413
    %v1966 = vunpack.c.h.b16 %v1413
    %v1967 = vunpack.c.l.b16 %v1414
    %v1968 = vunpack.c.h.b16 %v1414
    %v1969 = vunpack.c.l.b16 %v1415
    %v1970 = vunpack.c.h.b16 %v1415
    %v1971 = vunpack.c.l.b16 %v1416
    %v1972 = vunpack.c.h.b16 %v1416
    %v1973 = vunpack.c.l.b16 %v1417
    %v1974 = vunpack.c.h.b16 %v1417
    %v1975 = vunpack.c.l.b16 %v1418
    %v1976 = vunpack.c.h.b16 %v1418
    %v1977 = vunpack.c.l.b16 %v1419
    %v1978 = vunpack.c.h.b16 %v1419
    %v1979 = vunpack.c.l.b16 %v1420
    %v1980 = vunpack.c.h.b16 %v1420
    %v1981 = vunpack.c.l.b16 %v1421
    %v1982 = vunpack.c.h.b16 %v1421
    %v1983 = vunpack.c.l.b16 %v1422
    %v1984 = vunpack.c.h.b16 %v1422
    %v1985 = vunpack.c.l.b16 %v1423
    %v1986 = vunpack.c.h.b16 %v1423
    %v1987 = vunpack.c.l.b16 %v1424
    %v1988 = vunpack.c.h.b16 %v1424
    %v1989 = vunpack.c.l.b16 %v1425
    %v1990 = vunpack.c.h.b16 %v1425
    %v1991 = vunpack.c.l.b16 %v1426
    %v1992 = vunpack.c.h.b16 %v1426
    %v1993 = vunpack.c.l.b16 %v1427
    %v1994 = vunpack.c.h.b16 %v1427
    %v1995 = vunpack.c.l.b16 %v1428
    %v1996 = vunpack.c.h.b16 %v1428
    %v1997 = vunpack.c.l.b16 %v1429
    %v1998 = vunpack.c.h.b16 %v1429
    %v1999 = vunpack.c.l.b16 %v1430
    %v2000 = vunpack.c.h.b16 %v1430
    %v2001 = vunpack.c.l.b16 %v1431
    %v2002 = vunpack.c.h.b16 %v1431
    %v2003 = vunpack.c.l.b16 %v1432
    %v2004 = vunpack.c.h.b16 %v1432
    %v2005 = vunpack.c.l.b16 %v1433
    %v2006 = vunpack.c.h.b16 %v1433
    %v2007 = vunpack.c.l.b16 %v1434
    %v2008 = vunpack.c.h.b16 %v1434
    %v2009 = vunpack.c.l.b16 %v1435
    %v2010 = vunpack.c.h.b16 %v1435
    %v2011 = vunpack.c.l.b16 %v1436
    %v2012 = vunpack.c.h.b16 %v1436
    %v2013 = vunpack.c.l.b16 %v1437
    %v2014 = vunpack.c.h.b16 %v1437
    %v2015 = vunpack.c.l.b16 %v1438
    %v2016 = vunpack.c.h.b16 %v1438
    %v2017 = vunpack.c.l.b16 %v1439
    %v2018 = vunpack.c.h.b16 %v1439
    %v2019 = vunpack.c.l.b16 %v1440
    %v2020 = vunpack.c.h.b16 %v1440
    %v2021 = vunpack.c.l.b16 %v1441
    %v2022 = vunpack.c.h.b16 %v1441
    %v2023 = vunpack.c.l.b16 %v1442
    %v2024 = vunpack.c.h.b16 %v1442
    %v2025 = vunpack.c.l.b16 %v1443
    %v2026 = vunpack.c.h.b16 %v1443
    %v2027 = vunpack.c.l.b16 %v1444
    %v2028 = vunpack.c.h.b16 %v1444
    %v2029 = vunpack.c.l.b16 %v1445
    %v2030 = vunpack.c.h.b16 %v1445
    %v2031 = vunpack.c.l.b16 %v1446
    %v2032 = vunpack.c.h.b16 %v1446
    %v2033 = vunpack.c.l.b16 %v1447
    %v2034 = vunpack.c.h.b16 %v1447
    %v2035 = vunpack.c.l.b16 %v1448
    %v2036 = vunpack.c.h.b16 %v1448
    %v2037 = vpack.c.b16 %v1655, %v1653
    %v2038 = vpack.c.b16 %v1656, %v1654
    %v2039 = vpack.c.b16 %v1659, %v1657
    %v2040 = vpack.c.b16 %v1660, %v1658
    %v2041 = vpack.c.b16 %v1663, %v1661
    %v2042 = vpack.c.b16 %v1664, %v1662
    %v2043 = vpack.c.b16 %v1667, %v1665
    %v2044 = vpack.c.b16 %v1668, %v1666
    %v2045 = vpack.c.b16 %v1671, %v1669
    %v2046 = vpack.c.b16 %v1672, %v1670
    %v2047 = vpack.c.b16 %v1675, %v1673
    %v2048 = vpack.c.b16 %v1676, %v1674
    %v2049 = vpack.c.b16 %v1679, %v1677
    %v2050 = vpack.c.b16 %v1680, %v1678
    %v2051 = vpack.c.b16 %v1683, %v1681
    %v2052 = vpack.c.b16 %v1684, %v1682
    %v2053 = vpack.c.b16 %v1687, %v1685
    %v2054 = vpack.c.b16 %v1688, %v1686
    %v2055 = vpack.c.b16 %v1691, %v1689
    %v2056 = vpack.c.b16 %v1692, %v1690
    %v2057 = vpack.c.b16 %v1695, %v1693
    %v2058 = vpack.c.b16 %v1696, %v1694
    %v2059 = vpack.c.b16 %v1699, %v1697
    %v2060 = vpack.c.b16 %v1700, %v1698
    %v2061 = vpack.c.b16 %v1703, %v1701
    %v2062 = vpack.c.b16 %v1704, %v1702
    %v2063 = vpack.c.b16 %v1707, %v1705
    %v2064 = vpack.c.b16 %v1708, %v1706
    %v2065 = vpack.c.b16 %v1711, %v1709
    %v2066 = vpack.c.b16 %v1712, %v1710
    %v2067 = vpack.c.b16 %v1715, %v1713
    %v2068 = vpack.c.b16 %v1716, %v1714
    %v2069 = vpack.c.b16 %v1719, %v1717
    %v2070 = vpack.c.b16 %v1720, %v1718
    %v2071 = vpack.c.b16 %v1723, %v1721
    %v2072 = vpack.c.b16 %v1724, %v1722
    %v2073 = vpack.c.b16 %v1727, %v1725
    %v2074 = vpack.c.b16 %v1728, %v1726
    %v2075 = vpack.c.b16 %v1731, %v1729
    %v2076 = vpack.c.b16 %v1732, %v1730
    %v2077 = vpack.c.b16 %v1735, %v1733
    %v2078 = vpack.c.b16 %v1736, %v1734
    %v2079 = vpack.c.b16 %v1739, %v1737
    %v2080 = vpack.c.b16 %v1740, %v1738
    %v2081 = vpack.c.b16 %v1743, %v1741
    %v2082 = vpack.c.b16 %v1744, %v1742
    %v2083 = vpack.c.b16 %v1747, %v1745
    %v2084 = vpack.c.b16 %v1748, %v1746
    %v2085 = vpack.c.b16 %v1751, %v1749
    %v2086 = vpack.c.b16 %v1752, %v1750
    %v2087 = vpack.c.b16 %v1755, %v1753
    %v2088 = vpack.c.b16 %v1756, %v1754
    %v2089 = vpack.c.b16 %v1759, %v1757
    %v2090 = vpack.c.b16 %v1760, %v1758
    %v2091 = vpack.c.b16 %v1763, %v1761
    %v2092 = vpack.c.b16 %v1764, %v1762
    %v2093 = vpack.c.b16 %v1767, %v1765
    %v2094 = vpack.c.b16 %v1768, %v1766
    %v2095 = vpack.c.b16 %v1771, %v1769
    %v2096 = vpack.c.b16 %v1772, %v1770
    %v2097 = vpack.c.b16 %v1775, %v1773
    %v2098 = vpack.c.b16 %v1776, %v1774
    %v2099 = vpack.c.b16 %v1779, %v1777
    %v2100 = vpack.c.b16 %v1780, %v1778
    %v2101 = vpack.c.b16 %v1783, %v1781
    %v2102 = vpack.c.b16 %v1784, %v1782
    %v2103 = vpack.c.b16 %v1787, %v1785
    %v2104 = vpack.c.b16 %v1788, %v1786
    %v2105 = vpack.c.b16 %v1791, %v1789
    %v2106 = vpack.c.b16 %v1792, %v1790
    %v2107 = vpack.c.b16 %v1795, %v1793
    %v2108 = vpack.c.b16 %v1796, %v1794
    %v2109 = vpack.c.b16 %v1799, %v1797
    %v2110 = vpack.c.b16 %v1800, %v1798
    %v2111 = vpack.c.b16 %v1803, %v1801
    %v2112 = vpack.c.b16 %v1804, %v1802
    %v2113 = vpack.c.b16 %v1807, %v1805
    %v2114 = vpack.c.b16 %v1808, %v1806
    %v2115 = vpack.c.b16 %v1811, %v1809
    %v2116 = vpack.c.b16 %v1812, %v1810
    %v2117 = vpack.c.b16 %v1815, %v1813
    %v2118 = vpack.c.b16 %v1816, %v1814
    %v2119 = vpack.c.b16 %v1819, %v1817
    %v2120 = vpack.c.b16 %v1820, %v1818
    %v2121 = vpack.c.b16 %v1823, %v1821
    %v2122 = vpack.c.b16 %v1824, %v1822
    %v2123 = vpack.c.b16 %v1827, %v1825
    %v2124 = vpack.c.b16 %v1828, %v1826
    %v2125 = vpack.c.b16 %v1831, %v1829
    %v2126 = vpack.c.b16 %v1832, %v1830
    %v2127 = vpack.c.b16 %v1835, %v1833
    %v2128 = vpack.c.b16 %v1836, %v1834
    %v2129 = vpack.c.b16 %v1839, %v1837
    %v2130 = vpack.c.b16 %v1840, %v1838
    %v2131 = vpack.c.b16 %v1843, %v1841
    %v2132 = vpack.c.b16 %v1844, %v1842
    %v2133 = vpack.c.b16 %v1847, %v1845
    %v2134 = vpack.c.b16 %v1848, %v1846
    %v2135 = vpack.c.b16 %v1851, %v1849
    %v2136 = vpack.c.b16 %v1852, %v1850
    %v2137 = vpack.c.b16 %v1855, %v1853
    %v2138 = vpack.c.b16 %v1856, %v1854
    %v2139 = vpack.c.b16 %v1859, %v1857
    %v2140 = vpack.c.b16 %v1860, %v1858
    %v2141 = vpack.c.b16 %v1863, %v1861
    %v2142 = vpack.c.b16 %v1864, %v1862
    %v2143 = vpack.c.b16 %v1867, %v1865
    %v2144 = vpack.c.b16 %v1868, %v1866
    %v2145 = vpack.c.b16 %v1871, %v1869
    %v2146 = vpack.c.b16 %v1872, %v1870
    %v2147 = vpack.c.b16 %v1875, %v1873
    %v2148 = vpack.c.b16 %v1876, %v1874
    %v2149 = vpack.c.b16 %v1879, %v1877
    %v2150 = vpack.c.b16 %v1880, %v1878
    %v2151 = vpack.c.b16 %v1883, %v1881
    %v2152 = vpack.c.b16 %v1884, %v1882
    %v2153 = vpack.c.b16 %v1887, %v1885
    %v2154 = vpack.c.b16 %v1888, %v1886
    %v2155 = vpack.c.b16 %v1891, %v1889
    %v2156 = vpack.c.b16 %v1892, %v1890
    %v2157 = vpack.c.b16 %v1895, %v1893
    %v2158 = vpack.c.b16 %v1896, %v1894
    %v2159 = vpack.c.b16 %v1899, %v1897
    %v2160 = vpack.c.b16 %v1900, %v1898
    %v2161 = vpack.c.b16 %v1903, %v1901
    %v2162 = vpack.c.b16 %v1904, %v1902
    %v2163 = vpack.c.b16 %v1907, %v1905
    %v2164 = vpack.c.b16 %v1908, %v1906
    %v2165 = vpack.c.b16 %v1911, %v1909
    %v2166 = vpack.c.b16 %v1912, %v1910
    %v2167 = vpack.c.b16 %v1915, %v1913
    %v2168 = vpack.c.b16 %v1916, %v1914
    %v2169 = vpack.c.b16 %v1919, %v1917
    %v2170 = vpack.c.b16 %v1920, %v1918
    %v2171 = vpack.c.b16 %v1923, %v1921
    %v2172 = vpack.c.b16 %v1924, %v1922
    %v2173 = vpack.c.b16 %v1927, %v1925
    %v2174 = vpack.c.b16 %v1928, %v1926
    %v2175 = vpack.c.b16 %v1931, %v1929
    %v2176 = vpack.c.b16 %v1932, %v1930
    %v2177 = vpack.c.b16 %v1935, %v1933
    %v2178 = vpack.c.b16 %v1936, %v1934
    %v2179 = vpack.c.b16 %v1939, %v1937
    %v2180 = vpack.c.b16 %v1940, %v1938
    %v2181 = vpack.c.b16 %v1943, %v1941
    %v2182 = vpack.c.b16 %v1944, %v1942
    %v2183 = vpack.c.b16 %v1947, %v1945
    %v2184 = vpack.c.b16 %v1948, %v1946
    %v2185 = vpack.c.b16 %v1951, %v1949
    %v2186 = vpack.c.b16 %v1952, %v1950
    %v2187 = vpack.c.b16 %v1955, %v1953
    %v2188 = vpack.c.b16 %v1956, %v1954
    %v2189 = vpack.c.b16 %v1959, %v1957
    %v2190 = vpack.c.b16 %v1960, %v1958
    %v2191 = vpack.c.b16 %v1963, %v1961
    %v2192 = vpack.c.b16 %v1964, %v1962
    %v2193 = vpack.c.b16 %v1967, %v1965
    %v2194 = vpack.c.b16 %v1968, %v1966
    %v2195 = vpack.c.b16 %v1971, %v1969
    %v2196 = vpack.c.b16 %v1972, %v1970
    %v2197 = vpack.c.b16 %v1975, %v1973
    %v2198 = vpack.c.b16 %v1976, %v1974
    %v2199 = vpack.c.b16 %v1979, %v1977
    %v2200 = vpack.c.b16 %v1980, %v1978
    %v2201 = vpack.c.b16 %v1983, %v1981
    %v2202 = vpack.c.b16 %v1984, %v1982
    %v2203 = vpack.c.b16 %v1987, %v1985
    %v2204 = vpack.c.b16 %v1988, %v1986
    %v2205 = vpack.c.b16 %v1991, %v1989
    %v2206 = vpack.c.b16 %v1992, %v1990
    %v2207 = vpack.c.b16 %v1995, %v1993
    %v2208 = vpack.c.b16 %v1996, %v1994
    %v2209 = vpack.c.b16 %v1999, %v1997
    %v2210 = vpack.c.b16 %v2000, %v1998
    %v2211 = vpack.c.b16 %v2003, %v2001
    %v2212 = vpack.c.b16 %v2004, %v2002
    %v2213 = vpack.c.b16 %v2007, %v2005
    %v2214 = vpack.c.b16 %v2008, %v2006
    %v2215 = vpack.c.b16 %v2011, %v2009
    %v2216 = vpack.c.b16 %v2012, %v2010
    %v2217 = vpack.c.b16 %v2015, %v2013
    %v2218 = vpack.c.b16 %v2016, %v2014
    %v2219 = vpack.c.b16 %v2019, %v2017
    %v2220 = vpack.c.b16 %v2020, %v2018
    %v2221 = vpack.c.b16 %v2023, %v2021
    %v2222 = vpack.c.b16 %v2024, %v2022
    %v2223 = vpack.c.b16 %v2027, %v2025
    %v2224 = vpack.c.b16 %v2028, %v2026
    %v2225 = vpack.c.b16 %v2031, %v2029
    %v2226 = vpack.c.b16 %v2032, %v2030
    %v2227 = vpack.c.b16 %v2035, %v2033
    %v2228 = vpack.c.b16 %v2036, %v2034
    %2421 = vmatprep.subr.bf16.mxu0 %v2052
    %2422 = vmatpush1.bf16.msra.mxu0 %v2051
    %2423 = vmatprep.subr.bf16.mxu0 %v2050
    %2424 = vmatpush1.bf16.msra.mxu0 %v2049
    %2425 = vmatprep.subr.bf16.mxu0 %v2048
    %2426 = vmatpush1.bf16.msra.mxu0 %v2047
    %2427 = vmatprep.subr.bf16.mxu0 %v2046
    %2428 = vmatpush1.bf16.msra.mxu0 %v2045
    %2429 = vmatprep.subr.bf16.mxu0 %v2044
    %2430 = vmatpush1.bf16.msra.mxu0 %v2043
    %2431 = vmatprep.subr.bf16.mxu0 %v2042
    %2432 = vmatpush1.bf16.msra.mxu0 %v2041
    %2433 = vmatprep.subr.bf16.mxu0 %v2040
    %2434 = vmatpush1.bf16.msra.mxu0 %v2039
    %2435 = vmatprep.subr.bf16.mxu0 %v2038
    %2436 = vmatpush1.bf16.msra.mxu0 %v2037
    %2437 = vmatprep.subr.bf16.mxu0 %v2068
    %2438 = vmatpush2.bf16.msra.mxu0 %v2067
    %2439 = vmatprep.subr.bf16.mxu0 %v2066
    %2440 = vmatpush2.bf16.msra.mxu0 %v2065
    %2441 = vmatprep.subr.bf16.mxu0 %v2064
    %2442 = vmatpush2.bf16.msra.mxu0 %v2063
    %2443 = vmatprep.subr.bf16.mxu0 %v2062
    %2444 = vmatpush2.bf16.msra.mxu0 %v2061
    %2445 = vmatprep.subr.bf16.mxu0 %v2060
    %2446 = vmatpush2.bf16.msra.mxu0 %v2059
    %2447 = vmatprep.subr.bf16.mxu0 %v2058
    %2448 = vmatpush2.bf16.msra.mxu0 %v2057
    %2449 = vmatprep.subr.bf16.mxu0 %v2056
    %2450 = vmatpush2.bf16.msra.mxu0 %v2055
    %2451 = vmatprep.subr.bf16.mxu0 %v2054
    %2452 = vmatpush2.bf16.msra.mxu0 %v2053
    %2453 = vmatprep.mubr.bf16.mxu0 %v1246
    %2454 = vmatmul.mubr.bf16.gmra.mxu0 %v1245
    %v2455 = vpop.f32.mrf.mxu0
    %v2456 = vadd.f32 %v1454, %v2455
    %v2457 = vpop.f32.mrf.mxu0
    %v2458 = vadd.f32 %v1458, %v2457
    %v2459 = vpop.f32.mrf.mxu0
    %v2460 = vpop.f32.mrf.mxu0
    %2461 = vdwg.mxu0
    %2462 = vmatprep.subr.bf16.mxu0 %v2084
    %2463 = vmatpush1.bf16.msra.mxu0 %v2083
    %2464 = vmatprep.subr.bf16.mxu0 %v2082
    %2465 = vmatpush1.bf16.msra.mxu0 %v2081
    %2466 = vmatprep.subr.bf16.mxu0 %v2080
    %2467 = vmatpush1.bf16.msra.mxu0 %v2079
    %2468 = vmatprep.subr.bf16.mxu0 %v2078
    %2469 = vmatpush1.bf16.msra.mxu0 %v2077
    %2470 = vmatprep.subr.bf16.mxu0 %v2076
    %2471 = vmatpush1.bf16.msra.mxu0 %v2075
    %2472 = vmatprep.subr.bf16.mxu0 %v2074
    %2473 = vmatpush1.bf16.msra.mxu0 %v2073
    %2474 = vmatprep.subr.bf16.mxu0 %v2072
    %2475 = vmatpush1.bf16.msra.mxu0 %v2071
    %2476 = vmatprep.subr.bf16.mxu0 %v2070
    %2477 = vmatpush1.bf16.msra.mxu0 %v2069
    %2478 = vmatprep.subr.bf16.mxu0 %v2100
    %2479 = vmatpush2.bf16.msra.mxu0 %v2099
    %2480 = vmatprep.subr.bf16.mxu0 %v2098
    %2481 = vmatpush2.bf16.msra.mxu0 %v2097
    %2482 = vmatprep.subr.bf16.mxu0 %v2096
    %2483 = vmatpush2.bf16.msra.mxu0 %v2095
    %2484 = vmatprep.subr.bf16.mxu0 %v2094
    %2485 = vmatpush2.bf16.msra.mxu0 %v2093
    %2486 = vmatprep.subr.bf16.mxu0 %v2092
    %2487 = vmatpush2.bf16.msra.mxu0 %v2091
    %2488 = vmatprep.subr.bf16.mxu0 %v2090
    %2489 = vmatpush2.bf16.msra.mxu0 %v2089
    %2490 = vmatprep.subr.bf16.mxu0 %v2088
    %2491 = vmatpush2.bf16.msra.mxu0 %v2087
    %2492 = vmatprep.subr.bf16.mxu0 %v2086
    %2493 = vmatpush2.bf16.msra.mxu0 %v2085
    %2494 = vmatprep.mubr.bf16.mxu0 %v1248
    %2495 = vmatmul.mubr.bf16.gmra.mxu0 %v1247
    %v2496 = vpop.f32.mrf.mxu0
    %v2497 = vadd.f32 %v2456, %v2496
    %v2498 = vpop.f32.mrf.mxu0
    %v2499 = vadd.f32 %v2458, %v2498
    %v2500 = vpop.f32.mrf.mxu0
    %v2501 = vpop.f32.mrf.mxu0
    %2502 = vdwg.mxu0
    %2503 = vmatprep.subr.bf16.mxu0 %v2116
    %2504 = vmatpush1.bf16.msra.mxu0 %v2115
    %2505 = vmatprep.subr.bf16.mxu0 %v2114
    %2506 = vmatpush1.bf16.msra.mxu0 %v2113
    %2507 = vmatprep.subr.bf16.mxu0 %v2112
    %2508 = vmatpush1.bf16.msra.mxu0 %v2111
    %2509 = vmatprep.subr.bf16.mxu0 %v2110
    %2510 = vmatpush1.bf16.msra.mxu0 %v2109
    %2511 = vmatprep.subr.bf16.mxu0 %v2108
    %2512 = vmatpush1.bf16.msra.mxu0 %v2107
    %2513 = vmatprep.subr.bf16.mxu0 %v2106
    %2514 = vmatpush1.bf16.msra.mxu0 %v2105
    %2515 = vmatprep.subr.bf16.mxu0 %v2104
    %2516 = vmatpush1.bf16.msra.mxu0 %v2103
    %2517 = vmatprep.subr.bf16.mxu0 %v2102
    %2518 = vmatpush1.bf16.msra.mxu0 %v2101
    %2519 = vmatprep.subr.bf16.mxu0 %v2132
    %2520 = vmatpush2.bf16.msra.mxu0 %v2131
    %2521 = vmatprep.subr.bf16.mxu0 %v2130
    %2522 = vmatpush2.bf16.msra.mxu0 %v2129
    %2523 = vmatprep.subr.bf16.mxu0 %v2128
    %2524 = vmatpush2.bf16.msra.mxu0 %v2127
    %2525 = vmatprep.subr.bf16.mxu0 %v2126
    %2526 = vmatpush2.bf16.msra.mxu0 %v2125
    %2527 = vmatprep.subr.bf16.mxu0 %v2124
    %2528 = vmatpush2.bf16.msra.mxu0 %v2123
    %2529 = vmatprep.subr.bf16.mxu0 %v2122
    %2530 = vmatpush2.bf16.msra.mxu0 %v2121
    %2531 = vmatprep.subr.bf16.mxu0 %v2120
    %2532 = vmatpush2.bf16.msra.mxu0 %v2119
    %2533 = vmatprep.subr.bf16.mxu0 %v2118
    %2534 = vmatpush2.bf16.msra.mxu0 %v2117
    %2535 = vmatprep.mubr.bf16.mxu0 %v1250
    %2536 = vmatmul.mubr.bf16.gmra.mxu0 %v1249
    %v2537 = vpop.f32.mrf.mxu0
    %v2538 = vadd.f32 %v2497, %v2537
    %v2539 = vpop.f32.mrf.mxu0
    %v2540 = vadd.f32 %v2499, %v2539
    %v2541 = vpop.f32.mrf.mxu0
    %v2542 = vpop.f32.mrf.mxu0
    %2543 = vdwg.mxu0
    %2544 = vmatprep.subr.bf16.mxu0 %v2148
    %2545 = vmatpush1.bf16.msra.mxu0 %v2147
    %2546 = vmatprep.subr.bf16.mxu0 %v2146
    %2547 = vmatpush1.bf16.msra.mxu0 %v2145
    %2548 = vmatprep.subr.bf16.mxu0 %v2144
    %2549 = vmatpush1.bf16.msra.mxu0 %v2143
    %2550 = vmatprep.subr.bf16.mxu0 %v2142
    %2551 = vmatpush1.bf16.msra.mxu0 %v2141
    %2552 = vmatprep.subr.bf16.mxu0 %v2140
    %2553 = vmatpush1.bf16.msra.mxu0 %v2139
    %2554 = vmatprep.subr.bf16.mxu0 %v2138
    %2555 = vmatpush1.bf16.msra.mxu0 %v2137
    %2556 = vmatprep.subr.bf16.mxu0 %v2136
    %2557 = vmatpush1.bf16.msra.mxu0 %v2135
    %2558 = vmatprep.subr.bf16.mxu0 %v2134
    %2559 = vmatpush1.bf16.msra.mxu0 %v2133
    %2560 = vmatprep.subr.bf16.mxu0 %v2164
    %2561 = vmatpush2.bf16.msra.mxu0 %v2163
    %2562 = vmatprep.subr.bf16.mxu0 %v2162
    %2563 = vmatpush2.bf16.msra.mxu0 %v2161
    %2564 = vmatprep.subr.bf16.mxu0 %v2160
    %2565 = vmatpush2.bf16.msra.mxu0 %v2159
    %2566 = vmatprep.subr.bf16.mxu0 %v2158
    %2567 = vmatpush2.bf16.msra.mxu0 %v2157
    %2568 = vmatprep.subr.bf16.mxu0 %v2156
    %2569 = vmatpush2.bf16.msra.mxu0 %v2155
    %2570 = vmatprep.subr.bf16.mxu0 %v2154
    %2571 = vmatpush2.bf16.msra.mxu0 %v2153
    %2572 = vmatprep.subr.bf16.mxu0 %v2152
    %2573 = vmatpush2.bf16.msra.mxu0 %v2151
    %2574 = vmatprep.subr.bf16.mxu0 %v2150
    %2575 = vmatpush2.bf16.msra.mxu0 %v2149
    %2576 = vmatprep.mubr.bf16.mxu0 %v1252
    %2577 = vmatmul.mubr.bf16.gmra.mxu0 %v1251
    %v2578 = vpop.f32.mrf.mxu0
    %v2579 = vadd.f32 %v2538, %v2578
    %v2580 = vpop.f32.mrf.mxu0
    %v2581 = vadd.f32 %v2540, %v2580
    %v2582 = vpop.f32.mrf.mxu0
    %v2583 = vpop.f32.mrf.mxu0
    %2584 = vdwg.mxu0
    %2585 = vmatprep.subr.bf16.mxu0 %v2180
    %2586 = vmatpush1.bf16.msra.mxu0 %v2179
    %2587 = vmatprep.subr.bf16.mxu0 %v2178
    %2588 = vmatpush1.bf16.msra.mxu0 %v2177
    %2589 = vmatprep.subr.bf16.mxu0 %v2176
    %2590 = vmatpush1.bf16.msra.mxu0 %v2175
    %2591 = vmatprep.subr.bf16.mxu0 %v2174
    %2592 = vmatpush1.bf16.msra.mxu0 %v2173
    %2593 = vmatprep.subr.bf16.mxu0 %v2172
    %2594 = vmatpush1.bf16.msra.mxu0 %v2171
    %2595 = vmatprep.subr.bf16.mxu0 %v2170
    %2596 = vmatpush1.bf16.msra.mxu0 %v2169
    %2597 = vmatprep.subr.bf16.mxu0 %v2168
    %2598 = vmatpush1.bf16.msra.mxu0 %v2167
    %2599 = vmatprep.subr.bf16.mxu0 %v2166
    %2600 = vmatpush1.bf16.msra.mxu0 %v2165
    %2601 = vmatprep.subr.bf16.mxu0 %v2196
    %2602 = vmatpush2.bf16.msra.mxu0 %v2195
    %2603 = vmatprep.subr.bf16.mxu0 %v2194
    %2604 = vmatpush2.bf16.msra.mxu0 %v2193
    %2605 = vmatprep.subr.bf16.mxu0 %v2192
    %2606 = vmatpush2.bf16.msra.mxu0 %v2191
    %2607 = vmatprep.subr.bf16.mxu0 %v2190
    %2608 = vmatpush2.bf16.msra.mxu0 %v2189
    %2609 = vmatprep.subr.bf16.mxu0 %v2188
    %2610 = vmatpush2.bf16.msra.mxu0 %v2187
    %2611 = vmatprep.subr.bf16.mxu0 %v2186
    %2612 = vmatpush2.bf16.msra.mxu0 %v2185
    %2613 = vmatprep.subr.bf16.mxu0 %v2184
    %2614 = vmatpush2.bf16.msra.mxu0 %v2183
    %2615 = vmatprep.subr.bf16.mxu0 %v2182
    %2616 = vmatpush2.bf16.msra.mxu0 %v2181
    %2617 = vmatprep.mubr.bf16.mxu0 %v1254
    %2618 = vmatmul.mubr.bf16.gmra.mxu0 %v1253
    %v2619 = vpop.f32.mrf.mxu0
    %v2620 = vadd.f32 %v2579, %v2619
    %v2621 = vpop.f32.mrf.mxu0
    %v2622 = vadd.f32 %v2581, %v2621
    %v2623 = vpop.f32.mrf.mxu0
    %v2624 = vpop.f32.mrf.mxu0
    %2625 = vdwg.mxu0
    %2626 = vmatprep.subr.bf16.mxu0 %v2212
    %2627 = vmatpush1.bf16.msra.mxu0 %v2211
    %2628 = vmatprep.subr.bf16.mxu0 %v2210
    %2629 = vmatpush1.bf16.msra.mxu0 %v2209
    %2630 = vmatprep.subr.bf16.mxu0 %v2208
    %2631 = vmatpush1.bf16.msra.mxu0 %v2207
    %2632 = vmatprep.subr.bf16.mxu0 %v2206
    %2633 = vmatpush1.bf16.msra.mxu0 %v2205
    %2634 = vmatprep.subr.bf16.mxu0 %v2204
    %2635 = vmatpush1.bf16.msra.mxu0 %v2203
    %2636 = vmatprep.subr.bf16.mxu0 %v2202
    %2637 = vmatpush1.bf16.msra.mxu0 %v2201
    %2638 = vmatprep.subr.bf16.mxu0 %v2200
    %2639 = vmatpush1.bf16.msra.mxu0 %v2199
    %2640 = vmatprep.subr.bf16.mxu0 %v2198
    %2641 = vmatpush1.bf16.msra.mxu0 %v2197
    %2642 = vmatprep.subr.bf16.mxu0 %v2228
    %2643 = vmatpush2.bf16.msra.mxu0 %v2227
    %2644 = vmatprep.subr.bf16.mxu0 %v2226
    %2645 = vmatpush2.bf16.msra.mxu0 %v2225
    %2646 = vmatprep.subr.bf16.mxu0 %v2224
    %2647 = vmatpush2.bf16.msra.mxu0 %v2223
    %2648 = vmatprep.subr.bf16.mxu0 %v2222
    %2649 = vmatpush2.bf16.msra.mxu0 %v2221
    %2650 = vmatprep.subr.bf16.mxu0 %v2220
    %2651 = vmatpush2.bf16.msra.mxu0 %v2219
    %2652 = vmatprep.subr.bf16.mxu0 %v2218
    %2653 = vmatpush2.bf16.msra.mxu0 %v2217
    %2654 = vmatprep.subr.bf16.mxu0 %v2216
    %2655 = vmatpush2.bf16.msra.mxu0 %v2215
    %2656 = vmatprep.subr.bf16.mxu0 %v2214
    %2657 = vmatpush2.bf16.msra.mxu0 %v2213
    %2658 = vmatprep.mubr.bf16.mxu0 %v1256
    %2659 = vmatmul.mubr.bf16.gmra.mxu0 %v1255
    %v2660 = vpop.f32.mrf.mxu0
    %v2661 = vadd.f32 %v2620, %v2660
    %v2662 = vpop.f32.mrf.mxu0
    %v2663 = vadd.f32 %v2622, %v2662
    %v2664 = vpop.f32.mrf.mxu0
    %v2665 = vpop.f32.mrf.mxu0
    %2666 = vdwg.mxu0
    %vm2667 = vcmp.ge.f32.partialorder %v2661, 0.0
    %vm2668 = vcmp.ge.f32.partialorder %v2663, 0.0
    %v2669 = vmul.f32 %v2661, 0.01
    %v2670 = vmul.f32 %v2663, 0.01
    %v2671 = vsel %vm2667, %v2661, %v2669
    %v2672 = vsel %vm2668, %v2663, %v2670
    %v2673 = vpack.c.bf16 %v2671, %v2671
    %v2674 = vpack.c.bf16 %v2672, %v2672
    %v2675 = vld [vmem:[%s5] sm:$0xf]
    %v2676 = vld [vmem:[%s5 + $0x4] sm:$0xf]
    %v2677 = vld [vmem:[%s5 + $0x8] sm:$0xf]
    %v2678 = vld [vmem:[%s5 + $0xc] sm:$0xf]
    %v2679 = vld [vmem:[%s5 + $0x10] sm:$0xf]
    %v2680 = vld [vmem:[%s5 + $0x14] sm:$0xf]
    %v2681 = vld [vmem:[%s5 + $0x18] sm:$0xf]
    %v2682 = vld [vmem:[%s5 + $0x1c] sm:$0xf]
    %v2683 = vld [vmem:[%s5 + $0x20] sm:$0xf]
    %v2684 = vld [vmem:[%s5 + $0x24] sm:$0xf]
    %v2685 = vld [vmem:[%s5 + $0x28] sm:$0xf]
    %v2686 = vld [vmem:[%s5 + $0x2c] sm:$0xf]
    %v2687 = vld [vmem:[%s5 + $0x30] sm:$0xf]
    %v2688 = vld [vmem:[%s5 + $0x34] sm:$0xf]
    %v2689 = vld [vmem:[%s5 + $0x38] sm:$0xf]
    %v2690 = vld [vmem:[%s5 + $0x3c] sm:$0xf]
    %v2691 = vld [vmem:[%s5 + $0x40] sm:$0xf]
    %v2692 = vld [vmem:[%s5 + $0x44] sm:$0xf]
    %v2693 = vld [vmem:[%s5 + $0x48] sm:$0xf]
    %v2694 = vld [vmem:[%s5 + $0x4c] sm:$0xf]
    %v2695 = vld [vmem:[%s5 + $0x50] sm:$0xf]
    %v2696 = vld [vmem:[%s5 + $0x54] sm:$0xf]
    %v2697 = vld [vmem:[%s5 + $0x58] sm:$0xf]
    %v2698 = vld [vmem:[%s5 + $0x5c] sm:$0xf]
    %v2699 = vld [vmem:[%s5 + $0x60] sm:$0xf]
    %v2700 = vld [vmem:[%s5 + $0x64] sm:$0xf]
    %v2701 = vld [vmem:[%s5 + $0x68] sm:$0xf]
    %v2702 = vld [vmem:[%s5 + $0x6c] sm:$0xf]
    %v2703 = vld [vmem:[%s5 + $0x70] sm:$0xf]
    %v2704 = vld [vmem:[%s5 + $0x74] sm:$0xf]
    %v2705 = vld [vmem:[%s5 + $0x78] sm:$0xf]
    %v2706 = vld [vmem:[%s5 + $0x7c] sm:$0xf]
    %v2707 = vld [vmem:[%s6] sm:$0x1]
    %v2709 = vlaneseq
    %v2710 = vshrl.u32 %v2709, 7
    %v2711 = vsub.s32 0, %v2710
    %v2712 = vrot.slane %v2707, %v2711
    %v2746 = vunpack.c.l.b16 %v2675
    %v2747 = vunpack.c.l.b16 %v2676
    %v2748 = vunpack.c.l.b16 %v2677
    %v2749 = vunpack.c.l.b16 %v2678
    %v2750 = vunpack.c.l.b16 %v2679
    %v2751 = vunpack.c.l.b16 %v2680
    %v2752 = vunpack.c.l.b16 %v2681
    %v2753 = vunpack.c.l.b16 %v2682
    %v2754 = vunpack.c.l.b16 %v2683
    %v2755 = vunpack.c.l.b16 %v2684
    %v2756 = vunpack.c.l.b16 %v2685
    %v2757 = vunpack.c.l.b16 %v2686
    %v2758 = vunpack.c.l.b16 %v2687
    %v2759 = vunpack.c.l.b16 %v2688
    %v2760 = vunpack.c.l.b16 %v2689
    %v2761 = vunpack.c.l.b16 %v2690
    %v2762 = vunpack.c.l.b16 %v2691
    %v2763 = vunpack.c.l.b16 %v2692
    %v2764 = vunpack.c.l.b16 %v2693
    %v2765 = vunpack.c.l.b16 %v2694
    %v2766 = vunpack.c.l.b16 %v2695
    %v2767 = vunpack.c.l.b16 %v2696
    %v2768 = vunpack.c.l.b16 %v2697
    %v2769 = vunpack.c.l.b16 %v2698
    %v2770 = vunpack.c.l.b16 %v2699
    %v2771 = vunpack.c.l.b16 %v2700
    %v2772 = vunpack.c.l.b16 %v2701
    %v2773 = vunpack.c.l.b16 %v2702
    %v2774 = vunpack.c.l.b16 %v2703
    %v2775 = vunpack.c.l.b16 %v2704
    %v2776 = vunpack.c.l.b16 %v2705
    %v2777 = vunpack.c.l.b16 %v2706
    %v2778 = vpack.c.b16 %v2747, %v2746
    %v2779 = vpack.c.b16 %v2749, %v2748
    %v2780 = vpack.c.b16 %v2751, %v2750
    %v2781 = vpack.c.b16 %v2753, %v2752
    %v2782 = vpack.c.b16 %v2755, %v2754
    %v2783 = vpack.c.b16 %v2757, %v2756
    %v2784 = vpack.c.b16 %v2759, %v2758
    %v2785 = vpack.c.b16 %v2761, %v2760
    %v2786 = vpack.c.b16 %v2763, %v2762
    %v2787 = vpack.c.b16 %v2765, %v2764
    %v2788 = vpack.c.b16 %v2767, %v2766
    %v2789 = vpack.c.b16 %v2769, %v2768
    %v2790 = vpack.c.b16 %v2771, %v2770
    %v2791 = vpack.c.b16 %v2773, %v2772
    %v2792 = vpack.c.b16 %v2775, %v2774
    %v2793 = vpack.c.b16 %v2777, %v2776
    %2810 = vmatprep.subr.bf16.mxu0 0
    %2811 = vmatpush1.bf16.msra.mxu0 %v2785
    %2812 = vmatprep.subr.bf16.mxu0 0
    %2813 = vmatpush1.bf16.msra.mxu0 %v2784
    %2814 = vmatprep.subr.bf16.mxu0 0
    %2815 = vmatpush1.bf16.msra.mxu0 %v2783
    %2816 = vmatprep.subr.bf16.mxu0 0
    %2817 = vmatpush1.bf16.msra.mxu0 %v2782
    %2818 = vmatprep.subr.bf16.mxu0 0
    %2819 = vmatpush1.bf16.msra.mxu0 %v2781
    %2820 = vmatprep.subr.bf16.mxu0 0
    %2821 = vmatpush1.bf16.msra.mxu0 %v2780
    %2822 = vmatprep.subr.bf16.mxu0 0
    %2823 = vmatpush1.bf16.msra.mxu0 %v2779
    %2824 = vmatprep.subr.bf16.mxu0 0
    %2825 = vmatpush1.bf16.msra.mxu0 %v2778
    %2826 = vmatprep.subr.bf16.mxu0 0
    %2827 = vmatpush2.bf16.msra.mxu0 %v2793
    %2828 = vmatprep.subr.bf16.mxu0 0
    %2829 = vmatpush2.bf16.msra.mxu0 %v2792
    %2830 = vmatprep.subr.bf16.mxu0 0
    %2831 = vmatpush2.bf16.msra.mxu0 %v2791
    %2832 = vmatprep.subr.bf16.mxu0 0
    %2833 = vmatpush2.bf16.msra.mxu0 %v2790
    %2834 = vmatprep.subr.bf16.mxu0 0
    %2835 = vmatpush2.bf16.msra.mxu0 %v2789
    %2836 = vmatprep.subr.bf16.mxu0 0
    %2837 = vmatpush2.bf16.msra.mxu0 %v2788
    %2838 = vmatprep.subr.bf16.mxu0 0
    %2839 = vmatpush2.bf16.msra.mxu0 %v2787
    %2840 = vmatprep.subr.bf16.mxu0 0
    %2841 = vmatpush2.bf16.msra.mxu0 %v2786
    %2842 = vmatprep.mubr.bf16.mxu0 %v2674
    %2843 = vmatmul.mubr.bf16.gmra.mxu0 %v2673
    %v2844 = vpop.f32.mrf.mxu0
    %v2845 = vadd.f32 %v2712, %v2844
    %v2846 = vpop.f32.mrf.mxu0
    %v2847 = vpop.f32.mrf.mxu0
    %v2848 = vpop.f32.mrf.mxu0
    %2849 = vdwg.mxu0
    %vm2850 = vcmp.ge.f32.partialorder %v2845, 0.0
    %v2851 = vmul.f32 %v2845, 0.01
    %v2852 = vsel %vm2850, %v2845, %v2851
    %v2853 = vpack.c.bf16 %v2852, %v2852
    %v2854 = vld [vmem:[%s7] sm:$0xf]
    %v2855 = vld [vmem:[%s7 + $0x4] sm:$0xf]
    %v2856 = vld [vmem:[%s7 + $0x8] sm:$0xf]
    %v2857 = vld [vmem:[%s7 + $0xc] sm:$0xf]
    %v2858 = vld [vmem:[%s7 + $0x10] sm:$0xf]
    %v2859 = vld [vmem:[%s7 + $0x14] sm:$0xf]
    %v2860 = vld [vmem:[%s7 + $0x18] sm:$0xf]
    %v2861 = vld [vmem:[%s7 + $0x1c] sm:$0xf]
    %v2862 = vld [vmem:[%s7 + $0x20] sm:$0xf]
    %v2863 = vld [vmem:[%s7 + $0x24] sm:$0xf]
    %v2864 = vld [vmem:[%s7 + $0x28] sm:$0xf]
    %v2865 = vld [vmem:[%s7 + $0x2c] sm:$0xf]
    %v2866 = vld [vmem:[%s7 + $0x30] sm:$0xf]
    %v2867 = vld [vmem:[%s7 + $0x34] sm:$0xf]
    %v2868 = vld [vmem:[%s7 + $0x38] sm:$0xf]
    %v2869 = vld [vmem:[%s7 + $0x3c] sm:$0xf]
    %v2870 = vld [vmem:[%s8] sm:$0x1]
    %v2872 = vlaneseq
    %v2873 = vshrl.u32 %v2872, 7
    %v2874 = vsub.s32 0, %v2873
    %v2875 = vrot.slane %v2870, %v2874
    %v2893 = vunpack.c.l.b16 %v2854
    %v2894 = vunpack.c.l.b16 %v2855
    %v2895 = vunpack.c.l.b16 %v2856
    %v2896 = vunpack.c.l.b16 %v2857
    %v2897 = vunpack.c.l.b16 %v2858
    %v2898 = vunpack.c.l.b16 %v2859
    %v2899 = vunpack.c.l.b16 %v2860
    %v2900 = vunpack.c.l.b16 %v2861
    %v2901 = vunpack.c.l.b16 %v2862
    %v2902 = vunpack.c.l.b16 %v2863
    %v2903 = vunpack.c.l.b16 %v2864
    %v2904 = vunpack.c.l.b16 %v2865
    %v2905 = vunpack.c.l.b16 %v2866
    %v2906 = vunpack.c.l.b16 %v2867
    %v2907 = vunpack.c.l.b16 %v2868
    %v2908 = vunpack.c.l.b16 %v2869
    %v2909 = vpack.c.b16 %v2894, %v2893
    %v2910 = vpack.c.b16 %v2896, %v2895
    %v2911 = vpack.c.b16 %v2898, %v2897
    %v2912 = vpack.c.b16 %v2900, %v2899
    %v2913 = vpack.c.b16 %v2902, %v2901
    %v2914 = vpack.c.b16 %v2904, %v2903
    %v2915 = vpack.c.b16 %v2906, %v2905
    %v2916 = vpack.c.b16 %v2908, %v2907
    %2925 = vmatprep.subr.bf16.mxu0 0
    %2926 = vmatpush1.bf16.msra.mxu0 %v2916
    %2927 = vmatprep.subr.bf16.mxu0 0
    %2928 = vmatpush1.bf16.msra.mxu0 %v2915
    %2929 = vmatprep.subr.bf16.mxu0 0
    %2930 = vmatpush1.bf16.msra.mxu0 %v2914
    %2931 = vmatprep.subr.bf16.mxu0 0
    %2932 = vmatpush1.bf16.msra.mxu0 %v2913
    %2933 = vmatprep.subr.bf16.mxu0 0
    %2934 = vmatpush1.bf16.msra.mxu0 %v2912
    %2935 = vmatprep.subr.bf16.mxu0 0
    %2936 = vmatpush1.bf16.msra.mxu0 %v2911
    %2937 = vmatprep.subr.bf16.mxu0 0
    %2938 = vmatpush1.bf16.msra.mxu0 %v2910
    %2939 = vmatprep.subr.bf16.mxu0 0
    %2940 = vmatpush1.bf16.msra.mxu0 %v2909
    %2941 = vmatprep.subr.bf16.mxu0 0
    %2942 = vmatpush2.bf16.msra.mxu0 0
    %2943 = vmatprep.subr.bf16.mxu0 0
    %2944 = vmatpush2.bf16.msra.mxu0 0
    %2945 = vmatprep.subr.bf16.mxu0 0
    %2946 = vmatpush2.bf16.msra.mxu0 0
    %2947 = vmatprep.subr.bf16.mxu0 0
    %2948 = vmatpush2.bf16.msra.mxu0 0
    %2949 = vmatprep.subr.bf16.mxu0 0
    %2950 = vmatpush2.bf16.msra.mxu0 0
    %2951 = vmatprep.subr.bf16.mxu0 0
    %2952 = vmatpush2.bf16.msra.mxu0 0
    %2953 = vmatprep.subr.bf16.mxu0 0
    %2954 = vmatpush2.bf16.msra.mxu0 0
    %2955 = vmatprep.subr.bf16.mxu0 0
    %2956 = vmatpush2.bf16.msra.mxu0 0
    %2957 = vmatprep.mubr.bf16.mxu0 0
    %2958 = vmatmul.mubr.bf16.gmra.mxu0 %v2853
    %v2959 = vpop.f32.mrf.mxu0
    %v2960 = vadd.f32 %v2875, %v2959
    %v2961 = vpop.f32.mrf.mxu0
    %v2962 = vpop.f32.mrf.mxu0
    %v2963 = vpop.f32.mrf.mxu0
    %2964 = vdwg.mxu0
    %2965 = vst [vmem:[%s9] sm:$0xff] %v2960
    // Predicated region
    $region50: #{network_forward.1} parent=1 // pred_check
      _
    $region51: #{network_forward.1} parent=1 // pred_check_branch
      %2967 = sbr.rel (0) target = $region53
    $region52: #{network_forward.1} parent=1 // pred_region
      _
    $region53: #{network_forward.1} parent=1 // pred_fallthru
      _
    // Predicated region
    $region54: #{network_forward.1} parent=1 // pred_check
      _
    $region55: #{network_forward.1} parent=1 // pred_check_branch
      %2969 = sbr.rel (0) target = $region57
    $region56: #{network_forward.1} parent=1 // pred_region
      _
    $region57: #{network_forward.1} parent=1 // pred_fallthru
      _
    %2970 = vsyncpa [#allocation4], 1
    %2971 = vsyncpa [#allocation5], 1
    %2972 = vsyncpa [#allocation7], 1

</llo_original>
